<compile_context>
chip_gen: v5e
topology: v5e:2x2
jax: 0.10.0
libtpu: 0.0.40
codegen_flags: <defaults>
</compile_context>

<pallas_src>
import functools

import numpy as np

import jax
import jax.numpy as jnp
from jax.experimental import pallas as pl
from jax.experimental.pallas import tpu as pltpu


TB = 16          # batch tile: TB*15 = 240 rows ~ fills a 256-wide MXU pass
NPAD = 128       # lane-dense logits width (real outputs = 5)


# ------------------------------ Pallas kernel -------------------------------

def _fused_type_kernel(
    ximg_ref,                    # (TB*30, 90) bf16  padded image rows=(b,hp), cols=(wp,ci)
    r0_ref, cw1_ref, b1c_ref,    # (2,TB*15,TB*30) bf16, (2,90,120) bf16, (1,120) f32
    r1_ref, c1_ref,              # (2,TB*8,TB*15) bf16, (2,120,64) bf16          pool1
    r2_ref, cw2_ref, b2c_ref,    # (2,TB*5,TB*8) bf16, (2,64,80) bf16, (1,80) f32 conv2
    r3_ref, c3_ref,              # (2,TB*3,TB*5) bf16, (2,80,48) bf16            pool2
    s_ref, w1h_ref, b1l_ref,     # (3,TB,TB*3) bf16, (3,48,288) bf16, (1,288) f32
    w2_ref, b2l_ref,             # (288,288) bf16, (1,288) f32
    w3_ref, b3l_ref,             # (288,128) bf16, (1,128) f32  (padded 5->128)
    out_ref,                     # (TB, 128) f32
):
    bf16 = jnp.bfloat16
    dot = functools.partial(jnp.dot, preferred_element_type=jnp.float32)

    x = ximg_ref[...]                                            # (TB*30, 90) bf16

    # conv1: per-kh row tap on the padded image (gather of bf16 rows is exact),
    # then folded-kw weight columns; bias tiled along wo.
    y1 = b1c_ref[...]                                            # (1, 120)
    for kh in range(2):
        rows = dot(r0_ref[kh], x).astype(bf16)                   # (TB*15, 90)
        y1 = y1 + dot(rows, cw1_ref[kh])                         # (TB*15, 120)

    # pool1 + relu: 4 separable 0/1 gathers, max over taps, relu.
    # Padding taps gather 0 (exact because ReLU follows the max).
    y1 = y1.astype(bf16)
    p1 = None
    for kh in range(2):
        rows = dot(r1_ref[kh], y1).astype(bf16)                  # (TB*8, 120)
        for kw in range(2):
            tap = dot(rows, c1_ref[kw])                          # (TB*8, 64)
            p1 = tap if p1 is None else jnp.maximum(p1, tap)
    p1 = jnp.maximum(p1, 0.0).astype(bf16)

    # conv2: per-kh row tap (zero gather rows == zero padding), folded-kw cols.
    y2 = b2c_ref[...]                                            # (1, 80)
    for kh in range(2):
        rows = dot(r2_ref[kh], p1).astype(bf16)                  # (TB*5, 64)
        y2 = y2 + dot(rows, cw2_ref[kh])                         # (TB*5, 80)

    # pool2 + relu.
    y2 = y2.astype(bf16)
    p2 = None
    for kh in range(2):
        rows = dot(r3_ref[kh], y2).astype(bf16)                  # (TB*3, 80)
        for kw in range(2):
            tap = dot(rows, c3_ref[kw])                          # (TB*3, 48)
            p2 = tap if p2 is None else jnp.maximum(p2, tap)
    p2 = jnp.maximum(p2, 0.0).astype(bf16)

    # flatten (torch NCHW .view) folded into permuted lay1 weight slices.
    h1 = b1l_ref[...]                                            # (1, 288)
    for h in range(3):
        rows = dot(s_ref[h], p2).astype(bf16)                    # (TB, 48)
        h1 = h1 + dot(rows, w1h_ref[h])                          # (TB, 288)
    h1 = jnp.maximum(h1, 0.0).astype(bf16)

    h2 = jnp.maximum(dot(h1, w2_ref[...]) + b2l_ref[...], 0.0).astype(bf16)
    out_ref[...] = dot(h2, w3_ref[...]) + b3l_ref[...]           # (TB, 128)


# --------------------- host-side constant preparation -----------------------

def prepare_constants(params, tb=TB):
    """Fold conv / pool / flatten structure into small constant matrices sized
    for the FIXED batch tile `tb` (independent of the runtime batch)."""
    f32 = np.float32
    H0, H1, P1, H2, P2 = 28, 15, 8, 5, 3    # input / conv1 / pool1 / conv2 / pool2
    CIN, C1, C2 = 3, 8, 16
    DH, NOUT = 288, 5
    HP = H0 + 2                              # padded spatial = 30

    w_c1 = np.asarray(params["w_cnn1"], f32)    # (8, 3, 2, 2)  [co, ci, kh, kw]
    b_c1 = np.asarray(params["b_cnn1"], f32)
    w_c2 = np.asarray(params["w_cnn2"], f32)    # (16, 8, 2, 2)
    b_c2 = np.asarray(params["b_cnn2"], f32)
    w_l1 = np.asarray(params["w1"], f32)        # (288, 144)    [out, in]
    b_l1 = np.asarray(params["b1"], f32)
    w_l2 = np.asarray(params["w2"], f32)        # (288, 288)
    b_l2 = np.asarray(params["b2"], f32)
    w_l3 = np.asarray(params["w3"], f32)        # (5, 288)
    b_l3 = np.asarray(params["b3"], f32)

    # conv1 row taps on the zero-padded image: output row (b,ho) <- image row (b, 2ho+kh)
    r0 = np.zeros((2, tb * H1, tb * HP), f32)
    for kh in range(2):
        for b in range(tb):
            for o in range(H1):
                r0[kh, b * H1 + o, b * HP + 2 * o + kh] = 1.0

    # conv1 column weights: (wp, ci) -> (wo, co); both kw folded (conv sums).
    cw1 = np.zeros((2, HP * CIN, H1 * C1), f32)
    for kh in range(2):
        for kw in range(2):
            for wo in range(H1):
                wp = 2 * wo + kw
                cw1[kh, wp * CIN:(wp + 1) * CIN, wo * C1:(wo + 1) * C1] = w_c1[:, :, kh, kw].T
    b1c = np.tile(b_c1, H1)[None, :]            # (1, 120)

    # maxpool(k=2, s=2, p=1) as 4 separable row/col 0-1 gathers (padding -> 0,
    # exact because ReLU follows the max).
    def row_select(n_out, n_in):
        r = np.zeros((2, tb * n_out, tb * n_in), f32)
        for kh in range(2):
            for b in range(tb):
                for o in range(n_out):
                    i = 2 * o + kh - 1
                    if 0 <= i < n_in:
                        r[kh, b * n_out + o, b * n_in + i] = 1.0
        return r

    def col_select(n_out, n_in, c):
        m = np.zeros((2, n_in * c, n_out * c), f32)
        for kw in range(2):
            for o in range(n_out):
                i = 2 * o + kw - 1
                if 0 <= i < n_in:
                    m[kw, i * c:(i + 1) * c, o * c:(o + 1) * c] = np.eye(c, dtype=f32)
        return m

    r1 = row_select(P1, H1)                     # (2, TB*8, TB*15)
    c1 = col_select(P1, H1, C1)                 # (2, 120, 64)

    # conv2: row taps gather input-H (zero rows == conv zero padding);
    # columns carry (kw, ci -> wo, co) weight blocks, both kw folded.
    r2 = row_select(H2, P1)                     # (2, TB*5, TB*8)
    cw2 = np.zeros((2, P1 * C1, H2 * C2), f32)
    for kh in range(2):
        for kw in range(2):
            for wo in range(H2):
                wi = 2 * wo + kw - 1
                if 0 <= wi < P1:
                    cw2[kh, wi * C1:(wi + 1) * C1, wo * C2:(wo + 1) * C2] = w_c2[:, :, kh, kw].T
    b2c = np.tile(b_c2, H2)[None, :]            # (1, 80)

    r3 = row_select(P2, H2)                     # (2, TB*3, TB*5)
    c3 = col_select(P2, H2, C2)                 # (2, 80, 48)

    # flatten (torch .view on NCHW -> feature order (c, h, w)) folded into lay1:
    #   h1[b] = b_l1 + sum_h (S_h @ p2)[b] @ W1_h
    s_h = np.zeros((P2, tb, tb * P2), f32)
    for h in range(P2):
        for b in range(tb):
            s_h[h, b, b * P2 + h] = 1.0
    w1t = w_l1.T                                # (144, 288)
    w1h = np.zeros((P2, P2 * C2, DH), f32)      # (3, 48, 288)
    for h in range(P2):
        for w in range(P2):
            for c in range(C2):
                w1h[h, w * C2 + c, :] = w1t[c * P2 * P2 + h * P2 + w, :]

    # final layer padded to 128 lanes for a lane-dense store.
    w3pad = np.zeros((DH, NPAD), f32)
    w3pad[:, :NOUT] = w_l3.T
    b3pad = np.zeros((1, NPAD), f32)
    b3pad[0, :NOUT] = b_l3

    bf16 = jnp.bfloat16
    return dict(
        r0=jnp.asarray(r0, bf16), cw1=jnp.asarray(cw1, bf16), b1c=jnp.asarray(b1c),
        r1=jnp.asarray(r1, bf16), c1=jnp.asarray(c1, bf16),
        r2=jnp.asarray(r2, bf16), cw2=jnp.asarray(cw2, bf16), b2c=jnp.asarray(b2c),
        r3=jnp.asarray(r3, bf16), c3=jnp.asarray(c3, bf16),
        s_h=jnp.asarray(s_h, bf16), w1h=jnp.asarray(w1h, bf16),
        b1l=jnp.asarray(b_l1[None, :]),
        w2t=jnp.asarray(w_l2.T, bf16), b2l=jnp.asarray(b_l2[None, :]),
        w3t=jnp.asarray(w3pad, bf16), b3l=jnp.asarray(b3pad),
    )


# ------------------------------- forward pass --------------------------------

def _const_spec(a):
    nd = a.ndim
    return pl.BlockSpec(a.shape, lambda i, nd=nd: (0,) * nd)


def fused_forward(consts, ximg, padded_batch):
    n_tiles = padded_batch // TB
    const_args = (
        consts["r0"], consts["cw1"], consts["b1c"],
        consts["r1"], consts["c1"],
        consts["r2"], consts["cw2"], consts["b2c"],
        consts["r3"], consts["c3"],
        consts["s_h"], consts["w1h"], consts["b1l"],
        consts["w2t"], consts["b2l"],
        consts["w3t"], consts["b3l"],
    )
    in_specs = [pl.BlockSpec((TB * 30, 90), lambda i: (i, 0))]
    in_specs += [_const_spec(a) for a in const_args]

    return pl.pallas_call(
        _fused_type_kernel,
        out_shape=jax.ShapeDtypeStruct((padded_batch, NPAD), jnp.float32),
        grid=(n_tiles,),
        in_specs=in_specs,
        out_specs=pl.BlockSpec((TB, NPAD), lambda i: (i, 0)),
        compiler_params=pltpu.CompilerParams(
            dimension_semantics=("parallel",),
            vmem_limit_bytes=16 * 1024 * 1024,
        ),
    )(ximg, *const_args)


def type_forward(consts, x_nchw):
    """relu(pool(conv1)) -> relu(pool(conv2)) -> flatten -> MLP, one kernel."""
    B = x_nchw.shape[0]
    Bp = ((B + TB - 1) // TB) * TB
    # Only remaining XLA glue: NCHW->NHWC + zero pad (batch to TB multiple,
    # spatial +1 each side), free reshape to rows=(b,hp), cols=(wp,ci).
    xh = jnp.transpose(x_nchw.astype(jnp.bfloat16), (0, 2, 3, 1))      # (B,28,28,3)
    xh = jnp.pad(xh, ((0, Bp - B), (1, 1), (1, 1), (0, 0)))            # (Bp,30,30,3)
    ximg = xh.reshape(Bp * 30, 90)
    out = fused_forward(consts, ximg, Bp)                              # (Bp, 128)
    return out[:B, :5]


# ----------------------------- params & reference ----------------------------

def init_params(key):
    ks = jax.random.split(key, 10)

    def u(k, shape, fan_in):
        s = 1.0 / (fan_in ** 0.5)
        return jax.random.uniform(k, shape, jnp.float32, -s, s)

    F = 16 * 3 * 3  # 144
    return {
        "w_cnn1": u(ks[0], (8, 3, 2, 2), 3 * 2 * 2),     # torch layouts
        "b_cnn1": u(ks[1], (8,), 3 * 2 * 2),
        "w_cnn2": u(ks[2], (16, 8, 2, 2), 8 * 2 * 2),
        "b_cnn2": u(ks[3], (16,), 8 * 2 * 2),
        "w1": u(ks[4], (2 * F, F), F),
        "b1": u(ks[5], (2 * F,), F),
        "w2": u(ks[6], (2 * F, 2 * F), 2 * F),
        "b2": u(ks[7], (2 * F,), 2 * F),
        "w3": u(ks[8], (5, 2 * F), 2 * F),
        "b3": u(ks[9], (5,), 2 * F),
    }


def reference_forward(params, x):
    """Pure-JAX (XLA) f32 reference with PyTorch semantics."""
    f32 = jnp.float32
    x = x.astype(f32)

    def conv(y, w, b):
        y = jax.lax.conv_general_dilated(
            y, w.astype(f32), window_strides=(2, 2), padding=((1, 1), (1, 1)),
            dimension_numbers=("NCHW", "OIHW", "NCHW"))
        return y + b.astype(f32)[None, :, None, None]

    def pool_relu(y):
        y = jax.lax.reduce_window(
            y, -jnp.inf, jax.lax.max, (1, 1, 2, 2), (1, 1, 2, 2),
            ((0, 0), (0, 0), (1, 1), (1, 1)))
        return jnp.maximum(y, 0.0)

    y = pool_relu(conv(x, params["w_cnn1"], params["b_cnn1"]))
    y = pool_relu(conv(y, params["w_cnn2"], params["b_cnn2"]))
    feat = y.reshape(y.shape[0], -1)                # NCHW flatten == torch .view
    h = jnp.maximum(feat @ params["w1"].T + params["b1"], 0.0)
    h = jnp.maximum(h @ params["w2"].T + params["b2"], 0.0)
    return h @ params["w3"].T + params["b3"]


if __name__ == "__main__":
    key = jax.random.PRNGKey(0)
    pkey, xkey = jax.random.split(key)
    params = init_params(pkey)

    B = 2
    # 28x28 is the spatial size implied by the flatten to 16*3*3.
    x = jax.random.normal(xkey, (B, 3, 28, 28), jnp.float32)   # NCHW, like torch

    consts = prepare_constants(params, TB)         # host-side, once, batch-independent
    fwd = jax.jit(type_forward)
    out = fwd(consts, x)
    jax.block_until_ready(out)

    assert out.shape == (B, 5) and out.dtype == jnp.float32

    ref = reference_forward(params, x)
    err = float(np.max(np.abs(np.asarray(out) - np.asarray(ref))))
    assert np.allclose(np.asarray(out), np.asarray(ref), rtol=5e-2, atol=5e-2), err

    print("KERNEL_OK")
</pallas_src>

<mosaic_0001>
module attributes {stable_mosaic.version = 11 : i64} {
  func.func @_fused_type_kernel(%arg0: i32, %arg1: memref<480x90xbf16, #tpu.memory_space<vmem>>, %arg2: memref<2x240x480xbf16, #tpu.memory_space<vmem>>, %arg3: memref<2x90x120xbf16, #tpu.memory_space<vmem>>, %arg4: memref<1x120xf32, #tpu.memory_space<vmem>>, %arg5: memref<2x128x240xbf16, #tpu.memory_space<vmem>>, %arg6: memref<2x120x64xbf16, #tpu.memory_space<vmem>>, %arg7: memref<2x80x128xbf16, #tpu.memory_space<vmem>>, %arg8: memref<2x64x80xbf16, #tpu.memory_space<vmem>>, %arg9: memref<1x80xf32, #tpu.memory_space<vmem>>, %arg10: memref<2x48x80xbf16, #tpu.memory_space<vmem>>, %arg11: memref<2x80x48xbf16, #tpu.memory_space<vmem>>, %arg12: memref<3x16x48xbf16, #tpu.memory_space<vmem>>, %arg13: memref<3x48x288xbf16, #tpu.memory_space<vmem>>, %arg14: memref<1x288xf32, #tpu.memory_space<vmem>>, %arg15: memref<288x288xbf16, #tpu.memory_space<vmem>>, %arg16: memref<1x288xf32, #tpu.memory_space<vmem>>, %arg17: memref<288x128xbf16, #tpu.memory_space<vmem>>, %arg18: memref<1x128xf32, #tpu.memory_space<vmem>>, %arg19: memref<16x128xf32, #tpu.memory_space<vmem>>) attributes {dimension_semantics = [#tpu.dimension_semantics<parallel>], iteration_bounds = array<i64: 1>, scalar_prefetch = 0 : i64, scratch_operands = 0 : i64, tpu.core_type = #tpu.core_type<tc>, window_params = [{transform_indices = @transform_0, window_bounds = array<i64: 480, 90>}, {pipeline_mode = #tpu.pipeline_mode<synchronous>, transform_indices = @transform_1, window_bounds = array<i64: 2, 240, 480>}, {pipeline_mode = #tpu.pipeline_mode<synchronous>, transform_indices = @transform_2, window_bounds = array<i64: 2, 90, 120>}, {pipeline_mode = #tpu.pipeline_mode<synchronous>, transform_indices = @transform_3, window_bounds = array<i64: 1, 120>}, {pipeline_mode = #tpu.pipeline_mode<synchronous>, transform_indices = @transform_4, window_bounds = array<i64: 2, 128, 240>}, {pipeline_mode = #tpu.pipeline_mode<synchronous>, transform_indices = @transform_5, window_bounds = array<i64: 2, 120, 64>}, {pipeline_mode = #tpu.pipeline_mode<synchronous>, transform_indices = @transform_6, window_bounds = array<i64: 2, 80, 128>}, {pipeline_mode = #tpu.pipeline_mode<synchronous>, transform_indices = @transform_7, window_bounds = array<i64: 2, 64, 80>}, {pipeline_mode = #tpu.pipeline_mode<synchronous>, transform_indices = @transform_8, window_bounds = array<i64: 1, 80>}, {pipeline_mode = #tpu.pipeline_mode<synchronous>, transform_indices = @transform_9, window_bounds = array<i64: 2, 48, 80>}, {pipeline_mode = #tpu.pipeline_mode<synchronous>, transform_indices = @transform_10, window_bounds = array<i64: 2, 80, 48>}, {pipeline_mode = #tpu.pipeline_mode<synchronous>, transform_indices = @transform_11, window_bounds = array<i64: 3, 16, 48>}, {pipeline_mode = #tpu.pipeline_mode<synchronous>, transform_indices = @transform_12, window_bounds = array<i64: 3, 48, 288>}, {pipeline_mode = #tpu.pipeline_mode<synchronous>, transform_indices = @transform_13, window_bounds = array<i64: 1, 288>}, {pipeline_mode = #tpu.pipeline_mode<synchronous>, transform_indices = @transform_14, window_bounds = array<i64: 288, 288>}, {pipeline_mode = #tpu.pipeline_mode<synchronous>, transform_indices = @transform_15, window_bounds = array<i64: 1, 288>}, {pipeline_mode = #tpu.pipeline_mode<synchronous>, transform_indices = @transform_16, window_bounds = array<i64: 288, 128>}, {pipeline_mode = #tpu.pipeline_mode<synchronous>, transform_indices = @transform_17, window_bounds = array<i64: 1, 128>}, {transform_indices = @transform_18, window_bounds = array<i64: 16, 128>}]} {
    %c0 = arith.constant 0 : index
    %c0_0 = arith.constant 0 : index
    %0 = vector.load %arg1[%c0, %c0_0] : memref<480x90xbf16, #tpu.memory_space<vmem>>, vector<480x90xbf16>
    %c0_1 = arith.constant 0 : index
    %c0_2 = arith.constant 0 : index
    %1 = vector.load %arg4[%c0_1, %c0_2] : memref<1x120xf32, #tpu.memory_space<vmem>>, vector<1x120xf32>
    %c0_3 = arith.constant 0 : index
    %c0_4 = arith.constant 0 : index
    %c0_5 = arith.constant 0 : index
    %2 = vector.load %arg2[%c0_3, %c0_4, %c0_5] : memref<2x240x480xbf16, #tpu.memory_space<vmem>>, vector<1x240x480xbf16>
    %3 = vector.shape_cast %2 : vector<1x240x480xbf16> to vector<240x480xbf16>
    %cst = arith.constant dense<0.000000e+00> : vector<240x90xf32>
    %4 = tpu.matmul %3, %0, %cst {dimension_numbers = #tpu.dot_dimension_numbers<[1], [0], [0], [1], [0, 0, 1, 1], [], []>} : vector<240x480xbf16>, vector<480x90xbf16>, vector<240x90xf32> -> vector<240x90xf32>
    %5 = arith.truncf %4 : vector<240x90xf32> to vector<240x90xbf16>
    %c0_6 = arith.constant 0 : index
    %c0_7 = arith.constant 0 : index
    %c0_8 = arith.constant 0 : index
    %6 = vector.load %arg3[%c0_6, %c0_7, %c0_8] : memref<2x90x120xbf16, #tpu.memory_space<vmem>>, vector<1x90x120xbf16>
    %7 = vector.shape_cast %6 : vector<1x90x120xbf16> to vector<90x120xbf16>
    %cst_9 = arith.constant dense<0.000000e+00> : vector<240x120xf32>
    %8 = tpu.matmul %5, %7, %cst_9 {dimension_numbers = #tpu.dot_dimension_numbers<[1], [0], [0], [1], [0, 0, 1, 1], [], []>} : vector<240x90xbf16>, vector<90x120xbf16>, vector<240x120xf32> -> vector<240x120xf32>
    %9 = vector.broadcast %1 : vector<1x120xf32> to vector<240x120xf32>
    %10 = arith.addf %9, %8 : vector<240x120xf32>
    %c1 = arith.constant 1 : index
    %c0_10 = arith.constant 0 : index
    %c0_11 = arith.constant 0 : index
    %11 = vector.load %arg2[%c1, %c0_10, %c0_11] : memref<2x240x480xbf16, #tpu.memory_space<vmem>>, vector<1x240x480xbf16>
    %12 = vector.shape_cast %11 : vector<1x240x480xbf16> to vector<240x480xbf16>
    %cst_12 = arith.constant dense<0.000000e+00> : vector<240x90xf32>
    %13 = tpu.matmul %12, %0, %cst_12 {dimension_numbers = #tpu.dot_dimension_numbers<[1], [0], [0], [1], [0, 0, 1, 1], [], []>} : vector<240x480xbf16>, vector<480x90xbf16>, vector<240x90xf32> -> vector<240x90xf32>
    %14 = arith.truncf %13 : vector<240x90xf32> to vector<240x90xbf16>
    %c1_13 = arith.constant 1 : index
    %c0_14 = arith.constant 0 : index
    %c0_15 = arith.constant 0 : index
    %15 = vector.load %arg3[%c1_13, %c0_14, %c0_15] : memref<2x90x120xbf16, #tpu.memory_space<vmem>>, vector<1x90x120xbf16>
    %16 = vector.shape_cast %15 : vector<1x90x120xbf16> to vector<90x120xbf16>
    %cst_16 = arith.constant dense<0.000000e+00> : vector<240x120xf32>
    %17 = tpu.matmul %14, %16, %cst_16 {dimension_numbers = #tpu.dot_dimension_numbers<[1], [0], [0], [1], [0, 0, 1, 1], [], []>} : vector<240x90xbf16>, vector<90x120xbf16>, vector<240x120xf32> -> vector<240x120xf32>
    %18 = arith.addf %10, %17 : vector<240x120xf32>
    %19 = arith.truncf %18 : vector<240x120xf32> to vector<240x120xbf16>
    %c0_17 = arith.constant 0 : index
    %c0_18 = arith.constant 0 : index
    %c0_19 = arith.constant 0 : index
    %20 = vector.load %arg5[%c0_17, %c0_18, %c0_19] : memref<2x128x240xbf16, #tpu.memory_space<vmem>>, vector<1x128x240xbf16>
    %21 = vector.shape_cast %20 : vector<1x128x240xbf16> to vector<128x240xbf16>
    %cst_20 = arith.constant dense<0.000000e+00> : vector<128x120xf32>
    %22 = tpu.matmul %21, %19, %cst_20 {dimension_numbers = #tpu.dot_dimension_numbers<[1], [0], [0], [1], [0, 0, 1, 1], [], []>} : vector<128x240xbf16>, vector<240x120xbf16>, vector<128x120xf32> -> vector<128x120xf32>
    %23 = arith.truncf %22 : vector<128x120xf32> to vector<128x120xbf16>
    %c0_21 = arith.constant 0 : index
    %c0_22 = arith.constant 0 : index
    %c0_23 = arith.constant 0 : index
    %24 = vector.load %arg6[%c0_21, %c0_22, %c0_23] : memref<2x120x64xbf16, #tpu.memory_space<vmem>>, vector<1x120x64xbf16>
    %25 = vector.shape_cast %24 : vector<1x120x64xbf16> to vector<120x64xbf16>
    %cst_24 = arith.constant dense<0.000000e+00> : vector<128x64xf32>
    %26 = tpu.matmul %23, %25, %cst_24 {dimension_numbers = #tpu.dot_dimension_numbers<[1], [0], [0], [1], [0, 0, 1, 1], [], []>} : vector<128x120xbf16>, vector<120x64xbf16>, vector<128x64xf32> -> vector<128x64xf32>
    %c1_25 = arith.constant 1 : index
    %c0_26 = arith.constant 0 : index
    %c0_27 = arith.constant 0 : index
    %27 = vector.load %arg6[%c1_25, %c0_26, %c0_27] : memref<2x120x64xbf16, #tpu.memory_space<vmem>>, vector<1x120x64xbf16>
    %28 = vector.shape_cast %27 : vector<1x120x64xbf16> to vector<120x64xbf16>
    %cst_28 = arith.constant dense<0.000000e+00> : vector<128x64xf32>
    %29 = tpu.matmul %23, %28, %cst_28 {dimension_numbers = #tpu.dot_dimension_numbers<[1], [0], [0], [1], [0, 0, 1, 1], [], []>} : vector<128x120xbf16>, vector<120x64xbf16>, vector<128x64xf32> -> vector<128x64xf32>
    %30 = arith.maximumf %26, %29 : vector<128x64xf32>
    %c1_29 = arith.constant 1 : index
    %c0_30 = arith.constant 0 : index
    %c0_31 = arith.constant 0 : index
    %31 = vector.load %arg5[%c1_29, %c0_30, %c0_31] : memref<2x128x240xbf16, #tpu.memory_space<vmem>>, vector<1x128x240xbf16>
    %32 = vector.shape_cast %31 : vector<1x128x240xbf16> to vector<128x240xbf16>
    %cst_32 = arith.constant dense<0.000000e+00> : vector<128x120xf32>
    %33 = tpu.matmul %32, %19, %cst_32 {dimension_numbers = #tpu.dot_dimension_numbers<[1], [0], [0], [1], [0, 0, 1, 1], [], []>} : vector<128x240xbf16>, vector<240x120xbf16>, vector<128x120xf32> -> vector<128x120xf32>
    %34 = arith.truncf %33 : vector<128x120xf32> to vector<128x120xbf16>
    %c0_33 = arith.constant 0 : index
    %c0_34 = arith.constant 0 : index
    %c0_35 = arith.constant 0 : index
    %35 = vector.load %arg6[%c0_33, %c0_34, %c0_35] : memref<2x120x64xbf16, #tpu.memory_space<vmem>>, vector<1x120x64xbf16>
    %36 = vector.shape_cast %35 : vector<1x120x64xbf16> to vector<120x64xbf16>
    %cst_36 = arith.constant dense<0.000000e+00> : vector<128x64xf32>
    %37 = tpu.matmul %34, %36, %cst_36 {dimension_numbers = #tpu.dot_dimension_numbers<[1], [0], [0], [1], [0, 0, 1, 1], [], []>} : vector<128x120xbf16>, vector<120x64xbf16>, vector<128x64xf32> -> vector<128x64xf32>
    %38 = arith.maximumf %30, %37 : vector<128x64xf32>
    %c1_37 = arith.constant 1 : index
    %c0_38 = arith.constant 0 : index
    %c0_39 = arith.constant 0 : index
    %39 = vector.load %arg6[%c1_37, %c0_38, %c0_39] : memref<2x120x64xbf16, #tpu.memory_space<vmem>>, vector<1x120x64xbf16>
    %40 = vector.shape_cast %39 : vector<1x120x64xbf16> to vector<120x64xbf16>
    %cst_40 = arith.constant dense<0.000000e+00> : vector<128x64xf32>
    %41 = tpu.matmul %34, %40, %cst_40 {dimension_numbers = #tpu.dot_dimension_numbers<[1], [0], [0], [1], [0, 0, 1, 1], [], []>} : vector<128x120xbf16>, vector<120x64xbf16>, vector<128x64xf32> -> vector<128x64xf32>
    %42 = arith.maximumf %38, %41 : vector<128x64xf32>
    %cst_41 = arith.constant 0.000000e+00 : f32
    %43 = vector.broadcast %cst_41 : f32 to vector<128x64xf32>
    %44 = arith.maximumf %42, %43 : vector<128x64xf32>
    %45 = arith.truncf %44 : vector<128x64xf32> to vector<128x64xbf16>
    %c0_42 = arith.constant 0 : index
    %c0_43 = arith.constant 0 : index
    %46 = vector.load %arg9[%c0_42, %c0_43] : memref<1x80xf32, #tpu.memory_space<vmem>>, vector<1x80xf32>
    %c0_44 = arith.constant 0 : index
    %c0_45 = arith.constant 0 : index
    %c0_46 = arith.constant 0 : index
    %47 = vector.load %arg7[%c0_44, %c0_45, %c0_46] : memref<2x80x128xbf16, #tpu.memory_space<vmem>>, vector<1x80x128xbf16>
    %48 = vector.shape_cast %47 : vector<1x80x128xbf16> to vector<80x128xbf16>
    %cst_47 = arith.constant dense<0.000000e+00> : vector<80x64xf32>
    %49 = tpu.matmul %48, %45, %cst_47 {dimension_numbers = #tpu.dot_dimension_numbers<[1], [0], [0], [1], [0, 0, 1, 1], [], []>} : vector<80x128xbf16>, vector<128x64xbf16>, vector<80x64xf32> -> vector<80x64xf32>
    %50 = arith.truncf %49 : vector<80x64xf32> to vector<80x64xbf16>
    %c0_48 = arith.constant 0 : index
    %c0_49 = arith.constant 0 : index
    %c0_50 = arith.constant 0 : index
    %51 = vector.load %arg8[%c0_48, %c0_49, %c0_50] : memref<2x64x80xbf16, #tpu.memory_space<vmem>>, vector<1x64x80xbf16>
    %52 = vector.shape_cast %51 : vector<1x64x80xbf16> to vector<64x80xbf16>
    %cst_51 = arith.constant dense<0.000000e+00> : vector<80x80xf32>
    %53 = tpu.matmul %50, %52, %cst_51 {dimension_numbers = #tpu.dot_dimension_numbers<[1], [0], [0], [1], [0, 0, 1, 1], [], []>} : vector<80x64xbf16>, vector<64x80xbf16>, vector<80x80xf32> -> vector<80x80xf32>
    %54 = vector.broadcast %46 : vector<1x80xf32> to vector<80x80xf32>
    %55 = arith.addf %54, %53 : vector<80x80xf32>
    %c1_52 = arith.constant 1 : index
    %c0_53 = arith.constant 0 : index
    %c0_54 = arith.constant 0 : index
    %56 = vector.load %arg7[%c1_52, %c0_53, %c0_54] : memref<2x80x128xbf16, #tpu.memory_space<vmem>>, vector<1x80x128xbf16>
    %57 = vector.shape_cast %56 : vector<1x80x128xbf16> to vector<80x128xbf16>
    %cst_55 = arith.constant dense<0.000000e+00> : vector<80x64xf32>
    %58 = tpu.matmul %57, %45, %cst_55 {dimension_numbers = #tpu.dot_dimension_numbers<[1], [0], [0], [1], [0, 0, 1, 1], [], []>} : vector<80x128xbf16>, vector<128x64xbf16>, vector<80x64xf32> -> vector<80x64xf32>
    %59 = arith.truncf %58 : vector<80x64xf32> to vector<80x64xbf16>
    %c1_56 = arith.constant 1 : index
    %c0_57 = arith.constant 0 : index
    %c0_58 = arith.constant 0 : index
    %60 = vector.load %arg8[%c1_56, %c0_57, %c0_58] : memref<2x64x80xbf16, #tpu.memory_space<vmem>>, vector<1x64x80xbf16>
    %61 = vector.shape_cast %60 : vector<1x64x80xbf16> to vector<64x80xbf16>
    %cst_59 = arith.constant dense<0.000000e+00> : vector<80x80xf32>
    %62 = tpu.matmul %59, %61, %cst_59 {dimension_numbers = #tpu.dot_dimension_numbers<[1], [0], [0], [1], [0, 0, 1, 1], [], []>} : vector<80x64xbf16>, vector<64x80xbf16>, vector<80x80xf32> -> vector<80x80xf32>
    %63 = arith.addf %55, %62 : vector<80x80xf32>
    %64 = arith.truncf %63 : vector<80x80xf32> to vector<80x80xbf16>
    %c0_60 = arith.constant 0 : index
    %c0_61 = arith.constant 0 : index
    %c0_62 = arith.constant 0 : index
    %65 = vector.load %arg10[%c0_60, %c0_61, %c0_62] : memref<2x48x80xbf16, #tpu.memory_space<vmem>>, vector<1x48x80xbf16>
    %66 = vector.shape_cast %65 : vector<1x48x80xbf16> to vector<48x80xbf16>
    %cst_63 = arith.constant dense<0.000000e+00> : vector<48x80xf32>
    %67 = tpu.matmul %66, %64, %cst_63 {dimension_numbers = #tpu.dot_dimension_numbers<[1], [0], [0], [1], [0, 0, 1, 1], [], []>} : vector<48x80xbf16>, vector<80x80xbf16>, vector<48x80xf32> -> vector<48x80xf32>
    %68 = arith.truncf %67 : vector<48x80xf32> to vector<48x80xbf16>
    %c0_64 = arith.constant 0 : index
    %c0_65 = arith.constant 0 : index
    %c0_66 = arith.constant 0 : index
    %69 = vector.load %arg11[%c0_64, %c0_65, %c0_66] : memref<2x80x48xbf16, #tpu.memory_space<vmem>>, vector<1x80x48xbf16>
    %70 = vector.shape_cast %69 : vector<1x80x48xbf16> to vector<80x48xbf16>
    %cst_67 = arith.constant dense<0.000000e+00> : vector<48x48xf32>
    %71 = tpu.matmul %68, %70, %cst_67 {dimension_numbers = #tpu.dot_dimension_numbers<[1], [0], [0], [1], [0, 0, 1, 1], [], []>} : vector<48x80xbf16>, vector<80x48xbf16>, vector<48x48xf32> -> vector<48x48xf32>
    %c1_68 = arith.constant 1 : index
    %c0_69 = arith.constant 0 : index
    %c0_70 = arith.constant 0 : index
    %72 = vector.load %arg11[%c1_68, %c0_69, %c0_70] : memref<2x80x48xbf16, #tpu.memory_space<vmem>>, vector<1x80x48xbf16>
    %73 = vector.shape_cast %72 : vector<1x80x48xbf16> to vector<80x48xbf16>
    %cst_71 = arith.constant dense<0.000000e+00> : vector<48x48xf32>
    %74 = tpu.matmul %68, %73, %cst_71 {dimension_numbers = #tpu.dot_dimension_numbers<[1], [0], [0], [1], [0, 0, 1, 1], [], []>} : vector<48x80xbf16>, vector<80x48xbf16>, vector<48x48xf32> -> vector<48x48xf32>
    %75 = arith.maximumf %71, %74 : vector<48x48xf32>
    %c1_72 = arith.constant 1 : index
    %c0_73 = arith.constant 0 : index
    %c0_74 = arith.constant 0 : index
    %76 = vector.load %arg10[%c1_72, %c0_73, %c0_74] : memref<2x48x80xbf16, #tpu.memory_space<vmem>>, vector<1x48x80xbf16>
    %77 = vector.shape_cast %76 : vector<1x48x80xbf16> to vector<48x80xbf16>
    %cst_75 = arith.constant dense<0.000000e+00> : vector<48x80xf32>
    %78 = tpu.matmul %77, %64, %cst_75 {dimension_numbers = #tpu.dot_dimension_numbers<[1], [0], [0], [1], [0, 0, 1, 1], [], []>} : vector<48x80xbf16>, vector<80x80xbf16>, vector<48x80xf32> -> vector<48x80xf32>
    %79 = arith.truncf %78 : vector<48x80xf32> to vector<48x80xbf16>
    %c0_76 = arith.constant 0 : index
    %c0_77 = arith.constant 0 : index
    %c0_78 = arith.constant 0 : index
    %80 = vector.load %arg11[%c0_76, %c0_77, %c0_78] : memref<2x80x48xbf16, #tpu.memory_space<vmem>>, vector<1x80x48xbf16>
    %81 = vector.shape_cast %80 : vector<1x80x48xbf16> to vector<80x48xbf16>
    %cst_79 = arith.constant dense<0.000000e+00> : vector<48x48xf32>
    %82 = tpu.matmul %79, %81, %cst_79 {dimension_numbers = #tpu.dot_dimension_numbers<[1], [0], [0], [1], [0, 0, 1, 1], [], []>} : vector<48x80xbf16>, vector<80x48xbf16>, vector<48x48xf32> -> vector<48x48xf32>
    %83 = arith.maximumf %75, %82 : vector<48x48xf32>
    %c1_80 = arith.constant 1 : index
    %c0_81 = arith.constant 0 : index
    %c0_82 = arith.constant 0 : index
    %84 = vector.load %arg11[%c1_80, %c0_81, %c0_82] : memref<2x80x48xbf16, #tpu.memory_space<vmem>>, vector<1x80x48xbf16>
    %85 = vector.shape_cast %84 : vector<1x80x48xbf16> to vector<80x48xbf16>
    %cst_83 = arith.constant dense<0.000000e+00> : vector<48x48xf32>
    %86 = tpu.matmul %79, %85, %cst_83 {dimension_numbers = #tpu.dot_dimension_numbers<[1], [0], [0], [1], [0, 0, 1, 1], [], []>} : vector<48x80xbf16>, vector<80x48xbf16>, vector<48x48xf32> -> vector<48x48xf32>
    %87 = arith.maximumf %83, %86 : vector<48x48xf32>
    %cst_84 = arith.constant 0.000000e+00 : f32
    %88 = vector.broadcast %cst_84 : f32 to vector<48x48xf32>
    %89 = arith.maximumf %87, %88 : vector<48x48xf32>
    %90 = arith.truncf %89 : vector<48x48xf32> to vector<48x48xbf16>
    %c0_85 = arith.constant 0 : index
    %c0_86 = arith.constant 0 : index
    %91 = vector.load %arg14[%c0_85, %c0_86] : memref<1x288xf32, #tpu.memory_space<vmem>>, vector<1x288xf32>
    %c0_87 = arith.constant 0 : index
    %c0_88 = arith.constant 0 : index
    %c0_89 = arith.constant 0 : index
    %92 = vector.load %arg12[%c0_87, %c0_88, %c0_89] : memref<3x16x48xbf16, #tpu.memory_space<vmem>>, vector<1x16x48xbf16>
    %93 = vector.shape_cast %92 : vector<1x16x48xbf16> to vector<16x48xbf16>
    %cst_90 = arith.constant dense<0.000000e+00> : vector<16x48xf32>
    %94 = tpu.matmul %93, %90, %cst_90 {dimension_numbers = #tpu.dot_dimension_numbers<[1], [0], [0], [1], [0, 0, 1, 1], [], []>} : vector<16x48xbf16>, vector<48x48xbf16>, vector<16x48xf32> -> vector<16x48xf32>
    %95 = arith.truncf %94 : vector<16x48xf32> to vector<16x48xbf16>
    %c0_91 = arith.constant 0 : index
    %c0_92 = arith.constant 0 : index
    %c0_93 = arith.constant 0 : index
    %96 = vector.load %arg13[%c0_91, %c0_92, %c0_93] : memref<3x48x288xbf16, #tpu.memory_space<vmem>>, vector<1x48x288xbf16>
    %97 = vector.shape_cast %96 : vector<1x48x288xbf16> to vector<48x288xbf16>
    %cst_94 = arith.constant dense<0.000000e+00> : vector<16x288xf32>
    %98 = tpu.matmul %95, %97, %cst_94 {dimension_numbers = #tpu.dot_dimension_numbers<[1], [0], [0], [1], [0, 0, 1, 1], [], []>} : vector<16x48xbf16>, vector<48x288xbf16>, vector<16x288xf32> -> vector<16x288xf32>
    %99 = vector.broadcast %91 : vector<1x288xf32> to vector<16x288xf32>
    %100 = arith.addf %99, %98 : vector<16x288xf32>
    %c1_95 = arith.constant 1 : index
    %c0_96 = arith.constant 0 : index
    %c0_97 = arith.constant 0 : index
    %101 = vector.load %arg12[%c1_95, %c0_96, %c0_97] : memref<3x16x48xbf16, #tpu.memory_space<vmem>>, vector<1x16x48xbf16>
    %102 = vector.shape_cast %101 : vector<1x16x48xbf16> to vector<16x48xbf16>
    %cst_98 = arith.constant dense<0.000000e+00> : vector<16x48xf32>
    %103 = tpu.matmul %102, %90, %cst_98 {dimension_numbers = #tpu.dot_dimension_numbers<[1], [0], [0], [1], [0, 0, 1, 1], [], []>} : vector<16x48xbf16>, vector<48x48xbf16>, vector<16x48xf32> -> vector<16x48xf32>
    %104 = arith.truncf %103 : vector<16x48xf32> to vector<16x48xbf16>
    %c1_99 = arith.constant 1 : index
    %c0_100 = arith.constant 0 : index
    %c0_101 = arith.constant 0 : index
    %105 = vector.load %arg13[%c1_99, %c0_100, %c0_101] : memref<3x48x288xbf16, #tpu.memory_space<vmem>>, vector<1x48x288xbf16>
    %106 = vector.shape_cast %105 : vector<1x48x288xbf16> to vector<48x288xbf16>
    %cst_102 = arith.constant dense<0.000000e+00> : vector<16x288xf32>
    %107 = tpu.matmul %104, %106, %cst_102 {dimension_numbers = #tpu.dot_dimension_numbers<[1], [0], [0], [1], [0, 0, 1, 1], [], []>} : vector<16x48xbf16>, vector<48x288xbf16>, vector<16x288xf32> -> vector<16x288xf32>
    %108 = arith.addf %100, %107 : vector<16x288xf32>
    %c2 = arith.constant 2 : index
    %c0_103 = arith.constant 0 : index
    %c0_104 = arith.constant 0 : index
    %109 = vector.load %arg12[%c2, %c0_103, %c0_104] : memref<3x16x48xbf16, #tpu.memory_space<vmem>>, vector<1x16x48xbf16>
    %110 = vector.shape_cast %109 : vector<1x16x48xbf16> to vector<16x48xbf16>
    %cst_105 = arith.constant dense<0.000000e+00> : vector<16x48xf32>
    %111 = tpu.matmul %110, %90, %cst_105 {dimension_numbers = #tpu.dot_dimension_numbers<[1], [0], [0], [1], [0, 0, 1, 1], [], []>} : vector<16x48xbf16>, vector<48x48xbf16>, vector<16x48xf32> -> vector<16x48xf32>
    %112 = arith.truncf %111 : vector<16x48xf32> to vector<16x48xbf16>
    %c2_106 = arith.constant 2 : index
    %c0_107 = arith.constant 0 : index
    %c0_108 = arith.constant 0 : index
    %113 = vector.load %arg13[%c2_106, %c0_107, %c0_108] : memref<3x48x288xbf16, #tpu.memory_space<vmem>>, vector<1x48x288xbf16>
    %114 = vector.shape_cast %113 : vector<1x48x288xbf16> to vector<48x288xbf16>
    %cst_109 = arith.constant dense<0.000000e+00> : vector<16x288xf32>
    %115 = tpu.matmul %112, %114, %cst_109 {dimension_numbers = #tpu.dot_dimension_numbers<[1], [0], [0], [1], [0, 0, 1, 1], [], []>} : vector<16x48xbf16>, vector<48x288xbf16>, vector<16x288xf32> -> vector<16x288xf32>
    %116 = arith.addf %108, %115 : vector<16x288xf32>
    %cst_110 = arith.constant 0.000000e+00 : f32
    %117 = vector.broadcast %cst_110 : f32 to vector<16x288xf32>
    %118 = arith.maximumf %116, %117 : vector<16x288xf32>
    %119 = arith.truncf %118 : vector<16x288xf32> to vector<16x288xbf16>
    %c0_111 = arith.constant 0 : index
    %c0_112 = arith.constant 0 : index
    %120 = vector.load %arg15[%c0_111, %c0_112] : memref<288x288xbf16, #tpu.memory_space<vmem>>, vector<288x288xbf16>
    %cst_113 = arith.constant dense<0.000000e+00> : vector<16x288xf32>
    %121 = tpu.matmul %119, %120, %cst_113 {dimension_numbers = #tpu.dot_dimension_numbers<[1], [0], [0], [1], [0, 0, 1, 1], [], []>} : vector<16x288xbf16>, vector<288x288xbf16>, vector<16x288xf32> -> vector<16x288xf32>
    %c0_114 = arith.constant 0 : index
    %c0_115 = arith.constant 0 : index
    %122 = vector.load %arg16[%c0_114, %c0_115] : memref<1x288xf32, #tpu.memory_space<vmem>>, vector<1x288xf32>
    %123 = vector.broadcast %122 : vector<1x288xf32> to vector<16x288xf32>
    %124 = arith.addf %121, %123 : vector<16x288xf32>
    %cst_116 = arith.constant 0.000000e+00 : f32
    %125 = vector.broadcast %cst_116 : f32 to vector<16x288xf32>
    %126 = arith.maximumf %124, %125 : vector<16x288xf32>
    %127 = arith.truncf %126 : vector<16x288xf32> to vector<16x288xbf16>
    %c0_117 = arith.constant 0 : index
    %c0_118 = arith.constant 0 : index
    %128 = vector.load %arg17[%c0_117, %c0_118] : memref<288x128xbf16, #tpu.memory_space<vmem>>, vector<288x128xbf16>
    %cst_119 = arith.constant dense<0.000000e+00> : vector<16x128xf32>
    %129 = tpu.matmul %127, %128, %cst_119 {dimension_numbers = #tpu.dot_dimension_numbers<[1], [0], [0], [1], [0, 0, 1, 1], [], []>} : vector<16x288xbf16>, vector<288x128xbf16>, vector<16x128xf32> -> vector<16x128xf32>
    %c0_120 = arith.constant 0 : index
    %c0_121 = arith.constant 0 : index
    %130 = vector.load %arg18[%c0_120, %c0_121] : memref<1x128xf32, #tpu.memory_space<vmem>>, vector<1x128xf32>
    %131 = vector.broadcast %130 : vector<1x128xf32> to vector<16x128xf32>
    %132 = arith.addf %129, %131 : vector<16x128xf32>
    %c0_122 = arith.constant 0 : index
    %c0_123 = arith.constant 0 : index
    %133 = vector.load %arg19[%c0_122, %c0_123] : memref<16x128xf32, #tpu.memory_space<vmem>>, vector<16x128xf32>
    tpu.vector_store %arg19[%c0_122, %c0_123], %132 {strides = array<i32>} : memref<16x128xf32, #tpu.memory_space<vmem>>, vector<16x128xf32>,
    return
  }
  func.func @transform_0(%arg0: i32) -> (i32, i32) {
    %c0_i32 = arith.constant 0 : i32
    %c0_i32_0 = arith.constant 0 : i32
    return %arg0, %c0_i32 : i32, i32
  }
  func.func @transform_1(%arg0: i32) -> (i32, i32, i32) {
    %c0_i32 = arith.constant 0 : i32
    %c0_i32_0 = arith.constant 0 : i32
    %c0_i32_1 = arith.constant 0 : i32
    %c0_i32_2 = arith.constant 0 : i32
    return %c0_i32, %c0_i32_0, %c0_i32_1 : i32, i32, i32
  }
  func.func @transform_2(%arg0: i32) -> (i32, i32, i32) {
    %c0_i32 = arith.constant 0 : i32
    %c0_i32_0 = arith.constant 0 : i32
    %c0_i32_1 = arith.constant 0 : i32
    %c0_i32_2 = arith.constant 0 : i32
    return %c0_i32, %c0_i32_0, %c0_i32_1 : i32, i32, i32
  }
  func.func @transform_3(%arg0: i32) -> (i32, i32) {
    %c0_i32 = arith.constant 0 : i32
    %c0_i32_0 = arith.constant 0 : i32
    %c0_i32_1 = arith.constant 0 : i32
    return %c0_i32, %c0_i32_0 : i32, i32
  }
  func.func @transform_4(%arg0: i32) -> (i32, i32, i32) {
    %c0_i32 = arith.constant 0 : i32
    %c0_i32_0 = arith.constant 0 : i32
    %c0_i32_1 = arith.constant 0 : i32
    %c0_i32_2 = arith.constant 0 : i32
    return %c0_i32, %c0_i32_0, %c0_i32_1 : i32, i32, i32
  }
  func.func @transform_5(%arg0: i32) -> (i32, i32, i32) {
    %c0_i32 = arith.constant 0 : i32
    %c0_i32_0 = arith.constant 0 : i32
    %c0_i32_1 = arith.constant 0 : i32
    %c0_i32_2 = arith.constant 0 : i32
    return %c0_i32, %c0_i32_0, %c0_i32_1 : i32, i32, i32
  }
  func.func @transform_6(%arg0: i32) -> (i32, i32, i32) {
    %c0_i32 = arith.constant 0 : i32
    %c0_i32_0 = arith.constant 0 : i32
    %c0_i32_1 = arith.constant 0 : i32
    %c0_i32_2 = arith.constant 0 : i32
    return %c0_i32, %c0_i32_0, %c0_i32_1 : i32, i32, i32
  }
  func.func @transform_7(%arg0: i32) -> (i32, i32, i32) {
    %c0_i32 = arith.constant 0 : i32
    %c0_i32_0 = arith.constant 0 : i32
    %c0_i32_1 = arith.constant 0 : i32
    %c0_i32_2 = arith.constant 0 : i32
    return %c0_i32, %c0_i32_0, %c0_i32_1 : i32, i32, i32
  }
  func.func @transform_8(%arg0: i32) -> (i32, i32) {
    %c0_i32 = arith.constant 0 : i32
    %c0_i32_0 = arith.constant 0 : i32
    %c0_i32_1 = arith.constant 0 : i32
    return %c0_i32, %c0_i32_0 : i32, i32
  }
  func.func @transform_9(%arg0: i32) -> (i32, i32, i32) {
    %c0_i32 = arith.constant 0 : i32
    %c0_i32_0 = arith.constant 0 : i32
    %c0_i32_1 = arith.constant 0 : i32
    %c0_i32_2 = arith.constant 0 : i32
    return %c0_i32, %c0_i32_0, %c0_i32_1 : i32, i32, i32
  }
  func.func @transform_10(%arg0: i32) -> (i32, i32, i32) {
    %c0_i32 = arith.constant 0 : i32
    %c0_i32_0 = arith.constant 0 : i32
    %c0_i32_1 = arith.constant 0 : i32
    %c0_i32_2 = arith.constant 0 : i32
    return %c0_i32, %c0_i32_0, %c0_i32_1 : i32, i32, i32
  }
  func.func @transform_11(%arg0: i32) -> (i32, i32, i32) {
    %c0_i32 = arith.constant 0 : i32
    %c0_i32_0 = arith.constant 0 : i32
    %c0_i32_1 = arith.constant 0 : i32
    %c0_i32_2 = arith.constant 0 : i32
    return %c0_i32, %c0_i32_0, %c0_i32_1 : i32, i32, i32
  }
  func.func @transform_12(%arg0: i32) -> (i32, i32, i32) {
    %c0_i32 = arith.constant 0 : i32
    %c0_i32_0 = arith.constant 0 : i32
    %c0_i32_1 = arith.constant 0 : i32
    %c0_i32_2 = arith.constant 0 : i32
    return %c0_i32, %c0_i32_0, %c0_i32_1 : i32, i32, i32
  }
  func.func @transform_13(%arg0: i32) -> (i32, i32) {
    %c0_i32 = arith.constant 0 : i32
    %c0_i32_0 = arith.constant 0 : i32
    %c0_i32_1 = arith.constant 0 : i32
    return %c0_i32, %c0_i32_0 : i32, i32
  }
  func.func @transform_14(%arg0: i32) -> (i32, i32) {
    %c0_i32 = arith.constant 0 : i32
    %c0_i32_0 = arith.constant 0 : i32
    %c0_i32_1 = arith.constant 0 : i32
    return %c0_i32, %c0_i32_0 : i32, i32
  }
  func.func @transform_15(%arg0: i32) -> (i32, i32) {
    %c0_i32 = arith.constant 0 : i32
    %c0_i32_0 = arith.constant 0 : i32
    %c0_i32_1 = arith.constant 0 : i32
    return %c0_i32, %c0_i32_0 : i32, i32
  }
  func.func @transform_16(%arg0: i32) -> (i32, i32) {
    %c0_i32 = arith.constant 0 : i32
    %c0_i32_0 = arith.constant 0 : i32
    %c0_i32_1 = arith.constant 0 : i32
    return %c0_i32, %c0_i32_0 : i32, i32
  }
  func.func @transform_17(%arg0: i32) -> (i32, i32) {
    %c0_i32 = arith.constant 0 : i32
    %c0_i32_0 = arith.constant 0 : i32
    %c0_i32_1 = arith.constant 0 : i32
    return %c0_i32, %c0_i32_0 : i32, i32
  }
  func.func @transform_18(%arg0: i32) -> (i32, i32) {
    %c0_i32 = arith.constant 0 : i32
    %c0_i32_0 = arith.constant 0 : i32
    return %arg0, %c0_i32 : i32, i32
  }
}

</mosaic_0001>

<llo_original>
// kernel: type_forward.1
$region0: #{type_forward.1}
  #allocation0 [shape = 'u32[]', space=smem, size = 0x4, offset = 0x4, fixed_abs, tag = 'smem constant byte address 0x4 - core index']
  #allocation1 [shape = 'u32[72,128]{1,0:T(1,128)}', space=vmem, size = 0x9000, scoped, tag = 'internal scratch']
  %s0 = inlined_call_operand.vmem [shape: bf16[480,90], index: 0, kind: input, shape index: {}]
  %s1 = inlined_call_operand.vmem [shape: bf16[2,240,480], index: 1, kind: input, shape index: {}]
  %s2 = inlined_call_operand.vmem [shape: bf16[2,90,120], index: 2, kind: input, shape index: {}]
  %s3 = inlined_call_operand.vmem [shape: f32[1,120], index: 3, kind: input, shape index: {}]
  %s4 = inlined_call_operand.vmem [shape: bf16[2,128,240], index: 4, kind: input, shape index: {}]
  %s5 = inlined_call_operand.vmem [shape: bf16[2,120,64], index: 5, kind: input, shape index: {}]
  %s6 = inlined_call_operand.vmem [shape: bf16[2,80,128], index: 6, kind: input, shape index: {}]
  %s7 = inlined_call_operand.vmem [shape: bf16[2,64,80], index: 7, kind: input, shape index: {}]
  %s8 = inlined_call_operand.vmem [shape: f32[1,80], index: 8, kind: input, shape index: {}]
  %s9 = inlined_call_operand.vmem [shape: bf16[2,48,80], index: 9, kind: input, shape index: {}]
  %s10 = inlined_call_operand.vmem [shape: bf16[2,80,48], index: 10, kind: input, shape index: {}]
  %s11 = inlined_call_operand.vmem [shape: bf16[3,16,48], index: 11, kind: input, shape index: {}]
  %s12 = inlined_call_operand.vmem [shape: bf16[3,48,288], index: 12, kind: input, shape index: {}]
  %s13 = inlined_call_operand.vmem [shape: f32[1,288], index: 13, kind: input, shape index: {}]
  %s14 = inlined_call_operand.vmem [shape: bf16[288,288], index: 14, kind: input, shape index: {}]
  %s15 = inlined_call_operand.vmem [shape: f32[1,288], index: 15, kind: input, shape index: {}]
  %s16 = inlined_call_operand.vmem [shape: bf16[288,128], index: 16, kind: input, shape index: {}]
  %s17 = inlined_call_operand.vmem [shape: f32[1,128], index: 17, kind: input, shape index: {}]
  %s18 = inlined_call_operand.vmem [shape: f32[16,128], index: 18, kind: output, shape index: {}]
  %s19 = sld [smem:[#allocation0]]
  $region82: #{type_forward.1} parent=0
    _
  %s21 = ssub.s32 1, %s19
  %s22 = scalar_select 0, %s21, %s19
  // Predicated region
  $region2: #{type_forward.1} parent=0 // pred_check
    _
  $region3: #{type_forward.1} parent=0 // pred_check_branch
    %24 = sbr.rel (0) target = $region5
  $region4: #{type_forward.1} parent=0 // pred_region
    _
  $region5: #{type_forward.1} parent=0 // pred_fallthru
    _
  // Predicated region
  $region6: #{type_forward.1} parent=0 // pred_check
    _
  $region7: #{type_forward.1} parent=0 // pred_check_branch
    %26 = sbr.rel (0) target = $region9
  $region8: #{type_forward.1} parent=0 // pred_region
    _
  $region9: #{type_forward.1} parent=0 // pred_fallthru
    _
  // Predicated region
  $region10: #{type_forward.1} parent=0 // pred_check
    _
  $region11: #{type_forward.1} parent=0 // pred_check_branch
    %28 = sbr.rel (0) target = $region13
  $region12: #{type_forward.1} parent=0 // pred_region
    _
  $region13: #{type_forward.1} parent=0 // pred_fallthru
    _
  // Predicated region
  $region14: #{type_forward.1} parent=0 // pred_check
    _
  $region15: #{type_forward.1} parent=0 // pred_check_branch
    %30 = sbr.rel (0) target = $region17
  $region16: #{type_forward.1} parent=0 // pred_region
    _
  $region17: #{type_forward.1} parent=0 // pred_fallthru
    _
  // Predicated region
  $region18: #{type_forward.1} parent=0 // pred_check
    _
  $region19: #{type_forward.1} parent=0 // pred_check_branch
    %32 = sbr.rel (0) target = $region21
  $region20: #{type_forward.1} parent=0 // pred_region
    _
  $region21: #{type_forward.1} parent=0 // pred_fallthru
    _
  // Predicated region
  $region22: #{type_forward.1} parent=0 // pred_check
    _
  $region23: #{type_forward.1} parent=0 // pred_check_branch
    %34 = sbr.rel (0) target = $region25
  $region24: #{type_forward.1} parent=0 // pred_region
    _
  $region25: #{type_forward.1} parent=0 // pred_fallthru
    _
  // Predicated region
  $region26: #{type_forward.1} parent=0 // pred_check
    _
  $region27: #{type_forward.1} parent=0 // pred_check_branch
    %36 = sbr.rel (0) target = $region29
  $region28: #{type_forward.1} parent=0 // pred_region
    _
  $region29: #{type_forward.1} parent=0 // pred_fallthru
    _
  // Predicated region
  $region30: #{type_forward.1} parent=0 // pred_check
    _
  $region31: #{type_forward.1} parent=0 // pred_check_branch
    %38 = sbr.rel (0) target = $region33
  $region32: #{type_forward.1} parent=0 // pred_region
    _
  $region33: #{type_forward.1} parent=0 // pred_fallthru
    _
  // Predicated region
  $region34: #{type_forward.1} parent=0 // pred_check
    _
  $region35: #{type_forward.1} parent=0 // pred_check_branch
    %40 = sbr.rel (0) target = $region37
  $region36: #{type_forward.1} parent=0 // pred_region
    _
  $region37: #{type_forward.1} parent=0 // pred_fallthru
    _
  // Predicated region
  $region38: #{type_forward.1} parent=0 // pred_check
    _
  $region39: #{type_forward.1} parent=0 // pred_check_branch
    %42 = sbr.rel (0) target = $region41
  $region40: #{type_forward.1} parent=0 // pred_region
    _
  $region41: #{type_forward.1} parent=0 // pred_fallthru
    _
  // Predicated region
  $region42: #{type_forward.1} parent=0 // pred_check
    _
  $region43: #{type_forward.1} parent=0 // pred_check_branch
    %44 = sbr.rel (0) target = $region45
  $region44: #{type_forward.1} parent=0 // pred_region
    _
  $region45: #{type_forward.1} parent=0 // pred_fallthru
    _
  // Predicated region
  $region46: #{type_forward.1} parent=0 // pred_check
    _
  $region47: #{type_forward.1} parent=0 // pred_check_branch
    %46 = sbr.rel (0) target = $region49
  $region48: #{type_forward.1} parent=0 // pred_region
    _
  $region49: #{type_forward.1} parent=0 // pred_fallthru
    _
  // Predicated region
  $region50: #{type_forward.1} parent=0 // pred_check
    _
  $region51: #{type_forward.1} parent=0 // pred_check_branch
    %48 = sbr.rel (0) target = $region53
  $region52: #{type_forward.1} parent=0 // pred_region
    _
  $region53: #{type_forward.1} parent=0 // pred_fallthru
    _
  // Predicated region
  $region54: #{type_forward.1} parent=0 // pred_check
    _
  $region55: #{type_forward.1} parent=0 // pred_check_branch
    %50 = sbr.rel (0) target = $region57
  $region56: #{type_forward.1} parent=0 // pred_region
    _
  $region57: #{type_forward.1} parent=0 // pred_fallthru
    _
  // Predicated region
  $region58: #{type_forward.1} parent=0 // pred_check
    _
  $region59: #{type_forward.1} parent=0 // pred_check_branch
    %52 = sbr.rel (0) target = $region61
  $region60: #{type_forward.1} parent=0 // pred_region
    _
  $region61: #{type_forward.1} parent=0 // pred_fallthru
    _
  // Predicated region
  $region62: #{type_forward.1} parent=0 // pred_check
    _
  $region63: #{type_forward.1} parent=0 // pred_check_branch
    %54 = sbr.rel (0) target = $region65
  $region64: #{type_forward.1} parent=0 // pred_region
    _
  $region65: #{type_forward.1} parent=0 // pred_fallthru
    _
  // Predicated region
  $region66: #{type_forward.1} parent=0 // pred_check
    _
  $region67: #{type_forward.1} parent=0 // pred_check_branch
    %56 = sbr.rel (0) target = $region69
  $region68: #{type_forward.1} parent=0 // pred_region
    _
  $region69: #{type_forward.1} parent=0 // pred_fallthru
    _
  // Predicated region
  $region70: #{type_forward.1} parent=0 // pred_check
    _
  $region71: #{type_forward.1} parent=0 // pred_check_branch
    %58 = sbr.rel (0) target = $region73
  $region72: #{type_forward.1} parent=0 // pred_region
    _
  $region73: #{type_forward.1} parent=0 // pred_fallthru
    _
  %v60 = vld [vmem:[%s0] sm:$0xf]
  %v61 = vld [vmem:[%s0 + $0x4] sm:$0xf]
  %v62 = vld [vmem:[%s0 + $0x8] sm:$0xf]
  %v63 = vld [vmem:[%s0 + $0xc] sm:$0xf]
  %v64 = vld [vmem:[%s0 + $0x10] sm:$0xf]
  %v65 = vld [vmem:[%s0 + $0x14] sm:$0xf]
  %v66 = vld [vmem:[%s0 + $0x18] sm:$0xf]
  %v67 = vld [vmem:[%s0 + $0x1c] sm:$0xf]
  %v68 = vld [vmem:[%s0 + $0x20] sm:$0xf]
  %v69 = vld [vmem:[%s0 + $0x24] sm:$0xf]
  %v70 = vld [vmem:[%s0 + $0x28] sm:$0xf]
  %v71 = vld [vmem:[%s0 + $0x2c] sm:$0xf]
  %v72 = vld [vmem:[%s0 + $0x30] sm:$0xf]
  %v73 = vld [vmem:[%s0 + $0x34] sm:$0xf]
  %v74 = vld [vmem:[%s0 + $0x38] sm:$0xf]
  %v75 = vld [vmem:[%s0 + $0x3c] sm:$0xf]
  %v76 = vld [vmem:[%s0 + $0x40] sm:$0xf]
  %v77 = vld [vmem:[%s0 + $0x44] sm:$0xf]
  %v78 = vld [vmem:[%s0 + $0x48] sm:$0xf]
  %v79 = vld [vmem:[%s0 + $0x4c] sm:$0xf]
  %v80 = vld [vmem:[%s0 + $0x50] sm:$0xf]
  %v81 = vld [vmem:[%s0 + $0x54] sm:$0xf]
  %v82 = vld [vmem:[%s0 + $0x58] sm:$0xf]
  %v83 = vld [vmem:[%s0 + $0x5c] sm:$0xf]
  %v84 = vld [vmem:[%s0 + $0x60] sm:$0xf]
  %v85 = vld [vmem:[%s0 + $0x64] sm:$0xf]
  %v86 = vld [vmem:[%s0 + $0x68] sm:$0xf]
  %v87 = vld [vmem:[%s0 + $0x6c] sm:$0xf]
  %v88 = vld [vmem:[%s0 + $0x70] sm:$0xf]
  %v89 = vld [vmem:[%s0 + $0x74] sm:$0xf]
  %v90 = vld [vmem:[%s0 + $0x78] sm:$0xf]
  %v91 = vld [vmem:[%s0 + $0x7c] sm:$0xf]
  %v92 = vld [vmem:[%s0 + $0x80] sm:$0xf]
  %v93 = vld [vmem:[%s0 + $0x84] sm:$0xf]
  %v94 = vld [vmem:[%s0 + $0x88] sm:$0xf]
  %v95 = vld [vmem:[%s0 + $0x8c] sm:$0xf]
  %v96 = vld [vmem:[%s0 + $0x90] sm:$0xf]
  %v97 = vld [vmem:[%s0 + $0x94] sm:$0xf]
  %v98 = vld [vmem:[%s0 + $0x98] sm:$0xf]
  %v99 = vld [vmem:[%s0 + $0x9c] sm:$0xf]
  %v100 = vld [vmem:[%s0 + $0xa0] sm:$0xf]
  %v101 = vld [vmem:[%s0 + $0xa4] sm:$0xf]
  %v102 = vld [vmem:[%s0 + $0xa8] sm:$0xf]
  %v103 = vld [vmem:[%s0 + $0xac] sm:$0xf]
  %v104 = vld [vmem:[%s0 + $0xb0] sm:$0xf]
  %v105 = vld [vmem:[%s0 + $0xb4] sm:$0xf]
  %v106 = vld [vmem:[%s0 + $0xb8] sm:$0xf]
  %v107 = vld [vmem:[%s0 + $0xbc] sm:$0xf]
  %v108 = vld [vmem:[%s0 + $0xc0] sm:$0xf]
  %v109 = vld [vmem:[%s0 + $0xc4] sm:$0xf]
  %v110 = vld [vmem:[%s0 + $0xc8] sm:$0xf]
  %v111 = vld [vmem:[%s0 + $0xcc] sm:$0xf]
  %v112 = vld [vmem:[%s0 + $0xd0] sm:$0xf]
  %v113 = vld [vmem:[%s0 + $0xd4] sm:$0xf]
  %v114 = vld [vmem:[%s0 + $0xd8] sm:$0xf]
  %v115 = vld [vmem:[%s0 + $0xdc] sm:$0xf]
  %v116 = vld [vmem:[%s0 + $0xe0] sm:$0xf]
  %v117 = vld [vmem:[%s0 + $0xe4] sm:$0xf]
  %v118 = vld [vmem:[%s0 + $0xe8] sm:$0xf]
  %v119 = vld [vmem:[%s0 + $0xec] sm:$0xf]
  %v120 = vld [vmem:[%s3] sm:$0x1]
  %v121 = vld [vmem:[%s1] sm:$0xff]
  %v122 = vld [vmem:[%s1 + $0x8] sm:$0xff]
  %v123 = vld [vmem:[%s1 + $0x10] sm:$0xff]
  %v124 = vld [vmem:[%s1 + $0x18] sm:$0xff]
  %v125 = vld [vmem:[%s1 + $0x20] sm:$0xff]
  %v126 = vld [vmem:[%s1 + $0x28] sm:$0xff]
  %v127 = vld [vmem:[%s1 + $0x30] sm:$0xff]
  %v128 = vld [vmem:[%s1 + $0x38] sm:$0xff]
  %v129 = vld [vmem:[%s1 + $0x40] sm:$0xff]
  %v130 = vld [vmem:[%s1 + $0x48] sm:$0xff]
  %v131 = vld [vmem:[%s1 + $0x50] sm:$0xff]
  %v132 = vld [vmem:[%s1 + $0x58] sm:$0xff]
  %v133 = vld [vmem:[%s1 + $0x60] sm:$0xff]
  %v134 = vld [vmem:[%s1 + $0x68] sm:$0xff]
  %v135 = vld [vmem:[%s1 + $0x70] sm:$0xff]
  %v136 = vld [vmem:[%s1 + $0x78] sm:$0xff]
  %v137 = vld [vmem:[%s1 + $0x80] sm:$0xff]
  %v138 = vld [vmem:[%s1 + $0x88] sm:$0xff]
  %v139 = vld [vmem:[%s1 + $0x90] sm:$0xff]
  %v140 = vld [vmem:[%s1 + $0x98] sm:$0xff]
  %v141 = vld [vmem:[%s1 + $0xa0] sm:$0xff]
  %v142 = vld [vmem:[%s1 + $0xa8] sm:$0xff]
  %v143 = vld [vmem:[%s1 + $0xb0] sm:$0xff]
  %v144 = vld [vmem:[%s1 + $0xb8] sm:$0xff]
  %v145 = vld [vmem:[%s1 + $0xc0] sm:$0xff]
  %v146 = vld [vmem:[%s1 + $0xc8] sm:$0xff]
  %v147 = vld [vmem:[%s1 + $0xd0] sm:$0xff]
  %v148 = vld [vmem:[%s1 + $0xd8] sm:$0xff]
  %v149 = vld [vmem:[%s1 + $0xe0] sm:$0xff]
  %v150 = vld [vmem:[%s1 + $0xe8] sm:$0xff]
  %v151 = vld [vmem:[%s1 + $0xf0] sm:$0xff]
  %v152 = vld [vmem:[%s1 + $0xf8] sm:$0xff]
  %v153 = vld [vmem:[%s1 + $0x100] sm:$0xff]
  %v154 = vld [vmem:[%s1 + $0x108] sm:$0xff]
  %v155 = vld [vmem:[%s1 + $0x110] sm:$0xff]
  %v156 = vld [vmem:[%s1 + $0x118] sm:$0xff]
  %v157 = vld [vmem:[%s1 + $0x120] sm:$0xff]
  %v158 = vld [vmem:[%s1 + $0x128] sm:$0xff]
  %v159 = vld [vmem:[%s1 + $0x130] sm:$0xff]
  %v160 = vld [vmem:[%s1 + $0x138] sm:$0xff]
  %v161 = vld [vmem:[%s1 + $0x140] sm:$0xff]
  %v162 = vld [vmem:[%s1 + $0x148] sm:$0xff]
  %v163 = vld [vmem:[%s1 + $0x150] sm:$0xff]
  %v164 = vld [vmem:[%s1 + $0x158] sm:$0xff]
  %v165 = vld [vmem:[%s1 + $0x160] sm:$0xff]
  %v166 = vld [vmem:[%s1 + $0x168] sm:$0xff]
  %v167 = vld [vmem:[%s1 + $0x170] sm:$0xff]
  %v168 = vld [vmem:[%s1 + $0x178] sm:$0xff]
  %v169 = vld [vmem:[%s1 + $0x180] sm:$0xff]
  %v170 = vld [vmem:[%s1 + $0x188] sm:$0xff]
  %v171 = vld [vmem:[%s1 + $0x190] sm:$0xff]
  %v172 = vld [vmem:[%s1 + $0x198] sm:$0xff]
  %v173 = vld [vmem:[%s1 + $0x1a0] sm:$0xff]
  %v174 = vld [vmem:[%s1 + $0x1a8] sm:$0xff]
  %v175 = vld [vmem:[%s1 + $0x1b0] sm:$0xff]
  %v176 = vld [vmem:[%s1 + $0x1b8] sm:$0xff]
  %v177 = vld [vmem:[%s1 + $0x1c0] sm:$0xff]
  %v178 = vld [vmem:[%s1 + $0x1c8] sm:$0xff]
  %v179 = vld [vmem:[%s1 + $0x1d0] sm:$0xff]
  %v180 = vld [vmem:[%s1 + $0x1d8] sm:$0xff]
  %v241 = vunpack.c.l.b16 %v121
  %v242 = vunpack.c.h.b16 %v121
  %v243 = vunpack.c.l.b16 %v122
  %v244 = vunpack.c.h.b16 %v122
  %v245 = vunpack.c.l.b16 %v123
  %v246 = vunpack.c.h.b16 %v123
  %v247 = vunpack.c.l.b16 %v124
  %v248 = vunpack.c.h.b16 %v124
  %v249 = vunpack.c.l.b16 %v125
  %v250 = vunpack.c.h.b16 %v125
  %v251 = vunpack.c.l.b16 %v126
  %v252 = vunpack.c.h.b16 %v126
  %v253 = vunpack.c.l.b16 %v127
  %v254 = vunpack.c.h.b16 %v127
  %v255 = vunpack.c.l.b16 %v128
  %v256 = vunpack.c.h.b16 %v128
  %v257 = vunpack.c.l.b16 %v129
  %v258 = vunpack.c.h.b16 %v129
  %v259 = vunpack.c.l.b16 %v130
  %v260 = vunpack.c.h.b16 %v130
  %v261 = vunpack.c.l.b16 %v131
  %v262 = vunpack.c.h.b16 %v131
  %v263 = vunpack.c.l.b16 %v132
  %v264 = vunpack.c.h.b16 %v132
  %v265 = vunpack.c.l.b16 %v133
  %v266 = vunpack.c.h.b16 %v133
  %v267 = vunpack.c.l.b16 %v134
  %v268 = vunpack.c.h.b16 %v134
  %v269 = vunpack.c.l.b16 %v135
  %v270 = vunpack.c.h.b16 %v135
  %v271 = vunpack.c.l.b16 %v136
  %v272 = vunpack.c.h.b16 %v136
  %v273 = vunpack.c.l.b16 %v137
  %v274 = vunpack.c.h.b16 %v137
  %v275 = vunpack.c.l.b16 %v138
  %v276 = vunpack.c.h.b16 %v138
  %v277 = vunpack.c.l.b16 %v139
  %v278 = vunpack.c.h.b16 %v139
  %v279 = vunpack.c.l.b16 %v140
  %v280 = vunpack.c.h.b16 %v140
  %v281 = vunpack.c.l.b16 %v141
  %v282 = vunpack.c.h.b16 %v141
  %v283 = vunpack.c.l.b16 %v142
  %v284 = vunpack.c.h.b16 %v142
  %v285 = vunpack.c.l.b16 %v143
  %v286 = vunpack.c.h.b16 %v143
  %v287 = vunpack.c.l.b16 %v144
  %v288 = vunpack.c.h.b16 %v144
  %v289 = vunpack.c.l.b16 %v145
  %v290 = vunpack.c.h.b16 %v145
  %v291 = vunpack.c.l.b16 %v146
  %v292 = vunpack.c.h.b16 %v146
  %v293 = vunpack.c.l.b16 %v147
  %v294 = vunpack.c.h.b16 %v147
  %v295 = vunpack.c.l.b16 %v148
  %v296 = vunpack.c.h.b16 %v148
  %v297 = vunpack.c.l.b16 %v149
  %v298 = vunpack.c.h.b16 %v149
  %v299 = vunpack.c.l.b16 %v150
  %v300 = vunpack.c.h.b16 %v150
  %v301 = vunpack.c.l.b16 %v151
  %v302 = vunpack.c.h.b16 %v151
  %v303 = vunpack.c.l.b16 %v152
  %v304 = vunpack.c.h.b16 %v152
  %v305 = vunpack.c.l.b16 %v153
  %v306 = vunpack.c.h.b16 %v153
  %v307 = vunpack.c.l.b16 %v154
  %v308 = vunpack.c.h.b16 %v154
  %v309 = vunpack.c.l.b16 %v155
  %v310 = vunpack.c.h.b16 %v155
  %v311 = vunpack.c.l.b16 %v156
  %v312 = vunpack.c.h.b16 %v156
  %v313 = vunpack.c.l.b16 %v157
  %v314 = vunpack.c.h.b16 %v157
  %v315 = vunpack.c.l.b16 %v158
  %v316 = vunpack.c.h.b16 %v158
  %v317 = vunpack.c.l.b16 %v159
  %v318 = vunpack.c.h.b16 %v159
  %v319 = vunpack.c.l.b16 %v160
  %v320 = vunpack.c.h.b16 %v160
  %v321 = vunpack.c.l.b16 %v161
  %v322 = vunpack.c.h.b16 %v161
  %v323 = vunpack.c.l.b16 %v162
  %v324 = vunpack.c.h.b16 %v162
  %v325 = vunpack.c.l.b16 %v163
  %v326 = vunpack.c.h.b16 %v163
  %v327 = vunpack.c.l.b16 %v164
  %v328 = vunpack.c.h.b16 %v164
  %v329 = vunpack.c.l.b16 %v165
  %v330 = vunpack.c.h.b16 %v165
  %v331 = vunpack.c.l.b16 %v166
  %v332 = vunpack.c.h.b16 %v166
  %v333 = vunpack.c.l.b16 %v167
  %v334 = vunpack.c.h.b16 %v167
  %v335 = vunpack.c.l.b16 %v168
  %v336 = vunpack.c.h.b16 %v168
  %v337 = vunpack.c.l.b16 %v169
  %v338 = vunpack.c.h.b16 %v169
  %v339 = vunpack.c.l.b16 %v170
  %v340 = vunpack.c.h.b16 %v170
  %v341 = vunpack.c.l.b16 %v171
  %v342 = vunpack.c.h.b16 %v171
  %v343 = vunpack.c.l.b16 %v172
  %v344 = vunpack.c.h.b16 %v172
  %v345 = vunpack.c.l.b16 %v173
  %v346 = vunpack.c.h.b16 %v173
  %v347 = vunpack.c.l.b16 %v174
  %v348 = vunpack.c.h.b16 %v174
  %v349 = vunpack.c.l.b16 %v175
  %v350 = vunpack.c.h.b16 %v175
  %v351 = vunpack.c.l.b16 %v176
  %v352 = vunpack.c.h.b16 %v176
  %v353 = vunpack.c.l.b16 %v177
  %v354 = vunpack.c.h.b16 %v177
  %v355 = vunpack.c.l.b16 %v178
  %v356 = vunpack.c.h.b16 %v178
  %v357 = vunpack.c.l.b16 %v179
  %v358 = vunpack.c.h.b16 %v179
  %v359 = vunpack.c.l.b16 %v180
  %v360 = vunpack.c.h.b16 %v180
  %v361 = vpack.c.b16 %v245, %v241
  %v362 = vpack.c.b16 %v246, %v242
  %v363 = vpack.c.b16 %v247, %v243
  %v364 = vpack.c.b16 %v248, %v244
  %v365 = vpack.c.b16 %v253, %v249
  %v366 = vpack.c.b16 %v254, %v250
  %v367 = vpack.c.b16 %v255, %v251
  %v368 = vpack.c.b16 %v256, %v252
  %v369 = vpack.c.b16 %v261, %v257
  %v370 = vpack.c.b16 %v262, %v258
  %v371 = vpack.c.b16 %v263, %v259
  %v372 = vpack.c.b16 %v264, %v260
  %v373 = vpack.c.b16 %v269, %v265
  %v374 = vpack.c.b16 %v270, %v266
  %v375 = vpack.c.b16 %v271, %v267
  %v376 = vpack.c.b16 %v272, %v268
  %v377 = vpack.c.b16 %v277, %v273
  %v378 = vpack.c.b16 %v278, %v274
  %v379 = vpack.c.b16 %v279, %v275
  %v380 = vpack.c.b16 %v280, %v276
  %v381 = vpack.c.b16 %v285, %v281
  %v382 = vpack.c.b16 %v286, %v282
  %v383 = vpack.c.b16 %v287, %v283
  %v384 = vpack.c.b16 %v288, %v284
  %v385 = vpack.c.b16 %v293, %v289
  %v386 = vpack.c.b16 %v294, %v290
  %v387 = vpack.c.b16 %v295, %v291
  %v388 = vpack.c.b16 %v296, %v292
  %v389 = vpack.c.b16 %v301, %v297
  %v390 = vpack.c.b16 %v302, %v298
  %v391 = vpack.c.b16 %v303, %v299
  %v392 = vpack.c.b16 %v304, %v300
  %v393 = vpack.c.b16 %v309, %v305
  %v394 = vpack.c.b16 %v310, %v306
  %v395 = vpack.c.b16 %v311, %v307
  %v396 = vpack.c.b16 %v312, %v308
  %v397 = vpack.c.b16 %v317, %v313
  %v398 = vpack.c.b16 %v318, %v314
  %v399 = vpack.c.b16 %v319, %v315
  %v400 = vpack.c.b16 %v320, %v316
  %v401 = vpack.c.b16 %v325, %v321
  %v402 = vpack.c.b16 %v326, %v322
  %v403 = vpack.c.b16 %v327, %v323
  %v404 = vpack.c.b16 %v328, %v324
  %v405 = vpack.c.b16 %v333, %v329
  %v406 = vpack.c.b16 %v334, %v330
  %v407 = vpack.c.b16 %v335, %v331
  %v408 = vpack.c.b16 %v336, %v332
  %v409 = vpack.c.b16 %v341, %v337
  %v410 = vpack.c.b16 %v342, %v338
  %v411 = vpack.c.b16 %v343, %v339
  %v412 = vpack.c.b16 %v344, %v340
  %v413 = vpack.c.b16 %v349, %v345
  %v414 = vpack.c.b16 %v350, %v346
  %v415 = vpack.c.b16 %v351, %v347
  %v416 = vpack.c.b16 %v352, %v348
  %v417 = vpack.c.b16 %v357, %v353
  %v418 = vpack.c.b16 %v358, %v354
  %v419 = vpack.c.b16 %v359, %v355
  %v420 = vpack.c.b16 %v360, %v356
  %v526 = vunpack.c.l.b16 %v60
  %v527 = vunpack.c.l.b16 %v61
  %v528 = vunpack.c.l.b16 %v62
  %v529 = vunpack.c.l.b16 %v63
  %v530 = vunpack.c.l.b16 %v64
  %v531 = vunpack.c.l.b16 %v65
  %v532 = vunpack.c.l.b16 %v66
  %v533 = vunpack.c.l.b16 %v67
  %v534 = vunpack.c.l.b16 %v68
  %v535 = vunpack.c.l.b16 %v69
  %v536 = vunpack.c.l.b16 %v70
  %v537 = vunpack.c.l.b16 %v71
  %v538 = vunpack.c.l.b16 %v72
  %v539 = vunpack.c.l.b16 %v73
  %v540 = vunpack.c.l.b16 %v74
  %v541 = vunpack.c.l.b16 %v75
  %v542 = vunpack.c.l.b16 %v76
  %v543 = vunpack.c.l.b16 %v77
  %v544 = vunpack.c.l.b16 %v78
  %v545 = vunpack.c.l.b16 %v79
  %v546 = vunpack.c.l.b16 %v80
  %v547 = vunpack.c.l.b16 %v81
  %v548 = vunpack.c.l.b16 %v82
  %v549 = vunpack.c.l.b16 %v83
  %v550 = vunpack.c.l.b16 %v84
  %v551 = vunpack.c.l.b16 %v85
  %v552 = vunpack.c.l.b16 %v86
  %v553 = vunpack.c.l.b16 %v87
  %v554 = vunpack.c.l.b16 %v88
  %v555 = vunpack.c.l.b16 %v89
  %v556 = vunpack.c.l.b16 %v90
  %v557 = vunpack.c.l.b16 %v91
  %v558 = vunpack.c.l.b16 %v92
  %v559 = vunpack.c.l.b16 %v93
  %v560 = vunpack.c.l.b16 %v94
  %v561 = vunpack.c.l.b16 %v95
  %v562 = vunpack.c.l.b16 %v96
  %v563 = vunpack.c.l.b16 %v97
  %v564 = vunpack.c.l.b16 %v98
  %v565 = vunpack.c.l.b16 %v99
  %v566 = vunpack.c.l.b16 %v100
  %v567 = vunpack.c.l.b16 %v101
  %v568 = vunpack.c.l.b16 %v102
  %v569 = vunpack.c.l.b16 %v103
  %v570 = vunpack.c.l.b16 %v104
  %v571 = vunpack.c.l.b16 %v105
  %v572 = vunpack.c.l.b16 %v106
  %v573 = vunpack.c.l.b16 %v107
  %v574 = vunpack.c.l.b16 %v108
  %v575 = vunpack.c.l.b16 %v109
  %v576 = vunpack.c.l.b16 %v110
  %v577 = vunpack.c.l.b16 %v111
  %v578 = vunpack.c.l.b16 %v112
  %v579 = vunpack.c.l.b16 %v113
  %v580 = vunpack.c.l.b16 %v114
  %v581 = vunpack.c.l.b16 %v115
  %v582 = vunpack.c.l.b16 %v116
  %v583 = vunpack.c.l.b16 %v117
  %v584 = vunpack.c.l.b16 %v118
  %v585 = vunpack.c.l.b16 %v119
  %v586 = vpack.c.b16 %v527, %v526
  %v587 = vpack.c.b16 %v529, %v528
  %v588 = vpack.c.b16 %v531, %v530
  %v589 = vpack.c.b16 %v533, %v532
  %v590 = vpack.c.b16 %v535, %v534
  %v591 = vpack.c.b16 %v537, %v536
  %v592 = vpack.c.b16 %v539, %v538
  %v593 = vpack.c.b16 %v541, %v540
  %v594 = vpack.c.b16 %v543, %v542
  %v595 = vpack.c.b16 %v545, %v544
  %v596 = vpack.c.b16 %v547, %v546
  %v597 = vpack.c.b16 %v549, %v548
  %v598 = vpack.c.b16 %v551, %v550
  %v599 = vpack.c.b16 %v553, %v552
  %v600 = vpack.c.b16 %v555, %v554
  %v601 = vpack.c.b16 %v557, %v556
  %v602 = vpack.c.b16 %v559, %v558
  %v603 = vpack.c.b16 %v561, %v560
  %v604 = vpack.c.b16 %v563, %v562
  %v605 = vpack.c.b16 %v565, %v564
  %v606 = vpack.c.b16 %v567, %v566
  %v607 = vpack.c.b16 %v569, %v568
  %v608 = vpack.c.b16 %v571, %v570
  %v609 = vpack.c.b16 %v573, %v572
  %v610 = vpack.c.b16 %v575, %v574
  %v611 = vpack.c.b16 %v577, %v576
  %v612 = vpack.c.b16 %v579, %v578
  %v613 = vpack.c.b16 %v581, %v580
  %v614 = vpack.c.b16 %v583, %v582
  %v615 = vpack.c.b16 %v585, %v584
  %vm646 = vcmask 785408
  %v648 = vsel %vm646, %v364, 0
  %v651 = vsel %vm646, %v368, 0
  %v654 = vsel %vm646, %v372, 0
  %v657 = vsel %vm646, %v376, 0
  %v660 = vsel %vm646, %v380, 0
  %v663 = vsel %vm646, %v384, 0
  %v666 = vsel %vm646, %v388, 0
  %v669 = vsel %vm646, %v392, 0
  %v672 = vsel %vm646, %v396, 0
  %v675 = vsel %vm646, %v400, 0
  %v678 = vsel %vm646, %v404, 0
  %v681 = vsel %vm646, %v408, 0
  %v684 = vsel %vm646, %v412, 0
  %v687 = vsel %vm646, %v416, 0
  %v690 = vsel %vm646, %v420, 0
  %692 = vmatpush.bf16.msra.mxu0 %v593
  %693 = vmatpush.bf16.msra.mxu0 %v592
  %694 = vmatpush.bf16.msra.mxu0 %v591
  %695 = vmatpush.bf16.msra.mxu0 %v590
  %696 = vmatpush.bf16.msra.mxu0 %v589
  %697 = vmatpush.bf16.msra.mxu0 %v588
  %698 = vmatpush.bf16.msra.mxu0 %v587
  %699 = vmatpush.bf16.msra.mxu0 %v586
  %700 = vmatmul.bf16.gmra.mxu0 %v361
  %v701 = vpop.f32.mrf.mxu0
  %v702 = vadd.f32 0.0, %v701
  %v703 = vpop.f32.mrf.mxu0
  %v704 = vadd.f32 0.0, %v703
  %705 = vmatmul.bf16.gmra.mxu0 %v365
  %v706 = vpop.f32.mrf.mxu0
  %v707 = vadd.f32 0.0, %v706
  %v708 = vpop.f32.mrf.mxu0
  %v709 = vadd.f32 0.0, %v708
  %710 = vmatmul.bf16.gmra.mxu0 %v369
  %v711 = vpop.f32.mrf.mxu0
  %v712 = vadd.f32 0.0, %v711
  %v713 = vpop.f32.mrf.mxu0
  %v714 = vadd.f32 0.0, %v713
  %715 = vmatmul.bf16.gmra.mxu0 %v373
  %v716 = vpop.f32.mrf.mxu0
  %v717 = vadd.f32 0.0, %v716
  %v718 = vpop.f32.mrf.mxu0
  %v719 = vadd.f32 0.0, %v718
  %720 = vmatmul.bf16.gmra.mxu0 %v377
  %v721 = vpop.f32.mrf.mxu0
  %v722 = vadd.f32 0.0, %v721
  %v723 = vpop.f32.mrf.mxu0
  %v724 = vadd.f32 0.0, %v723
  %725 = vmatmul.bf16.gmra.mxu0 %v381
  %v726 = vpop.f32.mrf.mxu0
  %v727 = vadd.f32 0.0, %v726
  %v728 = vpop.f32.mrf.mxu0
  %v729 = vadd.f32 0.0, %v728
  %730 = vmatmul.bf16.gmra.mxu0 %v385
  %v731 = vpop.f32.mrf.mxu0
  %v732 = vadd.f32 0.0, %v731
  %v733 = vpop.f32.mrf.mxu0
  %v734 = vadd.f32 0.0, %v733
  %735 = vmatmul.bf16.gmra.mxu0 %v389
  %v736 = vpop.f32.mrf.mxu0
  %v737 = vadd.f32 0.0, %v736
  %v738 = vpop.f32.mrf.mxu0
  %v739 = vadd.f32 0.0, %v738
  %740 = vmatmul.bf16.gmra.mxu0 %v393
  %v741 = vpop.f32.mrf.mxu0
  %v742 = vadd.f32 0.0, %v741
  %v743 = vpop.f32.mrf.mxu0
  %v744 = vadd.f32 0.0, %v743
  %745 = vmatmul.bf16.gmra.mxu0 %v397
  %v746 = vpop.f32.mrf.mxu0
  %v747 = vadd.f32 0.0, %v746
  %v748 = vpop.f32.mrf.mxu0
  %v749 = vadd.f32 0.0, %v748
  %750 = vmatmul.bf16.gmra.mxu0 %v401
  %v751 = vpop.f32.mrf.mxu0
  %v752 = vadd.f32 0.0, %v751
  %v753 = vpop.f32.mrf.mxu0
  %v754 = vadd.f32 0.0, %v753
  %755 = vmatmul.bf16.gmra.mxu0 %v405
  %v756 = vpop.f32.mrf.mxu0
  %v757 = vadd.f32 0.0, %v756
  %v758 = vpop.f32.mrf.mxu0
  %v759 = vadd.f32 0.0, %v758
  %760 = vmatmul.bf16.gmra.mxu0 %v409
  %v761 = vpop.f32.mrf.mxu0
  %v762 = vadd.f32 0.0, %v761
  %v763 = vpop.f32.mrf.mxu0
  %v764 = vadd.f32 0.0, %v763
  %765 = vmatmul.bf16.gmra.mxu0 %v413
  %v766 = vpop.f32.mrf.mxu0
  %v767 = vadd.f32 0.0, %v766
  %v768 = vpop.f32.mrf.mxu0
  %v769 = vadd.f32 0.0, %v768
  %770 = vmatmul.bf16.gmra.mxu0 %v417
  %v771 = vpop.f32.mrf.mxu0
  %v772 = vadd.f32 0.0, %v771
  %v773 = vpop.f32.mrf.mxu0
  %v774 = vadd.f32 0.0, %v773
  %775 = vdwg.mxu0
  %776 = vmatpush.bf16.msra.mxu0 %v601
  %777 = vmatpush.bf16.msra.mxu0 %v600
  %778 = vmatpush.bf16.msra.mxu0 %v599
  %779 = vmatpush.bf16.msra.mxu0 %v598
  %780 = vmatpush.bf16.msra.mxu0 %v597
  %781 = vmatpush.bf16.msra.mxu0 %v596
  %782 = vmatpush.bf16.msra.mxu0 %v595
  %783 = vmatpush.bf16.msra.mxu0 %v594
  %784 = vmatmul.bf16.gmra.mxu0 %v362
  %v785 = vpop.f32.mrf.mxu0
  %v786 = vadd.f32 %v702, %v785
  %v787 = vpop.f32.mrf.mxu0
  %v788 = vadd.f32 %v704, %v787
  %789 = vmatmul.bf16.gmra.mxu0 %v366
  %v790 = vpop.f32.mrf.mxu0
  %v791 = vadd.f32 %v707, %v790
  %v792 = vpop.f32.mrf.mxu0
  %v793 = vadd.f32 %v709, %v792
  %794 = vmatmul.bf16.gmra.mxu0 %v370
  %v795 = vpop.f32.mrf.mxu0
  %v796 = vadd.f32 %v712, %v795
  %v797 = vpop.f32.mrf.mxu0
  %v798 = vadd.f32 %v714, %v797
  %799 = vmatmul.bf16.gmra.mxu0 %v374
  %v800 = vpop.f32.mrf.mxu0
  %v801 = vadd.f32 %v717, %v800
  %v802 = vpop.f32.mrf.mxu0
  %v803 = vadd.f32 %v719, %v802
  %804 = vmatmul.bf16.gmra.mxu0 %v378
  %v805 = vpop.f32.mrf.mxu0
  %v806 = vadd.f32 %v722, %v805
  %v807 = vpop.f32.mrf.mxu0
  %v808 = vadd.f32 %v724, %v807
  %809 = vmatmul.bf16.gmra.mxu0 %v382
  %v810 = vpop.f32.mrf.mxu0
  %v811 = vadd.f32 %v727, %v810
  %v812 = vpop.f32.mrf.mxu0
  %v813 = vadd.f32 %v729, %v812
  %814 = vmatmul.bf16.gmra.mxu0 %v386
  %v815 = vpop.f32.mrf.mxu0
  %v816 = vadd.f32 %v732, %v815
  %v817 = vpop.f32.mrf.mxu0
  %v818 = vadd.f32 %v734, %v817
  %819 = vmatmul.bf16.gmra.mxu0 %v390
  %v820 = vpop.f32.mrf.mxu0
  %v821 = vadd.f32 %v737, %v820
  %v822 = vpop.f32.mrf.mxu0
  %v823 = vadd.f32 %v739, %v822
  %824 = vmatmul.bf16.gmra.mxu0 %v394
  %v825 = vpop.f32.mrf.mxu0
  %v826 = vadd.f32 %v742, %v825
  %v827 = vpop.f32.mrf.mxu0
  %v828 = vadd.f32 %v744, %v827
  %829 = vmatmul.bf16.gmra.mxu0 %v398
  %v830 = vpop.f32.mrf.mxu0
  %v831 = vadd.f32 %v747, %v830
  %v832 = vpop.f32.mrf.mxu0
  %v833 = vadd.f32 %v749, %v832
  %834 = vmatmul.bf16.gmra.mxu0 %v402
  %v835 = vpop.f32.mrf.mxu0
  %v836 = vadd.f32 %v752, %v835
  %v837 = vpop.f32.mrf.mxu0
  %v838 = vadd.f32 %v754, %v837
  %839 = vmatmul.bf16.gmra.mxu0 %v406
  %v840 = vpop.f32.mrf.mxu0
  %v841 = vadd.f32 %v757, %v840
  %v842 = vpop.f32.mrf.mxu0
  %v843 = vadd.f32 %v759, %v842
  %844 = vmatmul.bf16.gmra.mxu0 %v410
  %v845 = vpop.f32.mrf.mxu0
  %v846 = vadd.f32 %v762, %v845
  %v847 = vpop.f32.mrf.mxu0
  %v848 = vadd.f32 %v764, %v847
  %849 = vmatmul.bf16.gmra.mxu0 %v414
  %v850 = vpop.f32.mrf.mxu0
  %v851 = vadd.f32 %v767, %v850
  %v852 = vpop.f32.mrf.mxu0
  %v853 = vadd.f32 %v769, %v852
  %854 = vmatmul.bf16.gmra.mxu0 %v418
  %v855 = vpop.f32.mrf.mxu0
  %v856 = vadd.f32 %v772, %v855
  %v857 = vpop.f32.mrf.mxu0
  %v858 = vadd.f32 %v774, %v857
  %859 = vdwg.mxu0
  %860 = vmatpush.bf16.msra.mxu0 %v609
  %861 = vmatpush.bf16.msra.mxu0 %v608
  %862 = vmatpush.bf16.msra.mxu0 %v607
  %863 = vmatpush.bf16.msra.mxu0 %v606
  %864 = vmatpush.bf16.msra.mxu0 %v605
  %865 = vmatpush.bf16.msra.mxu0 %v604
  %866 = vmatpush.bf16.msra.mxu0 %v603
  %867 = vmatpush.bf16.msra.mxu0 %v602
  %868 = vmatmul.bf16.gmra.mxu0 %v363
  %v869 = vpop.f32.mrf.mxu0
  %v870 = vadd.f32 %v786, %v869
  %v871 = vpop.f32.mrf.mxu0
  %v872 = vadd.f32 %v788, %v871
  %873 = vmatmul.bf16.gmra.mxu0 %v367
  %v874 = vpop.f32.mrf.mxu0
  %v875 = vadd.f32 %v791, %v874
  %v876 = vpop.f32.mrf.mxu0
  %v877 = vadd.f32 %v793, %v876
  %878 = vmatmul.bf16.gmra.mxu0 %v371
  %v879 = vpop.f32.mrf.mxu0
  %v880 = vadd.f32 %v796, %v879
  %v881 = vpop.f32.mrf.mxu0
  %v882 = vadd.f32 %v798, %v881
  %883 = vmatmul.bf16.gmra.mxu0 %v375
  %v884 = vpop.f32.mrf.mxu0
  %v885 = vadd.f32 %v801, %v884
  %v886 = vpop.f32.mrf.mxu0
  %v887 = vadd.f32 %v803, %v886
  %888 = vmatmul.bf16.gmra.mxu0 %v379
  %v889 = vpop.f32.mrf.mxu0
  %v890 = vadd.f32 %v806, %v889
  %v891 = vpop.f32.mrf.mxu0
  %v892 = vadd.f32 %v808, %v891
  %893 = vmatmul.bf16.gmra.mxu0 %v383
  %v894 = vpop.f32.mrf.mxu0
  %v895 = vadd.f32 %v811, %v894
  %v896 = vpop.f32.mrf.mxu0
  %v897 = vadd.f32 %v813, %v896
  %898 = vmatmul.bf16.gmra.mxu0 %v387
  %v899 = vpop.f32.mrf.mxu0
  %v900 = vadd.f32 %v816, %v899
  %v901 = vpop.f32.mrf.mxu0
  %v902 = vadd.f32 %v818, %v901
  %903 = vmatmul.bf16.gmra.mxu0 %v391
  %v904 = vpop.f32.mrf.mxu0
  %v905 = vadd.f32 %v821, %v904
  %v906 = vpop.f32.mrf.mxu0
  %v907 = vadd.f32 %v823, %v906
  %908 = vmatmul.bf16.gmra.mxu0 %v395
  %v909 = vpop.f32.mrf.mxu0
  %v910 = vadd.f32 %v826, %v909
  %v911 = vpop.f32.mrf.mxu0
  %v912 = vadd.f32 %v828, %v911
  %913 = vmatmul.bf16.gmra.mxu0 %v399
  %v914 = vpop.f32.mrf.mxu0
  %v915 = vadd.f32 %v831, %v914
  %v916 = vpop.f32.mrf.mxu0
  %v917 = vadd.f32 %v833, %v916
  %918 = vmatmul.bf16.gmra.mxu0 %v403
  %v919 = vpop.f32.mrf.mxu0
  %v920 = vadd.f32 %v836, %v919
  %v921 = vpop.f32.mrf.mxu0
  %v922 = vadd.f32 %v838, %v921
  %923 = vmatmul.bf16.gmra.mxu0 %v407
  %v924 = vpop.f32.mrf.mxu0
  %v925 = vadd.f32 %v841, %v924
  %v926 = vpop.f32.mrf.mxu0
  %v927 = vadd.f32 %v843, %v926
  %928 = vmatmul.bf16.gmra.mxu0 %v411
  %v929 = vpop.f32.mrf.mxu0
  %v930 = vadd.f32 %v846, %v929
  %v931 = vpop.f32.mrf.mxu0
  %v932 = vadd.f32 %v848, %v931
  %933 = vmatmul.bf16.gmra.mxu0 %v415
  %v934 = vpop.f32.mrf.mxu0
  %v935 = vadd.f32 %v851, %v934
  %v936 = vpop.f32.mrf.mxu0
  %v937 = vadd.f32 %v853, %v936
  %938 = vmatmul.bf16.gmra.mxu0 %v419
  %v939 = vpop.f32.mrf.mxu0
  %v940 = vadd.f32 %v856, %v939
  %v941 = vpop.f32.mrf.mxu0
  %v942 = vadd.f32 %v858, %v941
  %943 = vdwg.mxu0
  %944 = vmatpush.bf16.msra.mxu0 0
  %945 = vmatpush.bf16.msra.mxu0 0
  %946 = vmatpush.bf16.msra.mxu0 %v615
  %947 = vmatpush.bf16.msra.mxu0 %v614
  %948 = vmatpush.bf16.msra.mxu0 %v613
  %949 = vmatpush.bf16.msra.mxu0 %v612
  %950 = vmatpush.bf16.msra.mxu0 %v611
  %951 = vmatpush.bf16.msra.mxu0 %v610
  %952 = vmatmul.bf16.gmra.mxu0 %v648
  %v953 = vpop.f32.mrf.mxu0
  %v954 = vadd.f32 %v870, %v953
  %v955 = vpop.f32.mrf.mxu0
  %v956 = vadd.f32 %v872, %v955
  %957 = vmatmul.bf16.gmra.mxu0 %v651
  %v958 = vpop.f32.mrf.mxu0
  %v959 = vadd.f32 %v875, %v958
  %v960 = vpop.f32.mrf.mxu0
  %v961 = vadd.f32 %v877, %v960
  %962 = vmatmul.bf16.gmra.mxu0 %v654
  %v963 = vpop.f32.mrf.mxu0
  %v964 = vadd.f32 %v880, %v963
  %v965 = vpop.f32.mrf.mxu0
  %v966 = vadd.f32 %v882, %v965
  %967 = vmatmul.bf16.gmra.mxu0 %v657
  %v968 = vpop.f32.mrf.mxu0
  %v969 = vadd.f32 %v885, %v968
  %v970 = vpop.f32.mrf.mxu0
  %v971 = vadd.f32 %v887, %v970
  %972 = vmatmul.bf16.gmra.mxu0 %v660
  %v973 = vpop.f32.mrf.mxu0
  %v974 = vadd.f32 %v890, %v973
  %v975 = vpop.f32.mrf.mxu0
  %v976 = vadd.f32 %v892, %v975
  %977 = vmatmul.bf16.gmra.mxu0 %v663
  %v978 = vpop.f32.mrf.mxu0
  %v979 = vadd.f32 %v895, %v978
  %v980 = vpop.f32.mrf.mxu0
  %v981 = vadd.f32 %v897, %v980
  %982 = vmatmul.bf16.gmra.mxu0 %v666
  %v983 = vpop.f32.mrf.mxu0
  %v984 = vadd.f32 %v900, %v983
  %v985 = vpop.f32.mrf.mxu0
  %v986 = vadd.f32 %v902, %v985
  %987 = vmatmul.bf16.gmra.mxu0 %v669
  %v988 = vpop.f32.mrf.mxu0
  %v989 = vadd.f32 %v905, %v988
  %v990 = vpop.f32.mrf.mxu0
  %v991 = vadd.f32 %v907, %v990
  %992 = vmatmul.bf16.gmra.mxu0 %v672
  %v993 = vpop.f32.mrf.mxu0
  %v994 = vadd.f32 %v910, %v993
  %v995 = vpop.f32.mrf.mxu0
  %v996 = vadd.f32 %v912, %v995
  %997 = vmatmul.bf16.gmra.mxu0 %v675
  %v998 = vpop.f32.mrf.mxu0
  %v999 = vadd.f32 %v915, %v998
  %v1000 = vpop.f32.mrf.mxu0
  %v1001 = vadd.f32 %v917, %v1000
  %1002 = vmatmul.bf16.gmra.mxu0 %v678
  %v1003 = vpop.f32.mrf.mxu0
  %v1004 = vadd.f32 %v920, %v1003
  %v1005 = vpop.f32.mrf.mxu0
  %v1006 = vadd.f32 %v922, %v1005
  %1007 = vmatmul.bf16.gmra.mxu0 %v681
  %v1008 = vpop.f32.mrf.mxu0
  %v1009 = vadd.f32 %v925, %v1008
  %v1010 = vpop.f32.mrf.mxu0
  %v1011 = vadd.f32 %v927, %v1010
  %1012 = vmatmul.bf16.gmra.mxu0 %v684
  %v1013 = vpop.f32.mrf.mxu0
  %v1014 = vadd.f32 %v930, %v1013
  %v1015 = vpop.f32.mrf.mxu0
  %v1016 = vadd.f32 %v932, %v1015
  %1017 = vmatmul.bf16.gmra.mxu0 %v687
  %v1018 = vpop.f32.mrf.mxu0
  %v1019 = vadd.f32 %v935, %v1018
  %v1020 = vpop.f32.mrf.mxu0
  %v1021 = vadd.f32 %v937, %v1020
  %1022 = vmatmul.bf16.gmra.mxu0 %v690
  %v1023 = vpop.f32.mrf.mxu0
  %v1024 = vadd.f32 %v940, %v1023
  %v1025 = vpop.f32.mrf.mxu0
  %v1026 = vadd.f32 %v942, %v1025
  %1027 = vdwg.mxu0
  %v1028 = vpack.c.bf16 %v956, %v954
  %v1029 = vpack.c.bf16 %v961, %v959
  %v1030 = vpack.c.bf16 %v966, %v964
  %v1031 = vpack.c.bf16 %v971, %v969
  %v1032 = vpack.c.bf16 %v976, %v974
  %v1033 = vpack.c.bf16 %v981, %v979
  %v1034 = vpack.c.bf16 %v986, %v984
  %v1035 = vpack.c.bf16 %v991, %v989
  %v1036 = vpack.c.bf16 %v996, %v994
  %v1037 = vpack.c.bf16 %v1001, %v999
  %v1038 = vpack.c.bf16 %v1006, %v1004
  %v1039 = vpack.c.bf16 %v1011, %v1009
  %v1040 = vpack.c.bf16 %v1016, %v1014
  %v1041 = vpack.c.bf16 %v1021, %v1019
  %v1042 = vpack.c.bf16 %v1026, %v1024
  %v1043 = vld [vmem:[%s2] sm:$0xf]
  %v1044 = vld [vmem:[%s2 + $0x4] sm:$0xf]
  %v1045 = vld [vmem:[%s2 + $0x8] sm:$0xf]
  %v1046 = vld [vmem:[%s2 + $0xc] sm:$0xf]
  %v1047 = vld [vmem:[%s2 + $0x10] sm:$0xf]
  %v1048 = vld [vmem:[%s2 + $0x14] sm:$0xf]
  %v1049 = vld [vmem:[%s2 + $0x18] sm:$0xf]
  %v1050 = vld [vmem:[%s2 + $0x1c] sm:$0xf]
  %v1051 = vld [vmem:[%s2 + $0x20] sm:$0xf]
  %v1052 = vld [vmem:[%s2 + $0x24] sm:$0xf]
  %v1053 = vld [vmem:[%s2 + $0x28] sm:$0xf]
  %v1054 = vld [vmem:[%s2 + $0x2c] sm:$0x1]
  %v1067 = vunpack.c.l.b16 %v1043
  %v1068 = vunpack.c.l.b16 %v1044
  %v1069 = vunpack.c.l.b16 %v1045
  %v1070 = vunpack.c.l.b16 %v1046
  %v1071 = vunpack.c.l.b16 %v1047
  %v1072 = vunpack.c.l.b16 %v1048
  %v1073 = vunpack.c.l.b16 %v1049
  %v1074 = vunpack.c.l.b16 %v1050
  %v1075 = vunpack.c.l.b16 %v1051
  %v1076 = vunpack.c.l.b16 %v1052
  %v1077 = vunpack.c.l.b16 %v1053
  %v1078 = vunpack.c.l.b16 %v1054
  %v1079 = vpack.c.b16 %v1068, %v1067
  %v1080 = vpack.c.b16 %v1070, %v1069
  %v1081 = vpack.c.b16 %v1072, %v1071
  %v1082 = vpack.c.b16 %v1074, %v1073
  %v1083 = vpack.c.b16 %v1076, %v1075
  %v1084 = vpack.c.b16 %v1078, %v1077
  %vm1090 = vcmask 736256
  %v1092 = vsel %vm1090, %v1028, 0
  %v1095 = vsel %vm1090, %v1029, 0
  %v1098 = vsel %vm1090, %v1030, 0
  %v1101 = vsel %vm1090, %v1031, 0
  %v1104 = vsel %vm1090, %v1032, 0
  %v1107 = vsel %vm1090, %v1033, 0
  %v1110 = vsel %vm1090, %v1034, 0
  %v1113 = vsel %vm1090, %v1035, 0
  %v1116 = vsel %vm1090, %v1036, 0
  %v1119 = vsel %vm1090, %v1037, 0
  %v1122 = vsel %vm1090, %v1038, 0
  %v1125 = vsel %vm1090, %v1039, 0
  %v1128 = vsel %vm1090, %v1040, 0
  %v1131 = vsel %vm1090, %v1041, 0
  %v1134 = vsel %vm1090, %v1042, 0
  %vm1136 = vcmask 1044480
  %v1138 = vsel %vm1136, %v1084, 0
  %1140 = vmatpush.bf16.msra.mxu0 0
  %1141 = vmatpush.bf16.msra.mxu0 0
  %1142 = vmatpush.bf16.msra.mxu0 %v1138
  %1143 = vmatpush.bf16.msra.mxu0 %v1083
  %1144 = vmatpush.bf16.msra.mxu0 %v1082
  %1145 = vmatpush.bf16.msra.mxu0 %v1081
  %1146 = vmatpush.bf16.msra.mxu0 %v1080
  %1147 = vmatpush.bf16.msra.mxu0 %v1079
  %1148 = vmatmul.bf16.gmra.mxu0 %v1092
  %v1149 = vpop.f32.mrf.mxu0
  %v1150 = vadd.f32 0.0, %v1149
  %v1151 = vpop.f32.mrf.mxu0
  %v1152 = vadd.f32 0.0, %v1151
  %1153 = vmatmul.bf16.gmra.mxu0 %v1095
  %v1154 = vpop.f32.mrf.mxu0
  %v1155 = vadd.f32 0.0, %v1154
  %v1156 = vpop.f32.mrf.mxu0
  %v1157 = vadd.f32 0.0, %v1156
  %1158 = vmatmul.bf16.gmra.mxu0 %v1098
  %v1159 = vpop.f32.mrf.mxu0
  %v1160 = vadd.f32 0.0, %v1159
  %v1161 = vpop.f32.mrf.mxu0
  %v1162 = vadd.f32 0.0, %v1161
  %1163 = vmatmul.bf16.gmra.mxu0 %v1101
  %v1164 = vpop.f32.mrf.mxu0
  %v1165 = vadd.f32 0.0, %v1164
  %v1166 = vpop.f32.mrf.mxu0
  %v1167 = vadd.f32 0.0, %v1166
  %1168 = vmatmul.bf16.gmra.mxu0 %v1104
  %v1169 = vpop.f32.mrf.mxu0
  %v1170 = vadd.f32 0.0, %v1169
  %v1171 = vpop.f32.mrf.mxu0
  %v1172 = vadd.f32 0.0, %v1171
  %1173 = vmatmul.bf16.gmra.mxu0 %v1107
  %v1174 = vpop.f32.mrf.mxu0
  %v1175 = vadd.f32 0.0, %v1174
  %v1176 = vpop.f32.mrf.mxu0
  %v1177 = vadd.f32 0.0, %v1176
  %1178 = vmatmul.bf16.gmra.mxu0 %v1110
  %v1179 = vpop.f32.mrf.mxu0
  %v1180 = vadd.f32 0.0, %v1179
  %v1181 = vpop.f32.mrf.mxu0
  %v1182 = vadd.f32 0.0, %v1181
  %1183 = vmatmul.bf16.gmra.mxu0 %v1113
  %v1184 = vpop.f32.mrf.mxu0
  %v1185 = vadd.f32 0.0, %v1184
  %v1186 = vpop.f32.mrf.mxu0
  %v1187 = vadd.f32 0.0, %v1186
  %1188 = vmatmul.bf16.gmra.mxu0 %v1116
  %v1189 = vpop.f32.mrf.mxu0
  %v1190 = vadd.f32 0.0, %v1189
  %v1191 = vpop.f32.mrf.mxu0
  %v1192 = vadd.f32 0.0, %v1191
  %1193 = vmatmul.bf16.gmra.mxu0 %v1119
  %v1194 = vpop.f32.mrf.mxu0
  %v1195 = vadd.f32 0.0, %v1194
  %v1196 = vpop.f32.mrf.mxu0
  %v1197 = vadd.f32 0.0, %v1196
  %1198 = vmatmul.bf16.gmra.mxu0 %v1122
  %v1199 = vpop.f32.mrf.mxu0
  %v1200 = vadd.f32 0.0, %v1199
  %v1201 = vpop.f32.mrf.mxu0
  %v1202 = vadd.f32 0.0, %v1201
  %1203 = vmatmul.bf16.gmra.mxu0 %v1125
  %v1204 = vpop.f32.mrf.mxu0
  %v1205 = vadd.f32 0.0, %v1204
  %v1206 = vpop.f32.mrf.mxu0
  %v1207 = vadd.f32 0.0, %v1206
  %1208 = vmatmul.bf16.gmra.mxu0 %v1128
  %v1209 = vpop.f32.mrf.mxu0
  %v1210 = vadd.f32 0.0, %v1209
  %v1211 = vpop.f32.mrf.mxu0
  %v1212 = vadd.f32 0.0, %v1211
  %1213 = vmatmul.bf16.gmra.mxu0 %v1131
  %v1214 = vpop.f32.mrf.mxu0
  %v1215 = vadd.f32 0.0, %v1214
  %v1216 = vpop.f32.mrf.mxu0
  %v1217 = vadd.f32 0.0, %v1216
  %1218 = vmatmul.bf16.gmra.mxu0 %v1134
  %v1219 = vpop.f32.mrf.mxu0
  %v1220 = vadd.f32 0.0, %v1219
  %v1221 = vpop.f32.mrf.mxu0
  %v1222 = vadd.f32 0.0, %v1221
  %1223 = vdwg.mxu0
  %v1225 = vperm.slane %v120, 0
  %v1227 = vadd.f32 %v1225, %v1150
  %v1228 = vadd.f32 %v1225, %v1152
  %v1229 = vadd.f32 %v1225, %v1155
  %v1230 = vadd.f32 %v1225, %v1157
  %v1231 = vadd.f32 %v1225, %v1160
  %v1232 = vadd.f32 %v1225, %v1162
  %v1233 = vadd.f32 %v1225, %v1165
  %v1234 = vadd.f32 %v1225, %v1167
  %v1235 = vadd.f32 %v1225, %v1170
  %v1236 = vadd.f32 %v1225, %v1172
  %v1237 = vadd.f32 %v1225, %v1175
  %v1238 = vadd.f32 %v1225, %v1177
  %v1239 = vadd.f32 %v1225, %v1180
  %v1240 = vadd.f32 %v1225, %v1182
  %v1241 = vadd.f32 %v1225, %v1185
  %v1242 = vadd.f32 %v1225, %v1187
  %v1243 = vadd.f32 %v1225, %v1190
  %v1244 = vadd.f32 %v1225, %v1192
  %v1245 = vadd.f32 %v1225, %v1195
  %v1246 = vadd.f32 %v1225, %v1197
  %v1247 = vadd.f32 %v1225, %v1200
  %v1248 = vadd.f32 %v1225, %v1202
  %v1249 = vadd.f32 %v1225, %v1205
  %v1250 = vadd.f32 %v1225, %v1207
  %v1251 = vadd.f32 %v1225, %v1210
  %v1252 = vadd.f32 %v1225, %v1212
  %v1253 = vadd.f32 %v1225, %v1215
  %v1254 = vadd.f32 %v1225, %v1217
  %v1255 = vadd.f32 %v1225, %v1220
  %v1256 = vadd.f32 %v1225, %v1222
  %s1257 = scalar_lea.vmem %s1, 480
  %v1258 = vld [vmem:[%s1257] sm:$0xff]
  %v1259 = vld [vmem:[%s1257 + $0x8] sm:$0xff]
  %v1260 = vld [vmem:[%s1257 + $0x10] sm:$0xff]
  %v1261 = vld [vmem:[%s1257 + $0x18] sm:$0xff]
  %v1262 = vld [vmem:[%s1257 + $0x20] sm:$0xff]
  %v1263 = vld [vmem:[%s1257 + $0x28] sm:$0xff]
  %v1264 = vld [vmem:[%s1257 + $0x30] sm:$0xff]
  %v1265 = vld [vmem:[%s1257 + $0x38] sm:$0xff]
  %v1266 = vld [vmem:[%s1257 + $0x40] sm:$0xff]
  %v1267 = vld [vmem:[%s1257 + $0x48] sm:$0xff]
  %v1268 = vld [vmem:[%s1257 + $0x50] sm:$0xff]
  %v1269 = vld [vmem:[%s1257 + $0x58] sm:$0xff]
  %v1270 = vld [vmem:[%s1257 + $0x60] sm:$0xff]
  %v1271 = vld [vmem:[%s1257 + $0x68] sm:$0xff]
  %v1272 = vld [vmem:[%s1257 + $0x70] sm:$0xff]
  %v1273 = vld [vmem:[%s1257 + $0x78] sm:$0xff]
  %v1274 = vld [vmem:[%s1257 + $0x80] sm:$0xff]
  %v1275 = vld [vmem:[%s1257 + $0x88] sm:$0xff]
  %v1276 = vld [vmem:[%s1257 + $0x90] sm:$0xff]
  %v1277 = vld [vmem:[%s1257 + $0x98] sm:$0xff]
  %v1278 = vld [vmem:[%s1257 + $0xa0] sm:$0xff]
  %v1279 = vld [vmem:[%s1257 + $0xa8] sm:$0xff]
  %v1280 = vld [vmem:[%s1257 + $0xb0] sm:$0xff]
  %v1281 = vld [vmem:[%s1257 + $0xb8] sm:$0xff]
  %v1282 = vld [vmem:[%s1257 + $0xc0] sm:$0xff]
  %v1283 = vld [vmem:[%s1257 + $0xc8] sm:$0xff]
  %v1284 = vld [vmem:[%s1257 + $0xd0] sm:$0xff]
  %v1285 = vld [vmem:[%s1257 + $0xd8] sm:$0xff]
  %v1286 = vld [vmem:[%s1257 + $0xe0] sm:$0xff]
  %v1287 = vld [vmem:[%s1257 + $0xe8] sm:$0xff]
  %v1288 = vld [vmem:[%s1257 + $0xf0] sm:$0xff]
  %v1289 = vld [vmem:[%s1257 + $0xf8] sm:$0xff]
  %v1290 = vld [vmem:[%s1257 + $0x100] sm:$0xff]
  %v1291 = vld [vmem:[%s1257 + $0x108] sm:$0xff]
  %v1292 = vld [vmem:[%s1257 + $0x110] sm:$0xff]
  %v1293 = vld [vmem:[%s1257 + $0x118] sm:$0xff]
  %v1294 = vld [vmem:[%s1257 + $0x120] sm:$0xff]
  %v1295 = vld [vmem:[%s1257 + $0x128] sm:$0xff]
  %v1296 = vld [vmem:[%s1257 + $0x130] sm:$0xff]
  %v1297 = vld [vmem:[%s1257 + $0x138] sm:$0xff]
  %v1298 = vld [vmem:[%s1257 + $0x140] sm:$0xff]
  %v1299 = vld [vmem:[%s1257 + $0x148] sm:$0xff]
  %v1300 = vld [vmem:[%s1257 + $0x150] sm:$0xff]
  %v1301 = vld [vmem:[%s1257 + $0x158] sm:$0xff]
  %v1302 = vld [vmem:[%s1257 + $0x160] sm:$0xff]
  %v1303 = vld [vmem:[%s1257 + $0x168] sm:$0xff]
  %v1304 = vld [vmem:[%s1257 + $0x170] sm:$0xff]
  %v1305 = vld [vmem:[%s1257 + $0x178] sm:$0xff]
  %v1306 = vld [vmem:[%s1257 + $0x180] sm:$0xff]
  %v1307 = vld [vmem:[%s1257 + $0x188] sm:$0xff]
  %v1308 = vld [vmem:[%s1257 + $0x190] sm:$0xff]
  %v1309 = vld [vmem:[%s1257 + $0x198] sm:$0xff]
  %v1310 = vld [vmem:[%s1257 + $0x1a0] sm:$0xff]
  %v1311 = vld [vmem:[%s1257 + $0x1a8] sm:$0xff]
  %v1312 = vld [vmem:[%s1257 + $0x1b0] sm:$0xff]
  %v1313 = vld [vmem:[%s1257 + $0x1b8] sm:$0xff]
  %v1314 = vld [vmem:[%s1257 + $0x1c0] sm:$0xff]
  %v1315 = vld [vmem:[%s1257 + $0x1c8] sm:$0xff]
  %v1316 = vld [vmem:[%s1257 + $0x1d0] sm:$0xff]
  %v1317 = vld [vmem:[%s1257 + $0x1d8] sm:$0xff]
  %v1378 = vunpack.c.l.b16 %v1258
  %v1379 = vunpack.c.h.b16 %v1258
  %v1380 = vunpack.c.l.b16 %v1259
  %v1381 = vunpack.c.h.b16 %v1259
  %v1382 = vunpack.c.l.b16 %v1260
  %v1383 = vunpack.c.h.b16 %v1260
  %v1384 = vunpack.c.l.b16 %v1261
  %v1385 = vunpack.c.h.b16 %v1261
  %v1386 = vunpack.c.l.b16 %v1262
  %v1387 = vunpack.c.h.b16 %v1262
  %v1388 = vunpack.c.l.b16 %v1263
  %v1389 = vunpack.c.h.b16 %v1263
  %v1390 = vunpack.c.l.b16 %v1264
  %v1391 = vunpack.c.h.b16 %v1264
  %v1392 = vunpack.c.l.b16 %v1265
  %v1393 = vunpack.c.h.b16 %v1265
  %v1394 = vunpack.c.l.b16 %v1266
  %v1395 = vunpack.c.h.b16 %v1266
  %v1396 = vunpack.c.l.b16 %v1267
  %v1397 = vunpack.c.h.b16 %v1267
  %v1398 = vunpack.c.l.b16 %v1268
  %v1399 = vunpack.c.h.b16 %v1268
  %v1400 = vunpack.c.l.b16 %v1269
  %v1401 = vunpack.c.h.b16 %v1269
  %v1402 = vunpack.c.l.b16 %v1270
  %v1403 = vunpack.c.h.b16 %v1270
  %v1404 = vunpack.c.l.b16 %v1271
  %v1405 = vunpack.c.h.b16 %v1271
  %v1406 = vunpack.c.l.b16 %v1272
  %v1407 = vunpack.c.h.b16 %v1272
  %v1408 = vunpack.c.l.b16 %v1273
  %v1409 = vunpack.c.h.b16 %v1273
  %v1410 = vunpack.c.l.b16 %v1274
  %v1411 = vunpack.c.h.b16 %v1274
  %v1412 = vunpack.c.l.b16 %v1275
  %v1413 = vunpack.c.h.b16 %v1275
  %v1414 = vunpack.c.l.b16 %v1276
  %v1415 = vunpack.c.h.b16 %v1276
  %v1416 = vunpack.c.l.b16 %v1277
  %v1417 = vunpack.c.h.b16 %v1277
  %v1418 = vunpack.c.l.b16 %v1278
  %v1419 = vunpack.c.h.b16 %v1278
  %v1420 = vunpack.c.l.b16 %v1279
  %v1421 = vunpack.c.h.b16 %v1279
  %v1422 = vunpack.c.l.b16 %v1280
  %v1423 = vunpack.c.h.b16 %v1280
  %v1424 = vunpack.c.l.b16 %v1281
  %v1425 = vunpack.c.h.b16 %v1281
  %v1426 = vunpack.c.l.b16 %v1282
  %v1427 = vunpack.c.h.b16 %v1282
  %v1428 = vunpack.c.l.b16 %v1283
  %v1429 = vunpack.c.h.b16 %v1283
  %v1430 = vunpack.c.l.b16 %v1284
  %v1431 = vunpack.c.h.b16 %v1284
  %v1432 = vunpack.c.l.b16 %v1285
  %v1433 = vunpack.c.h.b16 %v1285
  %v1434 = vunpack.c.l.b16 %v1286
  %v1435 = vunpack.c.h.b16 %v1286
  %v1436 = vunpack.c.l.b16 %v1287
  %v1437 = vunpack.c.h.b16 %v1287
  %v1438 = vunpack.c.l.b16 %v1288
  %v1439 = vunpack.c.h.b16 %v1288
  %v1440 = vunpack.c.l.b16 %v1289
  %v1441 = vunpack.c.h.b16 %v1289
  %v1442 = vunpack.c.l.b16 %v1290
  %v1443 = vunpack.c.h.b16 %v1290
  %v1444 = vunpack.c.l.b16 %v1291
  %v1445 = vunpack.c.h.b16 %v1291
  %v1446 = vunpack.c.l.b16 %v1292
  %v1447 = vunpack.c.h.b16 %v1292
  %v1448 = vunpack.c.l.b16 %v1293
  %v1449 = vunpack.c.h.b16 %v1293
  %v1450 = vunpack.c.l.b16 %v1294
  %v1451 = vunpack.c.h.b16 %v1294
  %v1452 = vunpack.c.l.b16 %v1295
  %v1453 = vunpack.c.h.b16 %v1295
  %v1454 = vunpack.c.l.b16 %v1296
  %v1455 = vunpack.c.h.b16 %v1296
  %v1456 = vunpack.c.l.b16 %v1297
  %v1457 = vunpack.c.h.b16 %v1297
  %v1458 = vunpack.c.l.b16 %v1298
  %v1459 = vunpack.c.h.b16 %v1298
  %v1460 = vunpack.c.l.b16 %v1299
  %v1461 = vunpack.c.h.b16 %v1299
  %v1462 = vunpack.c.l.b16 %v1300
  %v1463 = vunpack.c.h.b16 %v1300
  %v1464 = vunpack.c.l.b16 %v1301
  %v1465 = vunpack.c.h.b16 %v1301
  %v1466 = vunpack.c.l.b16 %v1302
  %v1467 = vunpack.c.h.b16 %v1302
  %v1468 = vunpack.c.l.b16 %v1303
  %v1469 = vunpack.c.h.b16 %v1303
  %v1470 = vunpack.c.l.b16 %v1304
  %v1471 = vunpack.c.h.b16 %v1304
  %v1472 = vunpack.c.l.b16 %v1305
  %v1473 = vunpack.c.h.b16 %v1305
  %v1474 = vunpack.c.l.b16 %v1306
  %v1475 = vunpack.c.h.b16 %v1306
  %v1476 = vunpack.c.l.b16 %v1307
  %v1477 = vunpack.c.h.b16 %v1307
  %v1478 = vunpack.c.l.b16 %v1308
  %v1479 = vunpack.c.h.b16 %v1308
  %v1480 = vunpack.c.l.b16 %v1309
  %v1481 = vunpack.c.h.b16 %v1309
  %v1482 = vunpack.c.l.b16 %v1310
  %v1483 = vunpack.c.h.b16 %v1310
  %v1484 = vunpack.c.l.b16 %v1311
  %v1485 = vunpack.c.h.b16 %v1311
  %v1486 = vunpack.c.l.b16 %v1312
  %v1487 = vunpack.c.h.b16 %v1312
  %v1488 = vunpack.c.l.b16 %v1313
  %v1489 = vunpack.c.h.b16 %v1313
  %v1490 = vunpack.c.l.b16 %v1314
  %v1491 = vunpack.c.h.b16 %v1314
  %v1492 = vunpack.c.l.b16 %v1315
  %v1493 = vunpack.c.h.b16 %v1315
  %v1494 = vunpack.c.l.b16 %v1316
  %v1495 = vunpack.c.h.b16 %v1316
  %v1496 = vunpack.c.l.b16 %v1317
  %v1497 = vunpack.c.h.b16 %v1317
  %v1498 = vpack.c.b16 %v1382, %v1378
  %v1499 = vpack.c.b16 %v1383, %v1379
  %v1500 = vpack.c.b16 %v1384, %v1380
  %v1501 = vpack.c.b16 %v1385, %v1381
  %v1502 = vpack.c.b16 %v1390, %v1386
  %v1503 = vpack.c.b16 %v1391, %v1387
  %v1504 = vpack.c.b16 %v1392, %v1388
  %v1505 = vpack.c.b16 %v1393, %v1389
  %v1506 = vpack.c.b16 %v1398, %v1394
  %v1507 = vpack.c.b16 %v1399, %v1395
  %v1508 = vpack.c.b16 %v1400, %v1396
  %v1509 = vpack.c.b16 %v1401, %v1397
  %v1510 = vpack.c.b16 %v1406, %v1402
  %v1511 = vpack.c.b16 %v1407, %v1403
  %v1512 = vpack.c.b16 %v1408, %v1404
  %v1513 = vpack.c.b16 %v1409, %v1405
  %v1514 = vpack.c.b16 %v1414, %v1410
  %v1515 = vpack.c.b16 %v1415, %v1411
  %v1516 = vpack.c.b16 %v1416, %v1412
  %v1517 = vpack.c.b16 %v1417, %v1413
  %v1518 = vpack.c.b16 %v1422, %v1418
  %v1519 = vpack.c.b16 %v1423, %v1419
  %v1520 = vpack.c.b16 %v1424, %v1420
  %v1521 = vpack.c.b16 %v1425, %v1421
  %v1522 = vpack.c.b16 %v1430, %v1426
  %v1523 = vpack.c.b16 %v1431, %v1427
  %v1524 = vpack.c.b16 %v1432, %v1428
  %v1525 = vpack.c.b16 %v1433, %v1429
  %v1526 = vpack.c.b16 %v1438, %v1434
  %v1527 = vpack.c.b16 %v1439, %v1435
  %v1528 = vpack.c.b16 %v1440, %v1436
  %v1529 = vpack.c.b16 %v1441, %v1437
  %v1530 = vpack.c.b16 %v1446, %v1442
  %v1531 = vpack.c.b16 %v1447, %v1443
  %v1532 = vpack.c.b16 %v1448, %v1444
  %v1533 = vpack.c.b16 %v1449, %v1445
  %v1534 = vpack.c.b16 %v1454, %v1450
  %v1535 = vpack.c.b16 %v1455, %v1451
  %v1536 = vpack.c.b16 %v1456, %v1452
  %v1537 = vpack.c.b16 %v1457, %v1453
  %v1538 = vpack.c.b16 %v1462, %v1458
  %v1539 = vpack.c.b16 %v1463, %v1459
  %v1540 = vpack.c.b16 %v1464, %v1460
  %v1541 = vpack.c.b16 %v1465, %v1461
  %v1542 = vpack.c.b16 %v1470, %v1466
  %v1543 = vpack.c.b16 %v1471, %v1467
  %v1544 = vpack.c.b16 %v1472, %v1468
  %v1545 = vpack.c.b16 %v1473, %v1469
  %v1546 = vpack.c.b16 %v1478, %v1474
  %v1547 = vpack.c.b16 %v1479, %v1475
  %v1548 = vpack.c.b16 %v1480, %v1476
  %v1549 = vpack.c.b16 %v1481, %v1477
  %v1550 = vpack.c.b16 %v1486, %v1482
  %v1551 = vpack.c.b16 %v1487, %v1483
  %v1552 = vpack.c.b16 %v1488, %v1484
  %v1553 = vpack.c.b16 %v1489, %v1485
  %v1554 = vpack.c.b16 %v1494, %v1490
  %v1555 = vpack.c.b16 %v1495, %v1491
  %v1556 = vpack.c.b16 %v1496, %v1492
  %v1557 = vpack.c.b16 %v1497, %v1493
  %v1604 = vsel %vm646, %v1501, 0
  %v1607 = vsel %vm646, %v1505, 0
  %v1610 = vsel %vm646, %v1509, 0
  %v1613 = vsel %vm646, %v1513, 0
  %v1616 = vsel %vm646, %v1517, 0
  %v1619 = vsel %vm646, %v1521, 0
  %v1622 = vsel %vm646, %v1525, 0
  %v1625 = vsel %vm646, %v1529, 0
  %v1628 = vsel %vm646, %v1533, 0
  %v1631 = vsel %vm646, %v1537, 0
  %v1634 = vsel %vm646, %v1541, 0
  %v1637 = vsel %vm646, %v1545, 0
  %v1640 = vsel %vm646, %v1549, 0
  %v1643 = vsel %vm646, %v1553, 0
  %v1646 = vsel %vm646, %v1557, 0
  %1648 = vmatpush.bf16.msra.mxu0 %v593
  %1649 = vmatpush.bf16.msra.mxu0 %v592
  %1650 = vmatpush.bf16.msra.mxu0 %v591
  %1651 = vmatpush.bf16.msra.mxu0 %v590
  %1652 = vmatpush.bf16.msra.mxu0 %v589
  %1653 = vmatpush.bf16.msra.mxu0 %v588
  %1654 = vmatpush.bf16.msra.mxu0 %v587
  %1655 = vmatpush.bf16.msra.mxu0 %v586
  %1656 = vmatmul.bf16.gmra.mxu0 %v1498
  %v1657 = vpop.f32.mrf.mxu0
  %v1658 = vadd.f32 0.0, %v1657
  %v1659 = vpop.f32.mrf.mxu0
  %v1660 = vadd.f32 0.0, %v1659
  %1661 = vmatmul.bf16.gmra.mxu0 %v1502
  %v1662 = vpop.f32.mrf.mxu0
  %v1663 = vadd.f32 0.0, %v1662
  %v1664 = vpop.f32.mrf.mxu0
  %v1665 = vadd.f32 0.0, %v1664
  %1666 = vmatmul.bf16.gmra.mxu0 %v1506
  %v1667 = vpop.f32.mrf.mxu0
  %v1668 = vadd.f32 0.0, %v1667
  %v1669 = vpop.f32.mrf.mxu0
  %v1670 = vadd.f32 0.0, %v1669
  %1671 = vmatmul.bf16.gmra.mxu0 %v1510
  %v1672 = vpop.f32.mrf.mxu0
  %v1673 = vadd.f32 0.0, %v1672
  %v1674 = vpop.f32.mrf.mxu0
  %v1675 = vadd.f32 0.0, %v1674
  %1676 = vmatmul.bf16.gmra.mxu0 %v1514
  %v1677 = vpop.f32.mrf.mxu0
  %v1678 = vadd.f32 0.0, %v1677
  %v1679 = vpop.f32.mrf.mxu0
  %v1680 = vadd.f32 0.0, %v1679
  %1681 = vmatmul.bf16.gmra.mxu0 %v1518
  %v1682 = vpop.f32.mrf.mxu0
  %v1683 = vadd.f32 0.0, %v1682
  %v1684 = vpop.f32.mrf.mxu0
  %v1685 = vadd.f32 0.0, %v1684
  %1686 = vmatmul.bf16.gmra.mxu0 %v1522
  %v1687 = vpop.f32.mrf.mxu0
  %v1688 = vadd.f32 0.0, %v1687
  %v1689 = vpop.f32.mrf.mxu0
  %v1690 = vadd.f32 0.0, %v1689
  %1691 = vmatmul.bf16.gmra.mxu0 %v1526
  %v1692 = vpop.f32.mrf.mxu0
  %v1693 = vadd.f32 0.0, %v1692
  %v1694 = vpop.f32.mrf.mxu0
  %v1695 = vadd.f32 0.0, %v1694
  %1696 = vmatmul.bf16.gmra.mxu0 %v1530
  %v1697 = vpop.f32.mrf.mxu0
  %v1698 = vadd.f32 0.0, %v1697
  %v1699 = vpop.f32.mrf.mxu0
  %v1700 = vadd.f32 0.0, %v1699
  %1701 = vmatmul.bf16.gmra.mxu0 %v1534
  %v1702 = vpop.f32.mrf.mxu0
  %v1703 = vadd.f32 0.0, %v1702
  %v1704 = vpop.f32.mrf.mxu0
  %v1705 = vadd.f32 0.0, %v1704
  %1706 = vmatmul.bf16.gmra.mxu0 %v1538
  %v1707 = vpop.f32.mrf.mxu0
  %v1708 = vadd.f32 0.0, %v1707
  %v1709 = vpop.f32.mrf.mxu0
  %v1710 = vadd.f32 0.0, %v1709
  %1711 = vmatmul.bf16.gmra.mxu0 %v1542
  %v1712 = vpop.f32.mrf.mxu0
  %v1713 = vadd.f32 0.0, %v1712
  %v1714 = vpop.f32.mrf.mxu0
  %v1715 = vadd.f32 0.0, %v1714
  %1716 = vmatmul.bf16.gmra.mxu0 %v1546
  %v1717 = vpop.f32.mrf.mxu0
  %v1718 = vadd.f32 0.0, %v1717
  %v1719 = vpop.f32.mrf.mxu0
  %v1720 = vadd.f32 0.0, %v1719
  %1721 = vmatmul.bf16.gmra.mxu0 %v1550
  %v1722 = vpop.f32.mrf.mxu0
  %v1723 = vadd.f32 0.0, %v1722
  %v1724 = vpop.f32.mrf.mxu0
  %v1725 = vadd.f32 0.0, %v1724
  %1726 = vmatmul.bf16.gmra.mxu0 %v1554
  %v1727 = vpop.f32.mrf.mxu0
  %v1728 = vadd.f32 0.0, %v1727
  %v1729 = vpop.f32.mrf.mxu0
  %v1730 = vadd.f32 0.0, %v1729
  %1731 = vdwg.mxu0
  %1732 = vmatpush.bf16.msra.mxu0 %v601
  %1733 = vmatpush.bf16.msra.mxu0 %v600
  %1734 = vmatpush.bf16.msra.mxu0 %v599
  %1735 = vmatpush.bf16.msra.mxu0 %v598
  %1736 = vmatpush.bf16.msra.mxu0 %v597
  %1737 = vmatpush.bf16.msra.mxu0 %v596
  %1738 = vmatpush.bf16.msra.mxu0 %v595
  %1739 = vmatpush.bf16.msra.mxu0 %v594
  %1740 = vmatmul.bf16.gmra.mxu0 %v1499
  %v1741 = vpop.f32.mrf.mxu0
  %v1742 = vadd.f32 %v1658, %v1741
  %v1743 = vpop.f32.mrf.mxu0
  %v1744 = vadd.f32 %v1660, %v1743
  %1745 = vmatmul.bf16.gmra.mxu0 %v1503
  %v1746 = vpop.f32.mrf.mxu0
  %v1747 = vadd.f32 %v1663, %v1746
  %v1748 = vpop.f32.mrf.mxu0
  %v1749 = vadd.f32 %v1665, %v1748
  %1750 = vmatmul.bf16.gmra.mxu0 %v1507
  %v1751 = vpop.f32.mrf.mxu0
  %v1752 = vadd.f32 %v1668, %v1751
  %v1753 = vpop.f32.mrf.mxu0
  %v1754 = vadd.f32 %v1670, %v1753
  %1755 = vmatmul.bf16.gmra.mxu0 %v1511
  %v1756 = vpop.f32.mrf.mxu0
  %v1757 = vadd.f32 %v1673, %v1756
  %v1758 = vpop.f32.mrf.mxu0
  %v1759 = vadd.f32 %v1675, %v1758
  %1760 = vmatmul.bf16.gmra.mxu0 %v1515
  %v1761 = vpop.f32.mrf.mxu0
  %v1762 = vadd.f32 %v1678, %v1761
  %v1763 = vpop.f32.mrf.mxu0
  %v1764 = vadd.f32 %v1680, %v1763
  %1765 = vmatmul.bf16.gmra.mxu0 %v1519
  %v1766 = vpop.f32.mrf.mxu0
  %v1767 = vadd.f32 %v1683, %v1766
  %v1768 = vpop.f32.mrf.mxu0
  %v1769 = vadd.f32 %v1685, %v1768
  %1770 = vmatmul.bf16.gmra.mxu0 %v1523
  %v1771 = vpop.f32.mrf.mxu0
  %v1772 = vadd.f32 %v1688, %v1771
  %v1773 = vpop.f32.mrf.mxu0
  %v1774 = vadd.f32 %v1690, %v1773
  %1775 = vmatmul.bf16.gmra.mxu0 %v1527
  %v1776 = vpop.f32.mrf.mxu0
  %v1777 = vadd.f32 %v1693, %v1776
  %v1778 = vpop.f32.mrf.mxu0
  %v1779 = vadd.f32 %v1695, %v1778
  %1780 = vmatmul.bf16.gmra.mxu0 %v1531
  %v1781 = vpop.f32.mrf.mxu0
  %v1782 = vadd.f32 %v1698, %v1781
  %v1783 = vpop.f32.mrf.mxu0
  %v1784 = vadd.f32 %v1700, %v1783
  %1785 = vmatmul.bf16.gmra.mxu0 %v1535
  %v1786 = vpop.f32.mrf.mxu0
  %v1787 = vadd.f32 %v1703, %v1786
  %v1788 = vpop.f32.mrf.mxu0
  %v1789 = vadd.f32 %v1705, %v1788
  %1790 = vmatmul.bf16.gmra.mxu0 %v1539
  %v1791 = vpop.f32.mrf.mxu0
  %v1792 = vadd.f32 %v1708, %v1791
  %v1793 = vpop.f32.mrf.mxu0
  %v1794 = vadd.f32 %v1710, %v1793
  %1795 = vmatmul.bf16.gmra.mxu0 %v1543
  %v1796 = vpop.f32.mrf.mxu0
  %v1797 = vadd.f32 %v1713, %v1796
  %v1798 = vpop.f32.mrf.mxu0
  %v1799 = vadd.f32 %v1715, %v1798
  %1800 = vmatmul.bf16.gmra.mxu0 %v1547
  %v1801 = vpop.f32.mrf.mxu0
  %v1802 = vadd.f32 %v1718, %v1801
  %v1803 = vpop.f32.mrf.mxu0
  %v1804 = vadd.f32 %v1720, %v1803
  %1805 = vmatmul.bf16.gmra.mxu0 %v1551
  %v1806 = vpop.f32.mrf.mxu0
  %v1807 = vadd.f32 %v1723, %v1806
  %v1808 = vpop.f32.mrf.mxu0
  %v1809 = vadd.f32 %v1725, %v1808
  %1810 = vmatmul.bf16.gmra.mxu0 %v1555
  %v1811 = vpop.f32.mrf.mxu0
  %v1812 = vadd.f32 %v1728, %v1811
  %v1813 = vpop.f32.mrf.mxu0
  %v1814 = vadd.f32 %v1730, %v1813
  %1815 = vdwg.mxu0
  %1816 = vmatpush.bf16.msra.mxu0 %v609
  %1817 = vmatpush.bf16.msra.mxu0 %v608
  %1818 = vmatpush.bf16.msra.mxu0 %v607
  %1819 = vmatpush.bf16.msra.mxu0 %v606
  %1820 = vmatpush.bf16.msra.mxu0 %v605
  %1821 = vmatpush.bf16.msra.mxu0 %v604
  %1822 = vmatpush.bf16.msra.mxu0 %v603
  %1823 = vmatpush.bf16.msra.mxu0 %v602
  %1824 = vmatmul.bf16.gmra.mxu0 %v1500
  %v1825 = vpop.f32.mrf.mxu0
  %v1826 = vadd.f32 %v1742, %v1825
  %v1827 = vpop.f32.mrf.mxu0
  %v1828 = vadd.f32 %v1744, %v1827
  %1829 = vmatmul.bf16.gmra.mxu0 %v1504
  %v1830 = vpop.f32.mrf.mxu0
  %v1831 = vadd.f32 %v1747, %v1830
  %v1832 = vpop.f32.mrf.mxu0
  %v1833 = vadd.f32 %v1749, %v1832
  %1834 = vmatmul.bf16.gmra.mxu0 %v1508
  %v1835 = vpop.f32.mrf.mxu0
  %v1836 = vadd.f32 %v1752, %v1835
  %v1837 = vpop.f32.mrf.mxu0
  %v1838 = vadd.f32 %v1754, %v1837
  %1839 = vmatmul.bf16.gmra.mxu0 %v1512
  %v1840 = vpop.f32.mrf.mxu0
  %v1841 = vadd.f32 %v1757, %v1840
  %v1842 = vpop.f32.mrf.mxu0
  %v1843 = vadd.f32 %v1759, %v1842
  %1844 = vmatmul.bf16.gmra.mxu0 %v1516
  %v1845 = vpop.f32.mrf.mxu0
  %v1846 = vadd.f32 %v1762, %v1845
  %v1847 = vpop.f32.mrf.mxu0
  %v1848 = vadd.f32 %v1764, %v1847
  %1849 = vmatmul.bf16.gmra.mxu0 %v1520
  %v1850 = vpop.f32.mrf.mxu0
  %v1851 = vadd.f32 %v1767, %v1850
  %v1852 = vpop.f32.mrf.mxu0
  %v1853 = vadd.f32 %v1769, %v1852
  %1854 = vmatmul.bf16.gmra.mxu0 %v1524
  %v1855 = vpop.f32.mrf.mxu0
  %v1856 = vadd.f32 %v1772, %v1855
  %v1857 = vpop.f32.mrf.mxu0
  %v1858 = vadd.f32 %v1774, %v1857
  %1859 = vmatmul.bf16.gmra.mxu0 %v1528
  %v1860 = vpop.f32.mrf.mxu0
  %v1861 = vadd.f32 %v1777, %v1860
  %v1862 = vpop.f32.mrf.mxu0
  %v1863 = vadd.f32 %v1779, %v1862
  %1864 = vmatmul.bf16.gmra.mxu0 %v1532
  %v1865 = vpop.f32.mrf.mxu0
  %v1866 = vadd.f32 %v1782, %v1865
  %v1867 = vpop.f32.mrf.mxu0
  %v1868 = vadd.f32 %v1784, %v1867
  %1869 = vmatmul.bf16.gmra.mxu0 %v1536
  %v1870 = vpop.f32.mrf.mxu0
  %v1871 = vadd.f32 %v1787, %v1870
  %v1872 = vpop.f32.mrf.mxu0
  %v1873 = vadd.f32 %v1789, %v1872
  %1874 = vmatmul.bf16.gmra.mxu0 %v1540
  %v1875 = vpop.f32.mrf.mxu0
  %v1876 = vadd.f32 %v1792, %v1875
  %v1877 = vpop.f32.mrf.mxu0
  %v1878 = vadd.f32 %v1794, %v1877
  %1879 = vmatmul.bf16.gmra.mxu0 %v1544
  %v1880 = vpop.f32.mrf.mxu0
  %v1881 = vadd.f32 %v1797, %v1880
  %v1882 = vpop.f32.mrf.mxu0
  %v1883 = vadd.f32 %v1799, %v1882
  %1884 = vmatmul.bf16.gmra.mxu0 %v1548
  %v1885 = vpop.f32.mrf.mxu0
  %v1886 = vadd.f32 %v1802, %v1885
  %v1887 = vpop.f32.mrf.mxu0
  %v1888 = vadd.f32 %v1804, %v1887
  %1889 = vmatmul.bf16.gmra.mxu0 %v1552
  %v1890 = vpop.f32.mrf.mxu0
  %v1891 = vadd.f32 %v1807, %v1890
  %v1892 = vpop.f32.mrf.mxu0
  %v1893 = vadd.f32 %v1809, %v1892
  %1894 = vmatmul.bf16.gmra.mxu0 %v1556
  %v1895 = vpop.f32.mrf.mxu0
  %v1896 = vadd.f32 %v1812, %v1895
  %v1897 = vpop.f32.mrf.mxu0
  %v1898 = vadd.f32 %v1814, %v1897
  %1899 = vdwg.mxu0
  %1900 = vmatpush.bf16.msra.mxu0 0
  %1901 = vmatpush.bf16.msra.mxu0 0
  %1902 = vmatpush.bf16.msra.mxu0 %v615
  %1903 = vmatpush.bf16.msra.mxu0 %v614
  %1904 = vmatpush.bf16.msra.mxu0 %v613
  %1905 = vmatpush.bf16.msra.mxu0 %v612
  %1906 = vmatpush.bf16.msra.mxu0 %v611
  %1907 = vmatpush.bf16.msra.mxu0 %v610
  %1908 = vmatmul.bf16.gmra.mxu0 %v1604
  %v1909 = vpop.f32.mrf.mxu0
  %v1910 = vadd.f32 %v1826, %v1909
  %v1911 = vpop.f32.mrf.mxu0
  %v1912 = vadd.f32 %v1828, %v1911
  %1913 = vmatmul.bf16.gmra.mxu0 %v1607
  %v1914 = vpop.f32.mrf.mxu0
  %v1915 = vadd.f32 %v1831, %v1914
  %v1916 = vpop.f32.mrf.mxu0
  %v1917 = vadd.f32 %v1833, %v1916
  %1918 = vmatmul.bf16.gmra.mxu0 %v1610
  %v1919 = vpop.f32.mrf.mxu0
  %v1920 = vadd.f32 %v1836, %v1919
  %v1921 = vpop.f32.mrf.mxu0
  %v1922 = vadd.f32 %v1838, %v1921
  %1923 = vmatmul.bf16.gmra.mxu0 %v1613
  %v1924 = vpop.f32.mrf.mxu0
  %v1925 = vadd.f32 %v1841, %v1924
  %v1926 = vpop.f32.mrf.mxu0
  %v1927 = vadd.f32 %v1843, %v1926
  %1928 = vmatmul.bf16.gmra.mxu0 %v1616
  %v1929 = vpop.f32.mrf.mxu0
  %v1930 = vadd.f32 %v1846, %v1929
  %v1931 = vpop.f32.mrf.mxu0
  %v1932 = vadd.f32 %v1848, %v1931
  %1933 = vmatmul.bf16.gmra.mxu0 %v1619
  %v1934 = vpop.f32.mrf.mxu0
  %v1935 = vadd.f32 %v1851, %v1934
  %v1936 = vpop.f32.mrf.mxu0
  %v1937 = vadd.f32 %v1853, %v1936
  %1938 = vmatmul.bf16.gmra.mxu0 %v1622
  %v1939 = vpop.f32.mrf.mxu0
  %v1940 = vadd.f32 %v1856, %v1939
  %v1941 = vpop.f32.mrf.mxu0
  %v1942 = vadd.f32 %v1858, %v1941
  %1943 = vmatmul.bf16.gmra.mxu0 %v1625
  %v1944 = vpop.f32.mrf.mxu0
  %v1945 = vadd.f32 %v1861, %v1944
  %v1946 = vpop.f32.mrf.mxu0
  %v1947 = vadd.f32 %v1863, %v1946
  %1948 = vmatmul.bf16.gmra.mxu0 %v1628
  %v1949 = vpop.f32.mrf.mxu0
  %v1950 = vadd.f32 %v1866, %v1949
  %v1951 = vpop.f32.mrf.mxu0
  %v1952 = vadd.f32 %v1868, %v1951
  %1953 = vmatmul.bf16.gmra.mxu0 %v1631
  %v1954 = vpop.f32.mrf.mxu0
  %v1955 = vadd.f32 %v1871, %v1954
  %v1956 = vpop.f32.mrf.mxu0
  %v1957 = vadd.f32 %v1873, %v1956
  %1958 = vmatmul.bf16.gmra.mxu0 %v1634
  %v1959 = vpop.f32.mrf.mxu0
  %v1960 = vadd.f32 %v1876, %v1959
  %v1961 = vpop.f32.mrf.mxu0
  %v1962 = vadd.f32 %v1878, %v1961
  %1963 = vmatmul.bf16.gmra.mxu0 %v1637
  %v1964 = vpop.f32.mrf.mxu0
  %v1965 = vadd.f32 %v1881, %v1964
  %v1966 = vpop.f32.mrf.mxu0
  %v1967 = vadd.f32 %v1883, %v1966
  %1968 = vmatmul.bf16.gmra.mxu0 %v1640
  %v1969 = vpop.f32.mrf.mxu0
  %v1970 = vadd.f32 %v1886, %v1969
  %v1971 = vpop.f32.mrf.mxu0
  %v1972 = vadd.f32 %v1888, %v1971
  %1973 = vmatmul.bf16.gmra.mxu0 %v1643
  %v1974 = vpop.f32.mrf.mxu0
  %v1975 = vadd.f32 %v1891, %v1974
  %v1976 = vpop.f32.mrf.mxu0
  %v1977 = vadd.f32 %v1893, %v1976
  %1978 = vmatmul.bf16.gmra.mxu0 %v1646
  %v1979 = vpop.f32.mrf.mxu0
  %v1980 = vadd.f32 %v1896, %v1979
  %v1981 = vpop.f32.mrf.mxu0
  %v1982 = vadd.f32 %v1898, %v1981
  %1983 = vdwg.mxu0
  %v1984 = vpack.c.bf16 %v1912, %v1910
  %v1985 = vpack.c.bf16 %v1917, %v1915
  %v1986 = vpack.c.bf16 %v1922, %v1920
  %v1987 = vpack.c.bf16 %v1927, %v1925
  %v1988 = vpack.c.bf16 %v1932, %v1930
  %v1989 = vpack.c.bf16 %v1937, %v1935
  %v1990 = vpack.c.bf16 %v1942, %v1940
  %v1991 = vpack.c.bf16 %v1947, %v1945
  %v1992 = vpack.c.bf16 %v1952, %v1950
  %v1993 = vpack.c.bf16 %v1957, %v1955
  %v1994 = vpack.c.bf16 %v1962, %v1960
  %v1995 = vpack.c.bf16 %v1967, %v1965
  %v1996 = vpack.c.bf16 %v1972, %v1970
  %v1997 = vpack.c.bf16 %v1977, %v1975
  %v1998 = vpack.c.bf16 %v1982, %v1980
  %s1999 = scalar_lea.vmem %s2, 48
  %v2000 = vld [vmem:[%s1999] sm:$0xf]
  %v2001 = vld [vmem:[%s1999 + $0x4] sm:$0xf]
  %v2002 = vld [vmem:[%s1999 + $0x8] sm:$0xf]
  %v2003 = vld [vmem:[%s1999 + $0xc] sm:$0xf]
  %v2004 = vld [vmem:[%s1999 + $0x10] sm:$0xf]
  %v2005 = vld [vmem:[%s1999 + $0x14] sm:$0xf]
  %v2006 = vld [vmem:[%s1999 + $0x18] sm:$0xf]
  %v2007 = vld [vmem:[%s1999 + $0x1c] sm:$0xf]
  %v2008 = vld [vmem:[%s1999 + $0x20] sm:$0xf]
  %v2009 = vld [vmem:[%s1999 + $0x24] sm:$0xf]
  %v2010 = vld [vmem:[%s1999 + $0x28] sm:$0xf]
  %v2011 = vld [vmem:[%s1999 + $0x2c] sm:$0x1]
  %v2024 = vunpack.c.l.b16 %v2000
  %v2025 = vunpack.c.l.b16 %v2001
  %v2026 = vunpack.c.l.b16 %v2002
  %v2027 = vunpack.c.l.b16 %v2003
  %v2028 = vunpack.c.l.b16 %v2004
  %v2029 = vunpack.c.l.b16 %v2005
  %v2030 = vunpack.c.l.b16 %v2006
  %v2031 = vunpack.c.l.b16 %v2007
  %v2032 = vunpack.c.l.b16 %v2008
  %v2033 = vunpack.c.l.b16 %v2009
  %v2034 = vunpack.c.l.b16 %v2010
  %v2035 = vunpack.c.l.b16 %v2011
  %v2036 = vpack.c.b16 %v2025, %v2024
  %v2037 = vpack.c.b16 %v2027, %v2026
  %v2038 = vpack.c.b16 %v2029, %v2028
  %v2039 = vpack.c.b16 %v2031, %v2030
  %v2040 = vpack.c.b16 %v2033, %v2032
  %v2041 = vpack.c.b16 %v2035, %v2034
  %v2048 = vsel %vm1090, %v1984, 0
  %v2051 = vsel %vm1090, %v1985, 0
  %v2054 = vsel %vm1090, %v1986, 0
  %v2057 = vsel %vm1090, %v1987, 0
  %v2060 = vsel %vm1090, %v1988, 0
  %v2063 = vsel %vm1090, %v1989, 0
  %v2066 = vsel %vm1090, %v1990, 0
  %v2069 = vsel %vm1090, %v1991, 0
  %v2072 = vsel %vm1090, %v1992, 0
  %v2075 = vsel %vm1090, %v1993, 0
  %v2078 = vsel %vm1090, %v1994, 0
  %v2081 = vsel %vm1090, %v1995, 0
  %v2084 = vsel %vm1090, %v1996, 0
  %v2087 = vsel %vm1090, %v1997, 0
  %v2090 = vsel %vm1090, %v1998, 0
  %v2093 = vsel %vm1136, %v2041, 0
  %2095 = vmatpush.bf16.msra.mxu0 0
  %2096 = vmatpush.bf16.msra.mxu0 0
  %2097 = vmatpush.bf16.msra.mxu0 %v2093
  %2098 = vmatpush.bf16.msra.mxu0 %v2040
  %2099 = vmatpush.bf16.msra.mxu0 %v2039
  %2100 = vmatpush.bf16.msra.mxu0 %v2038
  %2101 = vmatpush.bf16.msra.mxu0 %v2037
  %2102 = vmatpush.bf16.msra.mxu0 %v2036
  %2103 = vmatmul.bf16.gmra.mxu0 %v2048
  %v2104 = vpop.f32.mrf.mxu0
  %v2105 = vadd.f32 0.0, %v2104
  %v2106 = vpop.f32.mrf.mxu0
  %v2107 = vadd.f32 0.0, %v2106
  %2108 = vmatmul.bf16.gmra.mxu0 %v2051
  %v2109 = vpop.f32.mrf.mxu0
  %v2110 = vadd.f32 0.0, %v2109
  %v2111 = vpop.f32.mrf.mxu0
  %v2112 = vadd.f32 0.0, %v2111
  %2113 = vmatmul.bf16.gmra.mxu0 %v2054
  %v2114 = vpop.f32.mrf.mxu0
  %v2115 = vadd.f32 0.0, %v2114
  %v2116 = vpop.f32.mrf.mxu0
  %v2117 = vadd.f32 0.0, %v2116
  %2118 = vmatmul.bf16.gmra.mxu0 %v2057
  %v2119 = vpop.f32.mrf.mxu0
  %v2120 = vadd.f32 0.0, %v2119
  %v2121 = vpop.f32.mrf.mxu0
  %v2122 = vadd.f32 0.0, %v2121
  %2123 = vmatmul.bf16.gmra.mxu0 %v2060
  %v2124 = vpop.f32.mrf.mxu0
  %v2125 = vadd.f32 0.0, %v2124
  %v2126 = vpop.f32.mrf.mxu0
  %v2127 = vadd.f32 0.0, %v2126
  %2128 = vmatmul.bf16.gmra.mxu0 %v2063
  %v2129 = vpop.f32.mrf.mxu0
  %v2130 = vadd.f32 0.0, %v2129
  %v2131 = vpop.f32.mrf.mxu0
  %v2132 = vadd.f32 0.0, %v2131
  %2133 = vmatmul.bf16.gmra.mxu0 %v2066
  %v2134 = vpop.f32.mrf.mxu0
  %v2135 = vadd.f32 0.0, %v2134
  %v2136 = vpop.f32.mrf.mxu0
  %v2137 = vadd.f32 0.0, %v2136
  %2138 = vmatmul.bf16.gmra.mxu0 %v2069
  %v2139 = vpop.f32.mrf.mxu0
  %v2140 = vadd.f32 0.0, %v2139
  %v2141 = vpop.f32.mrf.mxu0
  %v2142 = vadd.f32 0.0, %v2141
  %2143 = vmatmul.bf16.gmra.mxu0 %v2072
  %v2144 = vpop.f32.mrf.mxu0
  %v2145 = vadd.f32 0.0, %v2144
  %v2146 = vpop.f32.mrf.mxu0
  %v2147 = vadd.f32 0.0, %v2146
  %2148 = vmatmul.bf16.gmra.mxu0 %v2075
  %v2149 = vpop.f32.mrf.mxu0
  %v2150 = vadd.f32 0.0, %v2149
  %v2151 = vpop.f32.mrf.mxu0
  %v2152 = vadd.f32 0.0, %v2151
  %2153 = vmatmul.bf16.gmra.mxu0 %v2078
  %v2154 = vpop.f32.mrf.mxu0
  %v2155 = vadd.f32 0.0, %v2154
  %v2156 = vpop.f32.mrf.mxu0
  %v2157 = vadd.f32 0.0, %v2156
  %2158 = vmatmul.bf16.gmra.mxu0 %v2081
  %v2159 = vpop.f32.mrf.mxu0
  %v2160 = vadd.f32 0.0, %v2159
  %v2161 = vpop.f32.mrf.mxu0
  %v2162 = vadd.f32 0.0, %v2161
  %2163 = vmatmul.bf16.gmra.mxu0 %v2084
  %v2164 = vpop.f32.mrf.mxu0
  %v2165 = vadd.f32 0.0, %v2164
  %v2166 = vpop.f32.mrf.mxu0
  %v2167 = vadd.f32 0.0, %v2166
  %2168 = vmatmul.bf16.gmra.mxu0 %v2087
  %v2169 = vpop.f32.mrf.mxu0
  %v2170 = vadd.f32 0.0, %v2169
  %v2171 = vpop.f32.mrf.mxu0
  %v2172 = vadd.f32 0.0, %v2171
  %2173 = vmatmul.bf16.gmra.mxu0 %v2090
  %v2174 = vpop.f32.mrf.mxu0
  %v2175 = vadd.f32 0.0, %v2174
  %v2176 = vpop.f32.mrf.mxu0
  %v2177 = vadd.f32 0.0, %v2176
  %2178 = vdwg.mxu0
  %v2179 = vadd.f32 %v1227, %v2105
  %v2180 = vadd.f32 %v1228, %v2107
  %v2181 = vadd.f32 %v1229, %v2110
  %v2182 = vadd.f32 %v1230, %v2112
  %v2183 = vadd.f32 %v1231, %v2115
  %v2184 = vadd.f32 %v1232, %v2117
  %v2185 = vadd.f32 %v1233, %v2120
  %v2186 = vadd.f32 %v1234, %v2122
  %v2187 = vadd.f32 %v1235, %v2125
  %v2188 = vadd.f32 %v1236, %v2127
  %v2189 = vadd.f32 %v1237, %v2130
  %v2190 = vadd.f32 %v1238, %v2132
  %v2191 = vadd.f32 %v1239, %v2135
  %v2192 = vadd.f32 %v1240, %v2137
  %v2193 = vadd.f32 %v1241, %v2140
  %v2194 = vadd.f32 %v1242, %v2142
  %v2195 = vadd.f32 %v1243, %v2145
  %v2196 = vadd.f32 %v1244, %v2147
  %v2197 = vadd.f32 %v1245, %v2150
  %v2198 = vadd.f32 %v1246, %v2152
  %v2199 = vadd.f32 %v1247, %v2155
  %v2200 = vadd.f32 %v1248, %v2157
  %v2201 = vadd.f32 %v1249, %v2160
  %v2202 = vadd.f32 %v1250, %v2162
  %v2203 = vadd.f32 %v1251, %v2165
  %v2204 = vadd.f32 %v1252, %v2167
  %v2205 = vadd.f32 %v1253, %v2170
  %v2206 = vadd.f32 %v1254, %v2172
  %v2207 = vadd.f32 %v1255, %v2175
  %v2208 = vadd.f32 %v1256, %v2177
  %v2209 = vpack.c.bf16 %v2180, %v2179
  %v2210 = vpack.c.bf16 %v2182, %v2181
  %v2211 = vpack.c.bf16 %v2184, %v2183
  %v2212 = vpack.c.bf16 %v2186, %v2185
  %v2213 = vpack.c.bf16 %v2188, %v2187
  %v2214 = vpack.c.bf16 %v2190, %v2189
  %v2215 = vpack.c.bf16 %v2192, %v2191
  %v2216 = vpack.c.bf16 %v2194, %v2193
  %v2217 = vpack.c.bf16 %v2196, %v2195
  %v2218 = vpack.c.bf16 %v2198, %v2197
  %v2219 = vpack.c.bf16 %v2200, %v2199
  %v2220 = vpack.c.bf16 %v2202, %v2201
  %v2221 = vpack.c.bf16 %v2204, %v2203
  %v2222 = vpack.c.bf16 %v2206, %v2205
  %v2223 = vpack.c.bf16 %v2208, %v2207
  %v2224 = vld [vmem:[%s4] sm:$0xff]
  %v2225 = vld [vmem:[%s4 + $0x8] sm:$0xff]
  %v2226 = vld [vmem:[%s4 + $0x10] sm:$0xff]
  %v2227 = vld [vmem:[%s4 + $0x18] sm:$0xff]
  %v2228 = vld [vmem:[%s4 + $0x20] sm:$0xff]
  %v2229 = vld [vmem:[%s4 + $0x28] sm:$0xff]
  %v2230 = vld [vmem:[%s4 + $0x30] sm:$0xff]
  %v2231 = vld [vmem:[%s4 + $0x38] sm:$0xff]
  %v2232 = vld [vmem:[%s4 + $0x40] sm:$0xff]
  %v2233 = vld [vmem:[%s4 + $0x48] sm:$0xff]
  %v2234 = vld [vmem:[%s4 + $0x50] sm:$0xff]
  %v2235 = vld [vmem:[%s4 + $0x58] sm:$0xff]
  %v2236 = vld [vmem:[%s4 + $0x60] sm:$0xff]
  %v2237 = vld [vmem:[%s4 + $0x68] sm:$0xff]
  %v2238 = vld [vmem:[%s4 + $0x70] sm:$0xff]
  %v2239 = vld [vmem:[%s4 + $0x78] sm:$0xff]
  %v2256 = vunpack.c.l.b16 %v2224
  %v2257 = vunpack.c.h.b16 %v2224
  %v2258 = vunpack.c.l.b16 %v2225
  %v2259 = vunpack.c.h.b16 %v2225
  %v2260 = vunpack.c.l.b16 %v2226
  %v2261 = vunpack.c.h.b16 %v2226
  %v2262 = vunpack.c.l.b16 %v2227
  %v2263 = vunpack.c.h.b16 %v2227
  %v2264 = vunpack.c.l.b16 %v2228
  %v2265 = vunpack.c.h.b16 %v2228
  %v2266 = vunpack.c.l.b16 %v2229
  %v2267 = vunpack.c.h.b16 %v2229
  %v2268 = vunpack.c.l.b16 %v2230
  %v2269 = vunpack.c.h.b16 %v2230
  %v2270 = vunpack.c.l.b16 %v2231
  %v2271 = vunpack.c.h.b16 %v2231
  %v2272 = vunpack.c.l.b16 %v2232
  %v2273 = vunpack.c.h.b16 %v2232
  %v2274 = vunpack.c.l.b16 %v2233
  %v2275 = vunpack.c.h.b16 %v2233
  %v2276 = vunpack.c.l.b16 %v2234
  %v2277 = vunpack.c.h.b16 %v2234
  %v2278 = vunpack.c.l.b16 %v2235
  %v2279 = vunpack.c.h.b16 %v2235
  %v2280 = vunpack.c.l.b16 %v2236
  %v2281 = vunpack.c.h.b16 %v2236
  %v2282 = vunpack.c.l.b16 %v2237
  %v2283 = vunpack.c.h.b16 %v2237
  %v2284 = vunpack.c.l.b16 %v2238
  %v2285 = vunpack.c.h.b16 %v2238
  %v2286 = vunpack.c.l.b16 %v2239
  %v2287 = vunpack.c.h.b16 %v2239
  %v2288 = vpack.c.b16 %v2258, %v2256
  %v2289 = vpack.c.b16 %v2259, %v2257
  %v2290 = vpack.c.b16 %v2262, %v2260
  %v2291 = vpack.c.b16 %v2263, %v2261
  %v2292 = vpack.c.b16 %v2266, %v2264
  %v2293 = vpack.c.b16 %v2267, %v2265
  %v2294 = vpack.c.b16 %v2270, %v2268
  %v2295 = vpack.c.b16 %v2271, %v2269
  %v2296 = vpack.c.b16 %v2274, %v2272
  %v2297 = vpack.c.b16 %v2275, %v2273
  %v2298 = vpack.c.b16 %v2278, %v2276
  %v2299 = vpack.c.b16 %v2279, %v2277
  %v2300 = vpack.c.b16 %v2282, %v2280
  %v2301 = vpack.c.b16 %v2283, %v2281
  %v2302 = vpack.c.b16 %v2286, %v2284
  %v2303 = vpack.c.b16 %v2287, %v2285
  %vm2312 = vcmask 916480
  %v2314 = vsel %vm2312, %v2289, 0
  %v2317 = vsel %vm2312, %v2291, 0
  %v2320 = vsel %vm2312, %v2293, 0
  %v2323 = vsel %vm2312, %v2295, 0
  %v2326 = vsel %vm2312, %v2297, 0
  %v2329 = vsel %vm2312, %v2299, 0
  %v2332 = vsel %vm2312, %v2301, 0
  %v2335 = vsel %vm2312, %v2303, 0
  %2337 = vmatpush.bf16.msra.mxu0 %v2216
  %2338 = vmatpush.bf16.msra.mxu0 %v2215
  %2339 = vmatpush.bf16.msra.mxu0 %v2214
  %2340 = vmatpush.bf16.msra.mxu0 %v2213
  %2341 = vmatpush.bf16.msra.mxu0 %v2212
  %2342 = vmatpush.bf16.msra.mxu0 %v2211
  %2343 = vmatpush.bf16.msra.mxu0 %v2210
  %2344 = vmatpush.bf16.msra.mxu0 %v2209
  %2345 = vmatmul.bf16.gmra.mxu0 %v2288
  %v2346 = vpop.f32.mrf.mxu0
  %v2347 = vadd.f32 0.0, %v2346
  %v2348 = vpop.f32.mrf.mxu0
  %v2349 = vadd.f32 0.0, %v2348
  %2350 = vmatmul.bf16.gmra.mxu0 %v2290
  %v2351 = vpop.f32.mrf.mxu0
  %v2352 = vadd.f32 0.0, %v2351
  %v2353 = vpop.f32.mrf.mxu0
  %v2354 = vadd.f32 0.0, %v2353
  %2355 = vmatmul.bf16.gmra.mxu0 %v2292
  %v2356 = vpop.f32.mrf.mxu0
  %v2357 = vadd.f32 0.0, %v2356
  %v2358 = vpop.f32.mrf.mxu0
  %v2359 = vadd.f32 0.0, %v2358
  %2360 = vmatmul.bf16.gmra.mxu0 %v2294
  %v2361 = vpop.f32.mrf.mxu0
  %v2362 = vadd.f32 0.0, %v2361
  %v2363 = vpop.f32.mrf.mxu0
  %v2364 = vadd.f32 0.0, %v2363
  %2365 = vmatmul.bf16.gmra.mxu0 %v2296
  %v2366 = vpop.f32.mrf.mxu0
  %v2367 = vadd.f32 0.0, %v2366
  %v2368 = vpop.f32.mrf.mxu0
  %v2369 = vadd.f32 0.0, %v2368
  %2370 = vmatmul.bf16.gmra.mxu0 %v2298
  %v2371 = vpop.f32.mrf.mxu0
  %v2372 = vadd.f32 0.0, %v2371
  %v2373 = vpop.f32.mrf.mxu0
  %v2374 = vadd.f32 0.0, %v2373
  %2375 = vmatmul.bf16.gmra.mxu0 %v2300
  %v2376 = vpop.f32.mrf.mxu0
  %v2377 = vadd.f32 0.0, %v2376
  %v2378 = vpop.f32.mrf.mxu0
  %v2379 = vadd.f32 0.0, %v2378
  %2380 = vmatmul.bf16.gmra.mxu0 %v2302
  %v2381 = vpop.f32.mrf.mxu0
  %v2382 = vadd.f32 0.0, %v2381
  %v2383 = vpop.f32.mrf.mxu0
  %v2384 = vadd.f32 0.0, %v2383
  %2385 = vdwg.mxu0
  %2386 = vmatpush.bf16.msra.mxu0 0
  %2387 = vmatpush.bf16.msra.mxu0 %v2223
  %2388 = vmatpush.bf16.msra.mxu0 %v2222
  %2389 = vmatpush.bf16.msra.mxu0 %v2221
  %2390 = vmatpush.bf16.msra.mxu0 %v2220
  %2391 = vmatpush.bf16.msra.mxu0 %v2219
  %2392 = vmatpush.bf16.msra.mxu0 %v2218
  %2393 = vmatpush.bf16.msra.mxu0 %v2217
  %2394 = vmatmul.bf16.gmra.mxu0 %v2314
  %v2395 = vpop.f32.mrf.mxu0
  %v2396 = vadd.f32 %v2347, %v2395
  %v2397 = vpop.f32.mrf.mxu0
  %v2398 = vadd.f32 %v2349, %v2397
  %2399 = vmatmul.bf16.gmra.mxu0 %v2317
  %v2400 = vpop.f32.mrf.mxu0
  %v2401 = vadd.f32 %v2352, %v2400
  %v2402 = vpop.f32.mrf.mxu0
  %v2403 = vadd.f32 %v2354, %v2402
  %2404 = vmatmul.bf16.gmra.mxu0 %v2320
  %v2405 = vpop.f32.mrf.mxu0
  %v2406 = vadd.f32 %v2357, %v2405
  %v2407 = vpop.f32.mrf.mxu0
  %v2408 = vadd.f32 %v2359, %v2407
  %2409 = vmatmul.bf16.gmra.mxu0 %v2323
  %v2410 = vpop.f32.mrf.mxu0
  %v2411 = vadd.f32 %v2362, %v2410
  %v2412 = vpop.f32.mrf.mxu0
  %v2413 = vadd.f32 %v2364, %v2412
  %2414 = vmatmul.bf16.gmra.mxu0 %v2326
  %v2415 = vpop.f32.mrf.mxu0
  %v2416 = vadd.f32 %v2367, %v2415
  %v2417 = vpop.f32.mrf.mxu0
  %v2418 = vadd.f32 %v2369, %v2417
  %2419 = vmatmul.bf16.gmra.mxu0 %v2329
  %v2420 = vpop.f32.mrf.mxu0
  %v2421 = vadd.f32 %v2372, %v2420
  %v2422 = vpop.f32.mrf.mxu0
  %v2423 = vadd.f32 %v2374, %v2422
  %2424 = vmatmul.bf16.gmra.mxu0 %v2332
  %v2425 = vpop.f32.mrf.mxu0
  %v2426 = vadd.f32 %v2377, %v2425
  %v2427 = vpop.f32.mrf.mxu0
  %v2428 = vadd.f32 %v2379, %v2427
  %2429 = vmatmul.bf16.gmra.mxu0 %v2335
  %v2430 = vpop.f32.mrf.mxu0
  %v2431 = vadd.f32 %v2382, %v2430
  %v2432 = vpop.f32.mrf.mxu0
  %v2433 = vadd.f32 %v2384, %v2432
  %2434 = vdwg.mxu0
  %v2435 = vpack.c.bf16 %v2398, %v2396
  %v2436 = vpack.c.bf16 %v2403, %v2401
  %v2437 = vpack.c.bf16 %v2408, %v2406
  %v2438 = vpack.c.bf16 %v2413, %v2411
  %v2439 = vpack.c.bf16 %v2418, %v2416
  %v2440 = vpack.c.bf16 %v2423, %v2421
  %v2441 = vpack.c.bf16 %v2428, %v2426
  %v2442 = vpack.c.bf16 %v2433, %v2431
  %v2443 = vld [vmem:[%s5] sm:$0xf]
  %v2444 = vld [vmem:[%s5 + $0x4] sm:$0xf]
  %v2445 = vld [vmem:[%s5 + $0x8] sm:$0xf]
  %v2446 = vld [vmem:[%s5 + $0xc] sm:$0xf]
  %v2447 = vld [vmem:[%s5 + $0x10] sm:$0xf]
  %v2448 = vld [vmem:[%s5 + $0x14] sm:$0xf]
  %v2449 = vld [vmem:[%s5 + $0x18] sm:$0xf]
  %v2450 = vld [vmem:[%s5 + $0x1c] sm:$0xf]
  %v2451 = vld [vmem:[%s5 + $0x20] sm:$0xf]
  %v2452 = vld [vmem:[%s5 + $0x24] sm:$0xf]
  %v2453 = vld [vmem:[%s5 + $0x28] sm:$0xf]
  %v2454 = vld [vmem:[%s5 + $0x2c] sm:$0xf]
  %v2455 = vld [vmem:[%s5 + $0x30] sm:$0xf]
  %v2456 = vld [vmem:[%s5 + $0x34] sm:$0xf]
  %v2457 = vld [vmem:[%s5 + $0x38] sm:$0xf]
  %v2473 = vunpack.c.l.b16 %v2443
  %v2474 = vunpack.c.l.b16 %v2444
  %v2475 = vunpack.c.l.b16 %v2445
  %v2476 = vunpack.c.l.b16 %v2446
  %v2477 = vunpack.c.l.b16 %v2447
  %v2478 = vunpack.c.l.b16 %v2448
  %v2479 = vunpack.c.l.b16 %v2449
  %v2480 = vunpack.c.l.b16 %v2450
  %v2481 = vunpack.c.l.b16 %v2451
  %v2482 = vunpack.c.l.b16 %v2452
  %v2483 = vunpack.c.l.b16 %v2453
  %v2484 = vunpack.c.l.b16 %v2454
  %v2485 = vunpack.c.l.b16 %v2455
  %v2486 = vunpack.c.l.b16 %v2456
  %v2487 = vunpack.c.l.b16 %v2457
  %v2488 = vpack.c.b16 %v2474, %v2473
  %v2489 = vpack.c.b16 %v2476, %v2475
  %v2490 = vpack.c.b16 %v2478, %v2477
  %v2491 = vpack.c.b16 %v2480, %v2479
  %v2492 = vpack.c.b16 %v2482, %v2481
  %v2493 = vpack.c.b16 %v2484, %v2483
  %v2494 = vpack.c.b16 %v2486, %v2485
  %v2495 = vpack.c.b16 %v2487, %v2487
  %vm2503 = vcmask 982016
  %v2505 = vsel %vm2503, %v2435, 0
  %v2508 = vsel %vm2503, %v2436, 0
  %v2511 = vsel %vm2503, %v2437, 0
  %v2514 = vsel %vm2503, %v2438, 0
  %v2517 = vsel %vm2503, %v2439, 0
  %v2520 = vsel %vm2503, %v2440, 0
  %v2523 = vsel %vm2503, %v2441, 0
  %v2526 = vsel %vm2503, %v2442, 0
  %vm2528 = vcmask 1043456
  %v2530 = vsel %vm2528, %v2495, 0
  %2532 = vmatpush.bf16.msra.mxu0 %v2530
  %2533 = vmatpush.bf16.msra.mxu0 %v2494
  %2534 = vmatpush.bf16.msra.mxu0 %v2493
  %2535 = vmatpush.bf16.msra.mxu0 %v2492
  %2536 = vmatpush.bf16.msra.mxu0 %v2491
  %2537 = vmatpush.bf16.msra.mxu0 %v2490
  %2538 = vmatpush.bf16.msra.mxu0 %v2489
  %2539 = vmatpush.bf16.msra.mxu0 %v2488
  %2540 = vmatmul.bf16.gmra.mxu0 %v2505
  %v2541 = vpop.f32.mrf.mxu0
  %v2542 = vadd.f32 0.0, %v2541
  %v2543 = vpop.f32.mrf.mxu0
  %v2544 = vadd.f32 0.0, %v2543
  %2545 = vmatmul.bf16.gmra.mxu0 %v2508
  %v2546 = vpop.f32.mrf.mxu0
  %v2547 = vadd.f32 0.0, %v2546
  %v2548 = vpop.f32.mrf.mxu0
  %v2549 = vadd.f32 0.0, %v2548
  %2550 = vmatmul.bf16.gmra.mxu0 %v2511
  %v2551 = vpop.f32.mrf.mxu0
  %v2552 = vadd.f32 0.0, %v2551
  %v2553 = vpop.f32.mrf.mxu0
  %v2554 = vadd.f32 0.0, %v2553
  %2555 = vmatmul.bf16.gmra.mxu0 %v2514
  %v2556 = vpop.f32.mrf.mxu0
  %v2557 = vadd.f32 0.0, %v2556
  %v2558 = vpop.f32.mrf.mxu0
  %v2559 = vadd.f32 0.0, %v2558
  %2560 = vmatmul.bf16.gmra.mxu0 %v2517
  %v2561 = vpop.f32.mrf.mxu0
  %v2562 = vadd.f32 0.0, %v2561
  %v2563 = vpop.f32.mrf.mxu0
  %v2564 = vadd.f32 0.0, %v2563
  %2565 = vmatmul.bf16.gmra.mxu0 %v2520
  %v2566 = vpop.f32.mrf.mxu0
  %v2567 = vadd.f32 0.0, %v2566
  %v2568 = vpop.f32.mrf.mxu0
  %v2569 = vadd.f32 0.0, %v2568
  %2570 = vmatmul.bf16.gmra.mxu0 %v2523
  %v2571 = vpop.f32.mrf.mxu0
  %v2572 = vadd.f32 0.0, %v2571
  %v2573 = vpop.f32.mrf.mxu0
  %v2574 = vadd.f32 0.0, %v2573
  %2575 = vmatmul.bf16.gmra.mxu0 %v2526
  %v2576 = vpop.f32.mrf.mxu0
  %v2577 = vadd.f32 0.0, %v2576
  %v2578 = vpop.f32.mrf.mxu0
  %v2579 = vadd.f32 0.0, %v2578
  %2580 = vdwg.mxu0
  %s2581 = scalar_lea.vmem %s5, 60
  %v2582 = vld [vmem:[%s2581] sm:$0xf]
  %v2583 = vld [vmem:[%s2581 + $0x4] sm:$0xf]
  %v2584 = vld [vmem:[%s2581 + $0x8] sm:$0xf]
  %v2585 = vld [vmem:[%s2581 + $0xc] sm:$0xf]
  %v2586 = vld [vmem:[%s2581 + $0x10] sm:$0xf]
  %v2587 = vld [vmem:[%s2581 + $0x14] sm:$0xf]
  %v2588 = vld [vmem:[%s2581 + $0x18] sm:$0xf]
  %v2589 = vld [vmem:[%s2581 + $0x1c] sm:$0xf]
  %v2590 = vld [vmem:[%s2581 + $0x20] sm:$0xf]
  %v2591 = vld [vmem:[%s2581 + $0x24] sm:$0xf]
  %v2592 = vld [vmem:[%s2581 + $0x28] sm:$0xf]
  %v2593 = vld [vmem:[%s2581 + $0x2c] sm:$0xf]
  %v2594 = vld [vmem:[%s2581 + $0x30] sm:$0xf]
  %v2595 = vld [vmem:[%s2581 + $0x34] sm:$0xf]
  %v2596 = vld [vmem:[%s2581 + $0x38] sm:$0xf]
  %v2612 = vunpack.c.l.b16 %v2582
  %v2613 = vunpack.c.l.b16 %v2583
  %v2614 = vunpack.c.l.b16 %v2584
  %v2615 = vunpack.c.l.b16 %v2585
  %v2616 = vunpack.c.l.b16 %v2586
  %v2617 = vunpack.c.l.b16 %v2587
  %v2618 = vunpack.c.l.b16 %v2588
  %v2619 = vunpack.c.l.b16 %v2589
  %v2620 = vunpack.c.l.b16 %v2590
  %v2621 = vunpack.c.l.b16 %v2591
  %v2622 = vunpack.c.l.b16 %v2592
  %v2623 = vunpack.c.l.b16 %v2593
  %v2624 = vunpack.c.l.b16 %v2594
  %v2625 = vunpack.c.l.b16 %v2595
  %v2626 = vunpack.c.l.b16 %v2596
  %v2627 = vpack.c.b16 %v2613, %v2612
  %v2628 = vpack.c.b16 %v2615, %v2614
  %v2629 = vpack.c.b16 %v2617, %v2616
  %v2630 = vpack.c.b16 %v2619, %v2618
  %v2631 = vpack.c.b16 %v2621, %v2620
  %v2632 = vpack.c.b16 %v2623, %v2622
  %v2633 = vpack.c.b16 %v2625, %v2624
  %v2634 = vpack.c.b16 %v2626, %v2626
  %v2643 = vsel %vm2528, %v2634, 0
  %2645 = vmatpush.bf16.msra.mxu0 %v2643
  %2646 = vmatpush.bf16.msra.mxu0 %v2633
  %2647 = vmatpush.bf16.msra.mxu0 %v2632
  %2648 = vmatpush.bf16.msra.mxu0 %v2631
  %2649 = vmatpush.bf16.msra.mxu0 %v2630
  %2650 = vmatpush.bf16.msra.mxu0 %v2629
  %2651 = vmatpush.bf16.msra.mxu0 %v2628
  %2652 = vmatpush.bf16.msra.mxu0 %v2627
  %2653 = vmatmul.bf16.gmra.mxu0 %v2505
  %v2654 = vpop.f32.mrf.mxu0
  %v2655 = vadd.f32 0.0, %v2654
  %v2656 = vpop.f32.mrf.mxu0
  %v2657 = vadd.f32 0.0, %v2656
  %2658 = vmatmul.bf16.gmra.mxu0 %v2508
  %v2659 = vpop.f32.mrf.mxu0
  %v2660 = vadd.f32 0.0, %v2659
  %v2661 = vpop.f32.mrf.mxu0
  %v2662 = vadd.f32 0.0, %v2661
  %2663 = vmatmul.bf16.gmra.mxu0 %v2511
  %v2664 = vpop.f32.mrf.mxu0
  %v2665 = vadd.f32 0.0, %v2664
  %v2666 = vpop.f32.mrf.mxu0
  %v2667 = vadd.f32 0.0, %v2666
  %2668 = vmatmul.bf16.gmra.mxu0 %v2514
  %v2669 = vpop.f32.mrf.mxu0
  %v2670 = vadd.f32 0.0, %v2669
  %v2671 = vpop.f32.mrf.mxu0
  %v2672 = vadd.f32 0.0, %v2671
  %2673 = vmatmul.bf16.gmra.mxu0 %v2517
  %v2674 = vpop.f32.mrf.mxu0
  %v2675 = vadd.f32 0.0, %v2674
  %v2676 = vpop.f32.mrf.mxu0
  %v2677 = vadd.f32 0.0, %v2676
  %2678 = vmatmul.bf16.gmra.mxu0 %v2520
  %v2679 = vpop.f32.mrf.mxu0
  %v2680 = vadd.f32 0.0, %v2679
  %v2681 = vpop.f32.mrf.mxu0
  %v2682 = vadd.f32 0.0, %v2681
  %2683 = vmatmul.bf16.gmra.mxu0 %v2523
  %v2684 = vpop.f32.mrf.mxu0
  %v2685 = vadd.f32 0.0, %v2684
  %v2686 = vpop.f32.mrf.mxu0
  %v2687 = vadd.f32 0.0, %v2686
  %2688 = vmatmul.bf16.gmra.mxu0 %v2526
  %v2689 = vpop.f32.mrf.mxu0
  %v2690 = vadd.f32 0.0, %v2689
  %v2691 = vpop.f32.mrf.mxu0
  %v2692 = vadd.f32 0.0, %v2691
  %2693 = vdwg.mxu0
  %v2694 = vmax.f32 %v2542, %v2655
  %v2695 = vmax.f32 %v2544, %v2657
  %v2696 = vmax.f32 %v2547, %v2660
  %v2697 = vmax.f32 %v2549, %v2662
  %v2698 = vmax.f32 %v2552, %v2665
  %v2699 = vmax.f32 %v2554, %v2667
  %v2700 = vmax.f32 %v2557, %v2670
  %v2701 = vmax.f32 %v2559, %v2672
  %v2702 = vmax.f32 %v2562, %v2675
  %v2703 = vmax.f32 %v2564, %v2677
  %v2704 = vmax.f32 %v2567, %v2680
  %v2705 = vmax.f32 %v2569, %v2682
  %v2706 = vmax.f32 %v2572, %v2685
  %v2707 = vmax.f32 %v2574, %v2687
  %v2708 = vmax.f32 %v2577, %v2690
  %v2709 = vmax.f32 %v2579, %v2692
  %s2710 = scalar_lea.vmem %s4, 128
  %v2711 = vld [vmem:[%s2710] sm:$0xff]
  %v2712 = vld [vmem:[%s2710 + $0x8] sm:$0xff]
  %v2713 = vld [vmem:[%s2710 + $0x10] sm:$0xff]
  %v2714 = vld [vmem:[%s2710 + $0x18] sm:$0xff]
  %v2715 = vld [vmem:[%s2710 + $0x20] sm:$0xff]
  %v2716 = vld [vmem:[%s2710 + $0x28] sm:$0xff]
  %v2717 = vld [vmem:[%s2710 + $0x30] sm:$0xff]
  %v2718 = vld [vmem:[%s2710 + $0x38] sm:$0xff]
  %v2719 = vld [vmem:[%s2710 + $0x40] sm:$0xff]
  %v2720 = vld [vmem:[%s2710 + $0x48] sm:$0xff]
  %v2721 = vld [vmem:[%s2710 + $0x50] sm:$0xff]
  %v2722 = vld [vmem:[%s2710 + $0x58] sm:$0xff]
  %v2723 = vld [vmem:[%s2710 + $0x60] sm:$0xff]
  %v2724 = vld [vmem:[%s2710 + $0x68] sm:$0xff]
  %v2725 = vld [vmem:[%s2710 + $0x70] sm:$0xff]
  %v2726 = vld [vmem:[%s2710 + $0x78] sm:$0xff]
  %v2743 = vunpack.c.l.b16 %v2711
  %v2744 = vunpack.c.h.b16 %v2711
  %v2745 = vunpack.c.l.b16 %v2712
  %v2746 = vunpack.c.h.b16 %v2712
  %v2747 = vunpack.c.l.b16 %v2713
  %v2748 = vunpack.c.h.b16 %v2713
  %v2749 = vunpack.c.l.b16 %v2714
  %v2750 = vunpack.c.h.b16 %v2714
  %v2751 = vunpack.c.l.b16 %v2715
  %v2752 = vunpack.c.h.b16 %v2715
  %v2753 = vunpack.c.l.b16 %v2716
  %v2754 = vunpack.c.h.b16 %v2716
  %v2755 = vunpack.c.l.b16 %v2717
  %v2756 = vunpack.c.h.b16 %v2717
  %v2757 = vunpack.c.l.b16 %v2718
  %v2758 = vunpack.c.h.b16 %v2718
  %v2759 = vunpack.c.l.b16 %v2719
  %v2760 = vunpack.c.h.b16 %v2719
  %v2761 = vunpack.c.l.b16 %v2720
  %v2762 = vunpack.c.h.b16 %v2720
  %v2763 = vunpack.c.l.b16 %v2721
  %v2764 = vunpack.c.h.b16 %v2721
  %v2765 = vunpack.c.l.b16 %v2722
  %v2766 = vunpack.c.h.b16 %v2722
  %v2767 = vunpack.c.l.b16 %v2723
  %v2768 = vunpack.c.h.b16 %v2723
  %v2769 = vunpack.c.l.b16 %v2724
  %v2770 = vunpack.c.h.b16 %v2724
  %v2771 = vunpack.c.l.b16 %v2725
  %v2772 = vunpack.c.h.b16 %v2725
  %v2773 = vunpack.c.l.b16 %v2726
  %v2774 = vunpack.c.h.b16 %v2726
  %v2775 = vpack.c.b16 %v2745, %v2743
  %v2776 = vpack.c.b16 %v2746, %v2744
  %v2777 = vpack.c.b16 %v2749, %v2747
  %v2778 = vpack.c.b16 %v2750, %v2748
  %v2779 = vpack.c.b16 %v2753, %v2751
  %v2780 = vpack.c.b16 %v2754, %v2752
  %v2781 = vpack.c.b16 %v2757, %v2755
  %v2782 = vpack.c.b16 %v2758, %v2756
  %v2783 = vpack.c.b16 %v2761, %v2759
  %v2784 = vpack.c.b16 %v2762, %v2760
  %v2785 = vpack.c.b16 %v2765, %v2763
  %v2786 = vpack.c.b16 %v2766, %v2764
  %v2787 = vpack.c.b16 %v2769, %v2767
  %v2788 = vpack.c.b16 %v2770, %v2768
  %v2789 = vpack.c.b16 %v2773, %v2771
  %v2790 = vpack.c.b16 %v2774, %v2772
  %v2800 = vsel %vm2312, %v2776, 0
  %v2803 = vsel %vm2312, %v2778, 0
  %v2806 = vsel %vm2312, %v2780, 0
  %v2809 = vsel %vm2312, %v2782, 0
  %v2812 = vsel %vm2312, %v2784, 0
  %v2815 = vsel %vm2312, %v2786, 0
  %v2818 = vsel %vm2312, %v2788, 0
  %v2821 = vsel %vm2312, %v2790, 0
  %2823 = vmatpush.bf16.msra.mxu0 %v2216
  %2824 = vmatpush.bf16.msra.mxu0 %v2215
  %2825 = vmatpush.bf16.msra.mxu0 %v2214
  %2826 = vmatpush.bf16.msra.mxu0 %v2213
  %2827 = vmatpush.bf16.msra.mxu0 %v2212
  %2828 = vmatpush.bf16.msra.mxu0 %v2211
  %2829 = vmatpush.bf16.msra.mxu0 %v2210
  %2830 = vmatpush.bf16.msra.mxu0 %v2209
  %2831 = vmatmul.bf16.gmra.mxu0 %v2775
  %v2832 = vpop.f32.mrf.mxu0
  %v2833 = vadd.f32 0.0, %v2832
  %v2834 = vpop.f32.mrf.mxu0
  %v2835 = vadd.f32 0.0, %v2834
  %2836 = vmatmul.bf16.gmra.mxu0 %v2777
  %v2837 = vpop.f32.mrf.mxu0
  %v2838 = vadd.f32 0.0, %v2837
  %v2839 = vpop.f32.mrf.mxu0
  %v2840 = vadd.f32 0.0, %v2839
  %2841 = vmatmul.bf16.gmra.mxu0 %v2779
  %v2842 = vpop.f32.mrf.mxu0
  %v2843 = vadd.f32 0.0, %v2842
  %v2844 = vpop.f32.mrf.mxu0
  %v2845 = vadd.f32 0.0, %v2844
  %2846 = vmatmul.bf16.gmra.mxu0 %v2781
  %v2847 = vpop.f32.mrf.mxu0
  %v2848 = vadd.f32 0.0, %v2847
  %v2849 = vpop.f32.mrf.mxu0
  %v2850 = vadd.f32 0.0, %v2849
  %2851 = vmatmul.bf16.gmra.mxu0 %v2783
  %v2852 = vpop.f32.mrf.mxu0
  %v2853 = vadd.f32 0.0, %v2852
  %v2854 = vpop.f32.mrf.mxu0
  %v2855 = vadd.f32 0.0, %v2854
  %2856 = vmatmul.bf16.gmra.mxu0 %v2785
  %v2857 = vpop.f32.mrf.mxu0
  %v2858 = vadd.f32 0.0, %v2857
  %v2859 = vpop.f32.mrf.mxu0
  %v2860 = vadd.f32 0.0, %v2859
  %2861 = vmatmul.bf16.gmra.mxu0 %v2787
  %v2862 = vpop.f32.mrf.mxu0
  %v2863 = vadd.f32 0.0, %v2862
  %v2864 = vpop.f32.mrf.mxu0
  %v2865 = vadd.f32 0.0, %v2864
  %2866 = vmatmul.bf16.gmra.mxu0 %v2789
  %v2867 = vpop.f32.mrf.mxu0
  %v2868 = vadd.f32 0.0, %v2867
  %v2869 = vpop.f32.mrf.mxu0
  %v2870 = vadd.f32 0.0, %v2869
  %2871 = vdwg.mxu0
  %2872 = vmatpush.bf16.msra.mxu0 0
  %2873 = vmatpush.bf16.msra.mxu0 %v2223
  %2874 = vmatpush.bf16.msra.mxu0 %v2222
  %2875 = vmatpush.bf16.msra.mxu0 %v2221
  %2876 = vmatpush.bf16.msra.mxu0 %v2220
  %2877 = vmatpush.bf16.msra.mxu0 %v2219
  %2878 = vmatpush.bf16.msra.mxu0 %v2218
  %2879 = vmatpush.bf16.msra.mxu0 %v2217
  %2880 = vmatmul.bf16.gmra.mxu0 %v2800
  %v2881 = vpop.f32.mrf.mxu0
  %v2882 = vadd.f32 %v2833, %v2881
  %v2883 = vpop.f32.mrf.mxu0
  %v2884 = vadd.f32 %v2835, %v2883
  %2885 = vmatmul.bf16.gmra.mxu0 %v2803
  %v2886 = vpop.f32.mrf.mxu0
  %v2887 = vadd.f32 %v2838, %v2886
  %v2888 = vpop.f32.mrf.mxu0
  %v2889 = vadd.f32 %v2840, %v2888
  %2890 = vmatmul.bf16.gmra.mxu0 %v2806
  %v2891 = vpop.f32.mrf.mxu0
  %v2892 = vadd.f32 %v2843, %v2891
  %v2893 = vpop.f32.mrf.mxu0
  %v2894 = vadd.f32 %v2845, %v2893
  %2895 = vmatmul.bf16.gmra.mxu0 %v2809
  %v2896 = vpop.f32.mrf.mxu0
  %v2897 = vadd.f32 %v2848, %v2896
  %v2898 = vpop.f32.mrf.mxu0
  %v2899 = vadd.f32 %v2850, %v2898
  %2900 = vmatmul.bf16.gmra.mxu0 %v2812
  %v2901 = vpop.f32.mrf.mxu0
  %v2902 = vadd.f32 %v2853, %v2901
  %v2903 = vpop.f32.mrf.mxu0
  %v2904 = vadd.f32 %v2855, %v2903
  %2905 = vmatmul.bf16.gmra.mxu0 %v2815
  %v2906 = vpop.f32.mrf.mxu0
  %v2907 = vadd.f32 %v2858, %v2906
  %v2908 = vpop.f32.mrf.mxu0
  %v2909 = vadd.f32 %v2860, %v2908
  %2910 = vmatmul.bf16.gmra.mxu0 %v2818
  %v2911 = vpop.f32.mrf.mxu0
  %v2912 = vadd.f32 %v2863, %v2911
  %v2913 = vpop.f32.mrf.mxu0
  %v2914 = vadd.f32 %v2865, %v2913
  %2915 = vmatmul.bf16.gmra.mxu0 %v2821
  %v2916 = vpop.f32.mrf.mxu0
  %v2917 = vadd.f32 %v2868, %v2916
  %v2918 = vpop.f32.mrf.mxu0
  %v2919 = vadd.f32 %v2870, %v2918
  %2920 = vdwg.mxu0
  %v2921 = vpack.c.bf16 %v2884, %v2882
  %v2922 = vpack.c.bf16 %v2889, %v2887
  %v2923 = vpack.c.bf16 %v2894, %v2892
  %v2924 = vpack.c.bf16 %v2899, %v2897
  %v2925 = vpack.c.bf16 %v2904, %v2902
  %v2926 = vpack.c.bf16 %v2909, %v2907
  %v2927 = vpack.c.bf16 %v2914, %v2912
  %v2928 = vpack.c.bf16 %v2919, %v2917
  %v2930 = vsel %vm2503, %v2921, 0
  %v2933 = vsel %vm2503, %v2922, 0
  %v2936 = vsel %vm2503, %v2923, 0
  %v2939 = vsel %vm2503, %v2924, 0
  %v2942 = vsel %vm2503, %v2925, 0
  %v2945 = vsel %vm2503, %v2926, 0
  %v2948 = vsel %vm2503, %v2927, 0
  %v2951 = vsel %vm2503, %v2928, 0
  %2953 = vmatpush.bf16.msra.mxu0 %v2530
  %2954 = vmatpush.bf16.msra.mxu0 %v2494
  %2955 = vmatpush.bf16.msra.mxu0 %v2493
  %2956 = vmatpush.bf16.msra.mxu0 %v2492
  %2957 = vmatpush.bf16.msra.mxu0 %v2491
  %2958 = vmatpush.bf16.msra.mxu0 %v2490
  %2959 = vmatpush.bf16.msra.mxu0 %v2489
  %2960 = vmatpush.bf16.msra.mxu0 %v2488
  %2961 = vmatmul.bf16.gmra.mxu0 %v2930
  %v2962 = vpop.f32.mrf.mxu0
  %v2963 = vadd.f32 0.0, %v2962
  %v2964 = vpop.f32.mrf.mxu0
  %v2965 = vadd.f32 0.0, %v2964
  %2966 = vmatmul.bf16.gmra.mxu0 %v2933
  %v2967 = vpop.f32.mrf.mxu0
  %v2968 = vadd.f32 0.0, %v2967
  %v2969 = vpop.f32.mrf.mxu0
  %v2970 = vadd.f32 0.0, %v2969
  %2971 = vmatmul.bf16.gmra.mxu0 %v2936
  %v2972 = vpop.f32.mrf.mxu0
  %v2973 = vadd.f32 0.0, %v2972
  %v2974 = vpop.f32.mrf.mxu0
  %v2975 = vadd.f32 0.0, %v2974
  %2976 = vmatmul.bf16.gmra.mxu0 %v2939
  %v2977 = vpop.f32.mrf.mxu0
  %v2978 = vadd.f32 0.0, %v2977
  %v2979 = vpop.f32.mrf.mxu0
  %v2980 = vadd.f32 0.0, %v2979
  %2981 = vmatmul.bf16.gmra.mxu0 %v2942
  %v2982 = vpop.f32.mrf.mxu0
  %v2983 = vadd.f32 0.0, %v2982
  %v2984 = vpop.f32.mrf.mxu0
  %v2985 = vadd.f32 0.0, %v2984
  %2986 = vmatmul.bf16.gmra.mxu0 %v2945
  %v2987 = vpop.f32.mrf.mxu0
  %v2988 = vadd.f32 0.0, %v2987
  %v2989 = vpop.f32.mrf.mxu0
  %v2990 = vadd.f32 0.0, %v2989
  %2991 = vmatmul.bf16.gmra.mxu0 %v2948
  %v2992 = vpop.f32.mrf.mxu0
  %v2993 = vadd.f32 0.0, %v2992
  %v2994 = vpop.f32.mrf.mxu0
  %v2995 = vadd.f32 0.0, %v2994
  %2996 = vmatmul.bf16.gmra.mxu0 %v2951
  %v2997 = vpop.f32.mrf.mxu0
  %v2998 = vadd.f32 0.0, %v2997
  %v2999 = vpop.f32.mrf.mxu0
  %v3000 = vadd.f32 0.0, %v2999
  %3001 = vdwg.mxu0
  %v3002 = vmax.f32 %v2694, %v2963
  %v3003 = vmax.f32 %v2695, %v2965
  %v3004 = vmax.f32 %v2696, %v2968
  %v3005 = vmax.f32 %v2697, %v2970
  %v3006 = vmax.f32 %v2698, %v2973
  %v3007 = vmax.f32 %v2699, %v2975
  %v3008 = vmax.f32 %v2700, %v2978
  %v3009 = vmax.f32 %v2701, %v2980
  %v3010 = vmax.f32 %v2702, %v2983
  %v3011 = vmax.f32 %v2703, %v2985
  %v3012 = vmax.f32 %v2704, %v2988
  %v3013 = vmax.f32 %v2705, %v2990
  %v3014 = vmax.f32 %v2706, %v2993
  %v3015 = vmax.f32 %v2707, %v2995
  %v3016 = vmax.f32 %v2708, %v2998
  %v3017 = vmax.f32 %v2709, %v3000
  %3018 = vmatpush.bf16.msra.mxu0 %v2643
  %3019 = vmatpush.bf16.msra.mxu0 %v2633
  %3020 = vmatpush.bf16.msra.mxu0 %v2632
  %3021 = vmatpush.bf16.msra.mxu0 %v2631
  %3022 = vmatpush.bf16.msra.mxu0 %v2630
  %3023 = vmatpush.bf16.msra.mxu0 %v2629
  %3024 = vmatpush.bf16.msra.mxu0 %v2628
  %3025 = vmatpush.bf16.msra.mxu0 %v2627
  %3026 = vmatmul.bf16.gmra.mxu0 %v2930
  %v3027 = vpop.f32.mrf.mxu0
  %v3028 = vadd.f32 0.0, %v3027
  %v3029 = vpop.f32.mrf.mxu0
  %v3030 = vadd.f32 0.0, %v3029
  %3031 = vmatmul.bf16.gmra.mxu0 %v2933
  %v3032 = vpop.f32.mrf.mxu0
  %v3033 = vadd.f32 0.0, %v3032
  %v3034 = vpop.f32.mrf.mxu0
  %v3035 = vadd.f32 0.0, %v3034
  %3036 = vmatmul.bf16.gmra.mxu0 %v2936
  %v3037 = vpop.f32.mrf.mxu0
  %v3038 = vadd.f32 0.0, %v3037
  %v3039 = vpop.f32.mrf.mxu0
  %v3040 = vadd.f32 0.0, %v3039
  %3041 = vmatmul.bf16.gmra.mxu0 %v2939
  %v3042 = vpop.f32.mrf.mxu0
  %v3043 = vadd.f32 0.0, %v3042
  %v3044 = vpop.f32.mrf.mxu0
  %v3045 = vadd.f32 0.0, %v3044
  %3046 = vmatmul.bf16.gmra.mxu0 %v2942
  %v3047 = vpop.f32.mrf.mxu0
  %v3048 = vadd.f32 0.0, %v3047
  %v3049 = vpop.f32.mrf.mxu0
  %v3050 = vadd.f32 0.0, %v3049
  %3051 = vmatmul.bf16.gmra.mxu0 %v2945
  %v3052 = vpop.f32.mrf.mxu0
  %v3053 = vadd.f32 0.0, %v3052
  %v3054 = vpop.f32.mrf.mxu0
  %v3055 = vadd.f32 0.0, %v3054
  %3056 = vmatmul.bf16.gmra.mxu0 %v2948
  %v3057 = vpop.f32.mrf.mxu0
  %v3058 = vadd.f32 0.0, %v3057
  %v3059 = vpop.f32.mrf.mxu0
  %v3060 = vadd.f32 0.0, %v3059
  %3061 = vmatmul.bf16.gmra.mxu0 %v2951
  %v3062 = vpop.f32.mrf.mxu0
  %v3063 = vadd.f32 0.0, %v3062
  %v3064 = vpop.f32.mrf.mxu0
  %v3065 = vadd.f32 0.0, %v3064
  %3066 = vdwg.mxu0
  %v3067 = vmax.f32 %v3002, %v3028
  %v3068 = vmax.f32 %v3003, %v3030
  %v3069 = vmax.f32 %v3004, %v3033
  %v3070 = vmax.f32 %v3005, %v3035
  %v3071 = vmax.f32 %v3006, %v3038
  %v3072 = vmax.f32 %v3007, %v3040
  %v3073 = vmax.f32 %v3008, %v3043
  %v3074 = vmax.f32 %v3009, %v3045
  %v3075 = vmax.f32 %v3010, %v3048
  %v3076 = vmax.f32 %v3011, %v3050
  %v3077 = vmax.f32 %v3012, %v3053
  %v3078 = vmax.f32 %v3013, %v3055
  %v3079 = vmax.f32 %v3014, %v3058
  %v3080 = vmax.f32 %v3015, %v3060
  %v3081 = vmax.f32 %v3016, %v3063
  %v3082 = vmax.f32 %v3017, %v3065
  %v3083 = vmax.f32 %v3067, 0.0
  %v3084 = vmax.f32 %v3068, 0.0
  %v3085 = vmax.f32 %v3069, 0.0
  %v3086 = vmax.f32 %v3070, 0.0
  %v3087 = vmax.f32 %v3071, 0.0
  %v3088 = vmax.f32 %v3072, 0.0
  %v3089 = vmax.f32 %v3073, 0.0
  %v3090 = vmax.f32 %v3074, 0.0
  %v3091 = vmax.f32 %v3075, 0.0
  %v3092 = vmax.f32 %v3076, 0.0
  %v3093 = vmax.f32 %v3077, 0.0
  %v3094 = vmax.f32 %v3078, 0.0
  %v3095 = vmax.f32 %v3079, 0.0
  %v3096 = vmax.f32 %v3080, 0.0
  %v3097 = vmax.f32 %v3081, 0.0
  %v3098 = vmax.f32 %v3082, 0.0
  %v3099 = vpack.c.bf16 %v3084, %v3083
  %v3100 = vpack.c.bf16 %v3086, %v3085
  %v3101 = vpack.c.bf16 %v3088, %v3087
  %v3102 = vpack.c.bf16 %v3090, %v3089
  %v3103 = vpack.c.bf16 %v3092, %v3091
  %v3104 = vpack.c.bf16 %v3094, %v3093
  %v3105 = vpack.c.bf16 %v3096, %v3095
  %v3106 = vpack.c.bf16 %v3098, %v3097
  %v3107 = vld [vmem:[%s8] sm:$0x1]
  %v3108 = vld [vmem:[%s6] sm:$0xf]
  %v3109 = vld [vmem:[%s6 + $0x4] sm:$0xf]
  %v3110 = vld [vmem:[%s6 + $0x8] sm:$0xf]
  %v3111 = vld [vmem:[%s6 + $0xc] sm:$0xf]
  %v3112 = vld [vmem:[%s6 + $0x10] sm:$0xf]
  %v3113 = vld [vmem:[%s6 + $0x14] sm:$0xf]
  %v3114 = vld [vmem:[%s6 + $0x18] sm:$0xf]
  %v3115 = vld [vmem:[%s6 + $0x1c] sm:$0xf]
  %v3116 = vld [vmem:[%s6 + $0x20] sm:$0xf]
  %v3117 = vld [vmem:[%s6 + $0x24] sm:$0xf]
  %v3128 = vunpack.c.l.b16 %v3108
  %v3129 = vunpack.c.l.b16 %v3109
  %v3130 = vunpack.c.l.b16 %v3110
  %v3131 = vunpack.c.l.b16 %v3111
  %v3132 = vunpack.c.l.b16 %v3112
  %v3133 = vunpack.c.l.b16 %v3113
  %v3134 = vunpack.c.l.b16 %v3114
  %v3135 = vunpack.c.l.b16 %v3115
  %v3136 = vunpack.c.l.b16 %v3116
  %v3137 = vunpack.c.l.b16 %v3117
  %v3138 = vpack.c.b16 %v3129, %v3128
  %v3139 = vpack.c.b16 %v3131, %v3130
  %v3140 = vpack.c.b16 %v3133, %v3132
  %v3141 = vpack.c.b16 %v3135, %v3134
  %v3142 = vpack.c.b16 %v3137, %v3136
  %3148 = vmatpush.bf16.msra.mxu0 %v3106
  %3149 = vmatpush.bf16.msra.mxu0 %v3105
  %3150 = vmatpush.bf16.msra.mxu0 %v3104
  %3151 = vmatpush.bf16.msra.mxu0 %v3103
  %3152 = vmatpush.bf16.msra.mxu0 %v3102
  %3153 = vmatpush.bf16.msra.mxu0 %v3101
  %3154 = vmatpush.bf16.msra.mxu0 %v3100
  %3155 = vmatpush.bf16.msra.mxu0 %v3099
  %3156 = vmatmul.bf16.gmra.mxu0 %v3138
  %v3157 = vpop.f32.mrf.mxu0
  %v3158 = vadd.f32 0.0, %v3157
  %v3159 = vpop.f32.mrf.mxu0
  %v3160 = vadd.f32 0.0, %v3159
  %3161 = vmatmul.bf16.gmra.mxu0 %v3139
  %v3162 = vpop.f32.mrf.mxu0
  %v3163 = vadd.f32 0.0, %v3162
  %v3164 = vpop.f32.mrf.mxu0
  %v3165 = vadd.f32 0.0, %v3164
  %3166 = vmatmul.bf16.gmra.mxu0 %v3140
  %v3167 = vpop.f32.mrf.mxu0
  %v3168 = vadd.f32 0.0, %v3167
  %v3169 = vpop.f32.mrf.mxu0
  %v3170 = vadd.f32 0.0, %v3169
  %3171 = vmatmul.bf16.gmra.mxu0 %v3141
  %v3172 = vpop.f32.mrf.mxu0
  %v3173 = vadd.f32 0.0, %v3172
  %v3174 = vpop.f32.mrf.mxu0
  %v3175 = vadd.f32 0.0, %v3174
  %3176 = vmatmul.bf16.gmra.mxu0 %v3142
  %v3177 = vpop.f32.mrf.mxu0
  %v3178 = vadd.f32 0.0, %v3177
  %v3179 = vpop.f32.mrf.mxu0
  %v3180 = vadd.f32 0.0, %v3179
  %3181 = vdwg.mxu0
  %v3182 = vpack.c.bf16 %v3160, %v3158
  %v3183 = vpack.c.bf16 %v3165, %v3163
  %v3184 = vpack.c.bf16 %v3170, %v3168
  %v3185 = vpack.c.bf16 %v3175, %v3173
  %v3186 = vpack.c.bf16 %v3180, %v3178
  %v3187 = vld [vmem:[%s7] sm:$0xf]
  %v3188 = vld [vmem:[%s7 + $0x4] sm:$0xf]
  %v3189 = vld [vmem:[%s7 + $0x8] sm:$0xf]
  %v3190 = vld [vmem:[%s7 + $0xc] sm:$0xf]
  %v3191 = vld [vmem:[%s7 + $0x10] sm:$0xf]
  %v3192 = vld [vmem:[%s7 + $0x14] sm:$0xf]
  %v3193 = vld [vmem:[%s7 + $0x18] sm:$0xf]
  %v3194 = vld [vmem:[%s7 + $0x1c] sm:$0xf]
  %v3203 = vunpack.c.l.b16 %v3187
  %v3204 = vunpack.c.l.b16 %v3188
  %v3205 = vunpack.c.l.b16 %v3189
  %v3206 = vunpack.c.l.b16 %v3190
  %v3207 = vunpack.c.l.b16 %v3191
  %v3208 = vunpack.c.l.b16 %v3192
  %v3209 = vunpack.c.l.b16 %v3193
  %v3210 = vunpack.c.l.b16 %v3194
  %v3211 = vpack.c.b16 %v3204, %v3203
  %v3212 = vpack.c.b16 %v3206, %v3205
  %v3213 = vpack.c.b16 %v3208, %v3207
  %v3214 = vpack.c.b16 %v3210, %v3209
  %vm3219 = vcmask 523264
  %v3221 = vsel %vm3219, %v3182, 0
  %v3224 = vsel %vm3219, %v3183, 0
  %v3227 = vsel %vm3219, %v3184, 0
  %v3230 = vsel %vm3219, %v3185, 0
  %v3233 = vsel %vm3219, %v3186, 0
  %3235 = vmatpush.bf16.msra.mxu0 0
  %3236 = vmatpush.bf16.msra.mxu0 0
  %3237 = vmatpush.bf16.msra.mxu0 0
  %3238 = vmatpush.bf16.msra.mxu0 0
  %3239 = vmatpush.bf16.msra.mxu0 %v3214
  %3240 = vmatpush.bf16.msra.mxu0 %v3213
  %3241 = vmatpush.bf16.msra.mxu0 %v3212
  %3242 = vmatpush.bf16.msra.mxu0 %v3211
  %3243 = vmatmul.bf16.gmra.mxu0 %v3221
  %v3244 = vpop.f32.mrf.mxu0
  %v3245 = vadd.f32 0.0, %v3244
  %v3246 = vpop.f32.mrf.mxu0
  %v3247 = vadd.f32 0.0, %v3246
  %3248 = vmatmul.bf16.gmra.mxu0 %v3224
  %v3249 = vpop.f32.mrf.mxu0
  %v3250 = vadd.f32 0.0, %v3249
  %v3251 = vpop.f32.mrf.mxu0
  %v3252 = vadd.f32 0.0, %v3251
  %3253 = vmatmul.bf16.gmra.mxu0 %v3227
  %v3254 = vpop.f32.mrf.mxu0
  %v3255 = vadd.f32 0.0, %v3254
  %v3256 = vpop.f32.mrf.mxu0
  %v3257 = vadd.f32 0.0, %v3256
  %3258 = vmatmul.bf16.gmra.mxu0 %v3230
  %v3259 = vpop.f32.mrf.mxu0
  %v3260 = vadd.f32 0.0, %v3259
  %v3261 = vpop.f32.mrf.mxu0
  %v3262 = vadd.f32 0.0, %v3261
  %3263 = vmatmul.bf16.gmra.mxu0 %v3233
  %v3264 = vpop.f32.mrf.mxu0
  %v3265 = vadd.f32 0.0, %v3264
  %v3266 = vpop.f32.mrf.mxu0
  %v3267 = vadd.f32 0.0, %v3266
  %3268 = vdwg.mxu0
  %v3270 = vperm.slane %v3107, 0
  %v3272 = vadd.f32 %v3270, %v3245
  %v3273 = vadd.f32 %v3270, %v3247
  %v3274 = vadd.f32 %v3270, %v3250
  %v3275 = vadd.f32 %v3270, %v3252
  %v3276 = vadd.f32 %v3270, %v3255
  %v3277 = vadd.f32 %v3270, %v3257
  %v3278 = vadd.f32 %v3270, %v3260
  %v3279 = vadd.f32 %v3270, %v3262
  %v3280 = vadd.f32 %v3270, %v3265
  %v3281 = vadd.f32 %v3270, %v3267
  %s3282 = scalar_lea.vmem %s6, 40
  %v3283 = vld [vmem:[%s3282] sm:$0xf]
  %v3284 = vld [vmem:[%s3282 + $0x4] sm:$0xf]
  %v3285 = vld [vmem:[%s3282 + $0x8] sm:$0xf]
  %v3286 = vld [vmem:[%s3282 + $0xc] sm:$0xf]
  %v3287 = vld [vmem:[%s3282 + $0x10] sm:$0xf]
  %v3288 = vld [vmem:[%s3282 + $0x14] sm:$0xf]
  %v3289 = vld [vmem:[%s3282 + $0x18] sm:$0xf]
  %v3290 = vld [vmem:[%s3282 + $0x1c] sm:$0xf]
  %v3291 = vld [vmem:[%s3282 + $0x20] sm:$0xf]
  %v3292 = vld [vmem:[%s3282 + $0x24] sm:$0xf]
  %v3303 = vunpack.c.l.b16 %v3283
  %v3304 = vunpack.c.l.b16 %v3284
  %v3305 = vunpack.c.l.b16 %v3285
  %v3306 = vunpack.c.l.b16 %v3286
  %v3307 = vunpack.c.l.b16 %v3287
  %v3308 = vunpack.c.l.b16 %v3288
  %v3309 = vunpack.c.l.b16 %v3289
  %v3310 = vunpack.c.l.b16 %v3290
  %v3311 = vunpack.c.l.b16 %v3291
  %v3312 = vunpack.c.l.b16 %v3292
  %v3313 = vpack.c.b16 %v3304, %v3303
  %v3314 = vpack.c.b16 %v3306, %v3305
  %v3315 = vpack.c.b16 %v3308, %v3307
  %v3316 = vpack.c.b16 %v3310, %v3309
  %v3317 = vpack.c.b16 %v3312, %v3311
  %3323 = vmatpush.bf16.msra.mxu0 %v3106
  %3324 = vmatpush.bf16.msra.mxu0 %v3105
  %3325 = vmatpush.bf16.msra.mxu0 %v3104
  %3326 = vmatpush.bf16.msra.mxu0 %v3103
  %3327 = vmatpush.bf16.msra.mxu0 %v3102
  %3328 = vmatpush.bf16.msra.mxu0 %v3101
  %3329 = vmatpush.bf16.msra.mxu0 %v3100
  %3330 = vmatpush.bf16.msra.mxu0 %v3099
  %3331 = vmatmul.bf16.gmra.mxu0 %v3313
  %v3332 = vpop.f32.mrf.mxu0
  %v3333 = vadd.f32 0.0, %v3332
  %v3334 = vpop.f32.mrf.mxu0
  %v3335 = vadd.f32 0.0, %v3334
  %3336 = vmatmul.bf16.gmra.mxu0 %v3314
  %v3337 = vpop.f32.mrf.mxu0
  %v3338 = vadd.f32 0.0, %v3337
  %v3339 = vpop.f32.mrf.mxu0
  %v3340 = vadd.f32 0.0, %v3339
  %3341 = vmatmul.bf16.gmra.mxu0 %v3315
  %v3342 = vpop.f32.mrf.mxu0
  %v3343 = vadd.f32 0.0, %v3342
  %v3344 = vpop.f32.mrf.mxu0
  %v3345 = vadd.f32 0.0, %v3344
  %3346 = vmatmul.bf16.gmra.mxu0 %v3316
  %v3347 = vpop.f32.mrf.mxu0
  %v3348 = vadd.f32 0.0, %v3347
  %v3349 = vpop.f32.mrf.mxu0
  %v3350 = vadd.f32 0.0, %v3349
  %3351 = vmatmul.bf16.gmra.mxu0 %v3317
  %v3352 = vpop.f32.mrf.mxu0
  %v3353 = vadd.f32 0.0, %v3352
  %v3354 = vpop.f32.mrf.mxu0
  %v3355 = vadd.f32 0.0, %v3354
  %3356 = vdwg.mxu0
  %v3357 = vpack.c.bf16 %v3335, %v3333
  %v3358 = vpack.c.bf16 %v3340, %v3338
  %v3359 = vpack.c.bf16 %v3345, %v3343
  %v3360 = vpack.c.bf16 %v3350, %v3348
  %v3361 = vpack.c.bf16 %v3355, %v3353
  %s3362 = scalar_lea.vmem %s7, 32
  %v3363 = vld [vmem:[%s3362] sm:$0xf]
  %v3364 = vld [vmem:[%s3362 + $0x4] sm:$0xf]
  %v3365 = vld [vmem:[%s3362 + $0x8] sm:$0xf]
  %v3366 = vld [vmem:[%s3362 + $0xc] sm:$0xf]
  %v3367 = vld [vmem:[%s3362 + $0x10] sm:$0xf]
  %v3368 = vld [vmem:[%s3362 + $0x14] sm:$0xf]
  %v3369 = vld [vmem:[%s3362 + $0x18] sm:$0xf]
  %v3370 = vld [vmem:[%s3362 + $0x1c] sm:$0xf]
  %v3379 = vunpack.c.l.b16 %v3363
  %v3380 = vunpack.c.l.b16 %v3364
  %v3381 = vunpack.c.l.b16 %v3365
  %v3382 = vunpack.c.l.b16 %v3366
  %v3383 = vunpack.c.l.b16 %v3367
  %v3384 = vunpack.c.l.b16 %v3368
  %v3385 = vunpack.c.l.b16 %v3369
  %v3386 = vunpack.c.l.b16 %v3370
  %v3387 = vpack.c.b16 %v3380, %v3379
  %v3388 = vpack.c.b16 %v3382, %v3381
  %v3389 = vpack.c.b16 %v3384, %v3383
  %v3390 = vpack.c.b16 %v3386, %v3385
  %v3396 = vsel %vm3219, %v3357, 0
  %v3399 = vsel %vm3219, %v3358, 0
  %v3402 = vsel %vm3219, %v3359, 0
  %v3405 = vsel %vm3219, %v3360, 0
  %v3408 = vsel %vm3219, %v3361, 0
  %3410 = vmatpush.bf16.msra.mxu0 0
  %3411 = vmatpush.bf16.msra.mxu0 0
  %3412 = vmatpush.bf16.msra.mxu0 0
  %3413 = vmatpush.bf16.msra.mxu0 0
  %3414 = vmatpush.bf16.msra.mxu0 %v3390
  %3415 = vmatpush.bf16.msra.mxu0 %v3389
  %3416 = vmatpush.bf16.msra.mxu0 %v3388
  %3417 = vmatpush.bf16.msra.mxu0 %v3387
  %3418 = vmatmul.bf16.gmra.mxu0 %v3396
  %v3419 = vpop.f32.mrf.mxu0
  %v3420 = vadd.f32 0.0, %v3419
  %v3421 = vpop.f32.mrf.mxu0
  %v3422 = vadd.f32 0.0, %v3421
  %3423 = vmatmul.bf16.gmra.mxu0 %v3399
  %v3424 = vpop.f32.mrf.mxu0
  %v3425 = vadd.f32 0.0, %v3424
  %v3426 = vpop.f32.mrf.mxu0
  %v3427 = vadd.f32 0.0, %v3426
  %3428 = vmatmul.bf16.gmra.mxu0 %v3402
  %v3429 = vpop.f32.mrf.mxu0
  %v3430 = vadd.f32 0.0, %v3429
  %v3431 = vpop.f32.mrf.mxu0
  %v3432 = vadd.f32 0.0, %v3431
  %3433 = vmatmul.bf16.gmra.mxu0 %v3405
  %v3434 = vpop.f32.mrf.mxu0
  %v3435 = vadd.f32 0.0, %v3434
  %v3436 = vpop.f32.mrf.mxu0
  %v3437 = vadd.f32 0.0, %v3436
  %3438 = vmatmul.bf16.gmra.mxu0 %v3408
  %v3439 = vpop.f32.mrf.mxu0
  %v3440 = vadd.f32 0.0, %v3439
  %v3441 = vpop.f32.mrf.mxu0
  %v3442 = vadd.f32 0.0, %v3441
  %3443 = vdwg.mxu0
  %v3444 = vadd.f32 %v3272, %v3420
  %v3445 = vadd.f32 %v3273, %v3422
  %v3446 = vadd.f32 %v3274, %v3425
  %v3447 = vadd.f32 %v3275, %v3427
  %v3448 = vadd.f32 %v3276, %v3430
  %v3449 = vadd.f32 %v3277, %v3432
  %v3450 = vadd.f32 %v3278, %v3435
  %v3451 = vadd.f32 %v3279, %v3437
  %v3452 = vadd.f32 %v3280, %v3440
  %v3453 = vadd.f32 %v3281, %v3442
  %v3454 = vpack.c.bf16 %v3445, %v3444
  %v3455 = vpack.c.bf16 %v3447, %v3446
  %v3456 = vpack.c.bf16 %v3449, %v3448
  %v3457 = vpack.c.bf16 %v3451, %v3450
  %v3458 = vpack.c.bf16 %v3453, %v3452
  %v3459 = vld [vmem:[%s9] sm:$0xf]
  %v3460 = vld [vmem:[%s9 + $0x4] sm:$0xf]
  %v3461 = vld [vmem:[%s9 + $0x8] sm:$0xf]
  %v3462 = vld [vmem:[%s9 + $0xc] sm:$0xf]
  %v3463 = vld [vmem:[%s9 + $0x10] sm:$0xf]
  %v3464 = vld [vmem:[%s9 + $0x14] sm:$0xf]
  %v3471 = vunpack.c.l.b16 %v3459
  %v3472 = vunpack.c.l.b16 %v3460
  %v3473 = vunpack.c.l.b16 %v3461
  %v3474 = vunpack.c.l.b16 %v3462
  %v3475 = vunpack.c.l.b16 %v3463
  %v3476 = vunpack.c.l.b16 %v3464
  %v3477 = vpack.c.b16 %v3472, %v3471
  %v3478 = vpack.c.b16 %v3474, %v3473
  %v3479 = vpack.c.b16 %v3476, %v3475
  %vm3480 = vcmask 654336
  %v3482 = vsel %vm3480, %v3477, 0
  %v3485 = vsel %vm3480, %v3478, 0
  %v3488 = vsel %vm3480, %v3479, 0
  %3490 = vmatpush.bf16.msra.mxu0 0
  %3491 = vmatpush.bf16.msra.mxu0 0
  %3492 = vmatpush.bf16.msra.mxu0 0
  %3493 = vmatpush.bf16.msra.mxu0 %v3458
  %3494 = vmatpush.bf16.msra.mxu0 %v3457
  %3495 = vmatpush.bf16.msra.mxu0 %v3456
  %3496 = vmatpush.bf16.msra.mxu0 %v3455
  %3497 = vmatpush.bf16.msra.mxu0 %v3454
  %3498 = vmatmul.bf16.gmra.mxu0 %v3482
  %v3499 = vpop.f32.mrf.mxu0
  %v3500 = vadd.f32 0.0, %v3499
  %v3501 = vpop.f32.mrf.mxu0
  %v3502 = vadd.f32 0.0, %v3501
  %3503 = vmatmul.bf16.gmra.mxu0 %v3485
  %v3504 = vpop.f32.mrf.mxu0
  %v3505 = vadd.f32 0.0, %v3504
  %v3506 = vpop.f32.mrf.mxu0
  %v3507 = vadd.f32 0.0, %v3506
  %3508 = vmatmul.bf16.gmra.mxu0 %v3488
  %v3509 = vpop.f32.mrf.mxu0
  %v3510 = vadd.f32 0.0, %v3509
  %v3511 = vpop.f32.mrf.mxu0
  %v3512 = vadd.f32 0.0, %v3511
  %3513 = vdwg.mxu0
  %v3514 = vpack.c.bf16 %v3502, %v3500
  %v3515 = vpack.c.bf16 %v3507, %v3505
  %v3516 = vpack.c.bf16 %v3512, %v3510
  %v3517 = vld [vmem:[%s10] sm:$0xf]
  %v3518 = vld [vmem:[%s10 + $0x4] sm:$0xf]
  %v3519 = vld [vmem:[%s10 + $0x8] sm:$0xf]
  %v3520 = vld [vmem:[%s10 + $0xc] sm:$0xf]
  %v3521 = vld [vmem:[%s10 + $0x10] sm:$0xf]
  %v3522 = vld [vmem:[%s10 + $0x14] sm:$0xf]
  %v3523 = vld [vmem:[%s10 + $0x18] sm:$0xf]
  %v3524 = vld [vmem:[%s10 + $0x1c] sm:$0xf]
  %v3525 = vld [vmem:[%s10 + $0x20] sm:$0xf]
  %v3526 = vld [vmem:[%s10 + $0x24] sm:$0xf]
  %v3537 = vunpack.c.l.b16 %v3517
  %v3538 = vunpack.c.l.b16 %v3518
  %v3539 = vunpack.c.l.b16 %v3519
  %v3540 = vunpack.c.l.b16 %v3520
  %v3541 = vunpack.c.l.b16 %v3521
  %v3542 = vunpack.c.l.b16 %v3522
  %v3543 = vunpack.c.l.b16 %v3523
  %v3544 = vunpack.c.l.b16 %v3524
  %v3545 = vunpack.c.l.b16 %v3525
  %v3546 = vunpack.c.l.b16 %v3526
  %v3547 = vpack.c.b16 %v3538, %v3537
  %v3548 = vpack.c.b16 %v3540, %v3539
  %v3549 = vpack.c.b16 %v3542, %v3541
  %v3550 = vpack.c.b16 %v3544, %v3543
  %v3551 = vpack.c.b16 %v3546, %v3545
  %v3558 = vsel %vm3480, %v3514, 0
  %v3561 = vsel %vm3480, %v3515, 0
  %v3564 = vsel %vm3480, %v3516, 0
  %3566 = vmatpush.bf16.msra.mxu0 0
  %3567 = vmatpush.bf16.msra.mxu0 0
  %3568 = vmatpush.bf16.msra.mxu0 0
  %3569 = vmatpush.bf16.msra.mxu0 %v3551
  %3570 = vmatpush.bf16.msra.mxu0 %v3550
  %3571 = vmatpush.bf16.msra.mxu0 %v3549
  %3572 = vmatpush.bf16.msra.mxu0 %v3548
  %3573 = vmatpush.bf16.msra.mxu0 %v3547
  %3574 = vmatmul.bf16.gmra.mxu0 %v3558
  %v3575 = vpop.f32.mrf.mxu0
  %v3576 = vadd.f32 0.0, %v3575
  %v3577 = vpop.f32.mrf.mxu0
  %v3578 = vadd.f32 0.0, %v3577
  %3579 = vmatmul.bf16.gmra.mxu0 %v3561
  %v3580 = vpop.f32.mrf.mxu0
  %v3581 = vadd.f32 0.0, %v3580
  %v3582 = vpop.f32.mrf.mxu0
  %v3583 = vadd.f32 0.0, %v3582
  %3584 = vmatmul.bf16.gmra.mxu0 %v3564
  %v3585 = vpop.f32.mrf.mxu0
  %v3586 = vadd.f32 0.0, %v3585
  %v3587 = vpop.f32.mrf.mxu0
  %v3588 = vadd.f32 0.0, %v3587
  %3589 = vdwg.mxu0
  %s3590 = scalar_lea.vmem %s10, 40
  %v3591 = vld [vmem:[%s3590] sm:$0xf]
  %v3592 = vld [vmem:[%s3590 + $0x4] sm:$0xf]
  %v3593 = vld [vmem:[%s3590 + $0x8] sm:$0xf]
  %v3594 = vld [vmem:[%s3590 + $0xc] sm:$0xf]
  %v3595 = vld [vmem:[%s3590 + $0x10] sm:$0xf]
  %v3596 = vld [vmem:[%s3590 + $0x14] sm:$0xf]
  %v3597 = vld [vmem:[%s3590 + $0x18] sm:$0xf]
  %v3598 = vld [vmem:[%s3590 + $0x1c] sm:$0xf]
  %v3599 = vld [vmem:[%s3590 + $0x20] sm:$0xf]
  %v3600 = vld [vmem:[%s3590 + $0x24] sm:$0xf]
  %v3611 = vunpack.c.l.b16 %v3591
  %v3612 = vunpack.c.l.b16 %v3592
  %v3613 = vunpack.c.l.b16 %v3593
  %v3614 = vunpack.c.l.b16 %v3594
  %v3615 = vunpack.c.l.b16 %v3595
  %v3616 = vunpack.c.l.b16 %v3596
  %v3617 = vunpack.c.l.b16 %v3597
  %v3618 = vunpack.c.l.b16 %v3598
  %v3619 = vunpack.c.l.b16 %v3599
  %v3620 = vunpack.c.l.b16 %v3600
  %v3621 = vpack.c.b16 %v3612, %v3611
  %v3622 = vpack.c.b16 %v3614, %v3613
  %v3623 = vpack.c.b16 %v3616, %v3615
  %v3624 = vpack.c.b16 %v3618, %v3617
  %v3625 = vpack.c.b16 %v3620, %v3619
  %3631 = vmatpush.bf16.msra.mxu0 0
  %3632 = vmatpush.bf16.msra.mxu0 0
  %3633 = vmatpush.bf16.msra.mxu0 0
  %3634 = vmatpush.bf16.msra.mxu0 %v3625
  %3635 = vmatpush.bf16.msra.mxu0 %v3624
  %3636 = vmatpush.bf16.msra.mxu0 %v3623
  %3637 = vmatpush.bf16.msra.mxu0 %v3622
  %3638 = vmatpush.bf16.msra.mxu0 %v3621
  %3639 = vmatmul.bf16.gmra.mxu0 %v3558
  %v3640 = vpop.f32.mrf.mxu0
  %v3641 = vadd.f32 0.0, %v3640
  %v3642 = vpop.f32.mrf.mxu0
  %v3643 = vadd.f32 0.0, %v3642
  %3644 = vmatmul.bf16.gmra.mxu0 %v3561
  %v3645 = vpop.f32.mrf.mxu0
  %v3646 = vadd.f32 0.0, %v3645
  %v3647 = vpop.f32.mrf.mxu0
  %v3648 = vadd.f32 0.0, %v3647
  %3649 = vmatmul.bf16.gmra.mxu0 %v3564
  %v3650 = vpop.f32.mrf.mxu0
  %v3651 = vadd.f32 0.0, %v3650
  %v3652 = vpop.f32.mrf.mxu0
  %v3653 = vadd.f32 0.0, %v3652
  %3654 = vdwg.mxu0
  %v3655 = vmax.f32 %v3576, %v3641
  %v3656 = vmax.f32 %v3578, %v3643
  %v3657 = vmax.f32 %v3581, %v3646
  %v3658 = vmax.f32 %v3583, %v3648
  %v3659 = vmax.f32 %v3586, %v3651
  %v3660 = vmax.f32 %v3588, %v3653
  %s3661 = scalar_lea.vmem %s9, 24
  %v3662 = vld [vmem:[%s3661] sm:$0xf]
  %v3663 = vld [vmem:[%s3661 + $0x4] sm:$0xf]
  %v3664 = vld [vmem:[%s3661 + $0x8] sm:$0xf]
  %v3665 = vld [vmem:[%s3661 + $0xc] sm:$0xf]
  %v3666 = vld [vmem:[%s3661 + $0x10] sm:$0xf]
  %v3667 = vld [vmem:[%s3661 + $0x14] sm:$0xf]
  %v3674 = vunpack.c.l.b16 %v3662
  %v3675 = vunpack.c.l.b16 %v3663
  %v3676 = vunpack.c.l.b16 %v3664
  %v3677 = vunpack.c.l.b16 %v3665
  %v3678 = vunpack.c.l.b16 %v3666
  %v3679 = vunpack.c.l.b16 %v3667
  %v3680 = vpack.c.b16 %v3675, %v3674
  %v3681 = vpack.c.b16 %v3677, %v3676
  %v3682 = vpack.c.b16 %v3679, %v3678
  %v3684 = vsel %vm3480, %v3680, 0
  %v3687 = vsel %vm3480, %v3681, 0
  %v3690 = vsel %vm3480, %v3682, 0
  %3692 = vmatpush.bf16.msra.mxu0 0
  %3693 = vmatpush.bf16.msra.mxu0 0
  %3694 = vmatpush.bf16.msra.mxu0 0
  %3695 = vmatpush.bf16.msra.mxu0 %v3458
  %3696 = vmatpush.bf16.msra.mxu0 %v3457
  %3697 = vmatpush.bf16.msra.mxu0 %v3456
  %3698 = vmatpush.bf16.msra.mxu0 %v3455
  %3699 = vmatpush.bf16.msra.mxu0 %v3454
  %3700 = vmatmul.bf16.gmra.mxu0 %v3684
  %v3701 = vpop.f32.mrf.mxu0
  %v3702 = vadd.f32 0.0, %v3701
  %v3703 = vpop.f32.mrf.mxu0
  %v3704 = vadd.f32 0.0, %v3703
  %3705 = vmatmul.bf16.gmra.mxu0 %v3687
  %v3706 = vpop.f32.mrf.mxu0
  %v3707 = vadd.f32 0.0, %v3706
  %v3708 = vpop.f32.mrf.mxu0
  %v3709 = vadd.f32 0.0, %v3708
  %3710 = vmatmul.bf16.gmra.mxu0 %v3690
  %v3711 = vpop.f32.mrf.mxu0
  %v3712 = vadd.f32 0.0, %v3711
  %v3713 = vpop.f32.mrf.mxu0
  %v3714 = vadd.f32 0.0, %v3713
  %3715 = vdwg.mxu0
  %v3716 = vpack.c.bf16 %v3704, %v3702
  %v3717 = vpack.c.bf16 %v3709, %v3707
  %v3718 = vpack.c.bf16 %v3714, %v3712
  %v3720 = vsel %vm3480, %v3716, 0
  %v3723 = vsel %vm3480, %v3717, 0
  %v3726 = vsel %vm3480, %v3718, 0
  %3728 = vmatpush.bf16.msra.mxu0 0
  %3729 = vmatpush.bf16.msra.mxu0 0
  %3730 = vmatpush.bf16.msra.mxu0 0
  %3731 = vmatpush.bf16.msra.mxu0 %v3551
  %3732 = vmatpush.bf16.msra.mxu0 %v3550
  %3733 = vmatpush.bf16.msra.mxu0 %v3549
  %3734 = vmatpush.bf16.msra.mxu0 %v3548
  %3735 = vmatpush.bf16.msra.mxu0 %v3547
  %3736 = vmatmul.bf16.gmra.mxu0 %v3720
  %v3737 = vpop.f32.mrf.mxu0
  %v3738 = vadd.f32 0.0, %v3737
  %v3739 = vpop.f32.mrf.mxu0
  %v3740 = vadd.f32 0.0, %v3739
  %3741 = vmatmul.bf16.gmra.mxu0 %v3723
  %v3742 = vpop.f32.mrf.mxu0
  %v3743 = vadd.f32 0.0, %v3742
  %v3744 = vpop.f32.mrf.mxu0
  %v3745 = vadd.f32 0.0, %v3744
  %3746 = vmatmul.bf16.gmra.mxu0 %v3726
  %v3747 = vpop.f32.mrf.mxu0
  %v3748 = vadd.f32 0.0, %v3747
  %v3749 = vpop.f32.mrf.mxu0
  %v3750 = vadd.f32 0.0, %v3749
  %3751 = vdwg.mxu0
  %v3752 = vmax.f32 %v3655, %v3738
  %v3753 = vmax.f32 %v3656, %v3740
  %v3754 = vmax.f32 %v3657, %v3743
  %v3755 = vmax.f32 %v3658, %v3745
  %v3756 = vmax.f32 %v3659, %v3748
  %v3757 = vmax.f32 %v3660, %v3750
  %3758 = vmatpush.bf16.msra.mxu0 0
  %3759 = vmatpush.bf16.msra.mxu0 0
  %3760 = vmatpush.bf16.msra.mxu0 0
  %3761 = vmatpush.bf16.msra.mxu0 %v3625
  %3762 = vmatpush.bf16.msra.mxu0 %v3624
  %3763 = vmatpush.bf16.msra.mxu0 %v3623
  %3764 = vmatpush.bf16.msra.mxu0 %v3622
  %3765 = vmatpush.bf16.msra.mxu0 %v3621
  %3766 = vmatmul.bf16.gmra.mxu0 %v3720
  %v3767 = vpop.f32.mrf.mxu0
  %v3768 = vadd.f32 0.0, %v3767
  %v3769 = vpop.f32.mrf.mxu0
  %v3770 = vadd.f32 0.0, %v3769
  %3771 = vmatmul.bf16.gmra.mxu0 %v3723
  %v3772 = vpop.f32.mrf.mxu0
  %v3773 = vadd.f32 0.0, %v3772
  %v3774 = vpop.f32.mrf.mxu0
  %v3775 = vadd.f32 0.0, %v3774
  %3776 = vmatmul.bf16.gmra.mxu0 %v3726
  %v3777 = vpop.f32.mrf.mxu0
  %v3778 = vadd.f32 0.0, %v3777
  %v3779 = vpop.f32.mrf.mxu0
  %v3780 = vadd.f32 0.0, %v3779
  %3781 = vdwg.mxu0
  %v3782 = vmax.f32 %v3752, %v3768
  %v3783 = vmax.f32 %v3753, %v3770
  %v3784 = vmax.f32 %v3754, %v3773
  %v3785 = vmax.f32 %v3755, %v3775
  %v3786 = vmax.f32 %v3756, %v3778
  %v3787 = vmax.f32 %v3757, %v3780
  %v3788 = vmax.f32 %v3782, 0.0
  %v3789 = vmax.f32 %v3783, 0.0
  %v3790 = vmax.f32 %v3784, 0.0
  %v3791 = vmax.f32 %v3785, 0.0
  %v3792 = vmax.f32 %v3786, 0.0
  %v3793 = vmax.f32 %v3787, 0.0
  %v3794 = vpack.c.bf16 %v3789, %v3788
  %v3795 = vpack.c.bf16 %v3791, %v3790
  %v3796 = vpack.c.bf16 %v3793, %v3792
  %v3797 = vld [vmem:[%s13] sm:$0x7]
  %v3798 = vld [vmem:[%s11] sm:$0xf]
  %v3799 = vld [vmem:[%s11 + $0x4] sm:$0xf]
  %v3802 = vunpack.c.l.b16 %v3798
  %v3803 = vunpack.c.l.b16 %v3799
  %v3804 = vpack.c.b16 %v3803, %v3802
  %vm3805 = vcmask 392192
  %v3807 = vsel %vm3805, %v3804, 0
  %3809 = vmatpush.bf16.msra.mxu0 0
  %3810 = vmatpush.bf16.msra.mxu0 0
  %3811 = vmatpush.bf16.msra.mxu0 0
  %3812 = vmatpush.bf16.msra.mxu0 0
  %3813 = vmatpush.bf16.msra.mxu0 0
  %3814 = vmatpush.bf16.msra.mxu0 %v3796
  %3815 = vmatpush.bf16.msra.mxu0 %v3795
  %3816 = vmatpush.bf16.msra.mxu0 %v3794
  %3817 = vmatmul.bf16.gmra.mxu0 %v3807
  %v3818 = vpop.f32.mrf.mxu0
  %v3819 = vadd.f32 0.0, %v3818
  %v3820 = vpop.f32.mrf.mxu0
  %v3821 = vadd.f32 0.0, %v3820
  %3822 = vdwg.mxu0
  %v3823 = vpack.c.bf16 %v3821, %v3819
  %v3824 = vld [vmem:[%s12] sm:$0xff]
  %v3825 = vld [vmem:[%s12 + $0x8] sm:$0xf]
  %v3826 = vld [vmem:[%s12 + $0xc] sm:$0xff]
  %v3827 = vld [vmem:[%s12 + $0x14] sm:$0xf]
  %v3828 = vld [vmem:[%s12 + $0x18] sm:$0xff]
  %v3829 = vld [vmem:[%s12 + $0x20] sm:$0xf]
  %v3830 = vld [vmem:[%s12 + $0x24] sm:$0xff]
  %v3831 = vld [vmem:[%s12 + $0x2c] sm:$0xf]
  %v3832 = vld [vmem:[%s12 + $0x30] sm:$0xff]
  %v3833 = vld [vmem:[%s12 + $0x38] sm:$0xf]
  %v3834 = vld [vmem:[%s12 + $0x3c] sm:$0xff]
  %v3835 = vld [vmem:[%s12 + $0x44] sm:$0xf]
  %v3848 = vunpack.c.l.b16 %v3824
  %v3849 = vunpack.c.h.b16 %v3824
  %v3850 = vunpack.c.l.b16 %v3825
  %v3851 = vunpack.c.l.b16 %v3826
  %v3852 = vunpack.c.h.b16 %v3826
  %v3853 = vunpack.c.l.b16 %v3827
  %v3854 = vunpack.c.l.b16 %v3828
  %v3855 = vunpack.c.h.b16 %v3828
  %v3856 = vunpack.c.l.b16 %v3829
  %v3857 = vunpack.c.l.b16 %v3830
  %v3858 = vunpack.c.h.b16 %v3830
  %v3859 = vunpack.c.l.b16 %v3831
  %v3860 = vunpack.c.l.b16 %v3832
  %v3861 = vunpack.c.h.b16 %v3832
  %v3862 = vunpack.c.l.b16 %v3833
  %v3863 = vunpack.c.l.b16 %v3834
  %v3864 = vunpack.c.h.b16 %v3834
  %v3865 = vunpack.c.l.b16 %v3835
  %v3866 = vpack.c.b16 %v3851, %v3848
  %v3867 = vpack.c.b16 %v3852, %v3849
  %v3868 = vpack.c.b16 %v3853, %v3850
  %v3869 = vpack.c.b16 %v3857, %v3854
  %v3870 = vpack.c.b16 %v3858, %v3855
  %v3871 = vpack.c.b16 %v3859, %v3856
  %v3872 = vpack.c.b16 %v3863, %v3860
  %v3873 = vpack.c.b16 %v3864, %v3861
  %v3874 = vpack.c.b16 %v3865, %v3862
  %v3885 = vsel %vm3805, %v3823, 0
  %3887 = vmatpush.bf16.msra.mxu0 0
  %3888 = vmatpush.bf16.msra.mxu0 0
  %3889 = vmatpush.bf16.msra.mxu0 0
  %3890 = vmatpush.bf16.msra.mxu0 0
  %3891 = vmatpush.bf16.msra.mxu0 0
  %3892 = vmatpush.bf16.msra.mxu0 %v3872
  %3893 = vmatpush.bf16.msra.mxu0 %v3869
  %3894 = vmatpush.bf16.msra.mxu0 %v3866
  %3895 = vmatmul.bf16.gmra.mxu0 %v3885
  %v3896 = vpop.f32.mrf.mxu0
  %v3897 = vadd.f32 0.0, %v3896
  %v3898 = vpop.f32.mrf.mxu0
  %v3899 = vadd.f32 0.0, %v3898
  %3900 = vdwg.mxu0
  %3901 = vmatpush.bf16.msra.mxu0 0
  %3902 = vmatpush.bf16.msra.mxu0 0
  %3903 = vmatpush.bf16.msra.mxu0 0
  %3904 = vmatpush.bf16.msra.mxu0 0
  %3905 = vmatpush.bf16.msra.mxu0 0
  %3906 = vmatpush.bf16.msra.mxu0 %v3873
  %3907 = vmatpush.bf16.msra.mxu0 %v3870
  %3908 = vmatpush.bf16.msra.mxu0 %v3867
  %3909 = vmatmul.bf16.gmra.mxu0 %v3885
  %v3910 = vpop.f32.mrf.mxu0
  %v3911 = vadd.f32 0.0, %v3910
  %v3912 = vpop.f32.mrf.mxu0
  %v3913 = vadd.f32 0.0, %v3912
  %3914 = vdwg.mxu0
  %3915 = vmatpush.bf16.msra.mxu0 0
  %3916 = vmatpush.bf16.msra.mxu0 0
  %3917 = vmatpush.bf16.msra.mxu0 0
  %3918 = vmatpush.bf16.msra.mxu0 0
  %3919 = vmatpush.bf16.msra.mxu0 0
  %3920 = vmatpush.bf16.msra.mxu0 %v3874
  %3921 = vmatpush.bf16.msra.mxu0 %v3871
  %3922 = vmatpush.bf16.msra.mxu0 %v3868
  %3923 = vmatmul.bf16.gmra.mxu0 %v3885
  %v3924 = vpop.f32.mrf.mxu0
  %v3925 = vadd.f32 0.0, %v3924
  %v3926 = vpop.f32.mrf.mxu0
  %v3927 = vadd.f32 0.0, %v3926
  %3928 = vdwg.mxu0
  %v3930 = vperm.slane %v3797, 0
  %v3931 = vperm.slane %v3797, 1
  %v3932 = vperm.slane %v3797, 2
  %v3936 = vadd.f32 %v3930, %v3897
  %v3937 = vadd.f32 %v3931, %v3911
  %v3938 = vadd.f32 %v3932, %v3925
  %v3939 = vadd.f32 %v3930, %v3899
  %v3940 = vadd.f32 %v3931, %v3913
  %v3941 = vadd.f32 %v3932, %v3927
  %s3942 = scalar_lea.vmem %s11, 8
  %v3943 = vld [vmem:[%s3942] sm:$0xf]
  %v3944 = vld [vmem:[%s3942 + $0x4] sm:$0xf]
  %v3947 = vunpack.c.l.b16 %v3943
  %v3948 = vunpack.c.l.b16 %v3944
  %v3949 = vpack.c.b16 %v3948, %v3947
  %v3951 = vsel %vm3805, %v3949, 0
  %3953 = vmatpush.bf16.msra.mxu0 0
  %3954 = vmatpush.bf16.msra.mxu0 0
  %3955 = vmatpush.bf16.msra.mxu0 0
  %3956 = vmatpush.bf16.msra.mxu0 0
  %3957 = vmatpush.bf16.msra.mxu0 0
  %3958 = vmatpush.bf16.msra.mxu0 %v3796
  %3959 = vmatpush.bf16.msra.mxu0 %v3795
  %3960 = vmatpush.bf16.msra.mxu0 %v3794
  %3961 = vmatmul.bf16.gmra.mxu0 %v3951
  %v3962 = vpop.f32.mrf.mxu0
  %v3963 = vadd.f32 0.0, %v3962
  %v3964 = vpop.f32.mrf.mxu0
  %v3965 = vadd.f32 0.0, %v3964
  %3966 = vdwg.mxu0
  %v3967 = vpack.c.bf16 %v3965, %v3963
  %s3968 = scalar_lea.vmem %s12, 72
  %v3969 = vld [vmem:[%s3968] sm:$0xff]
  %v3970 = vld [vmem:[%s3968 + $0x8] sm:$0xf]
  %v3971 = vld [vmem:[%s3968 + $0xc] sm:$0xff]
  %v3972 = vld [vmem:[%s3968 + $0x14] sm:$0xf]
  %v3973 = vld [vmem:[%s3968 + $0x18] sm:$0xff]
  %v3974 = vld [vmem:[%s3968 + $0x20] sm:$0xf]
  %v3975 = vld [vmem:[%s3968 + $0x24] sm:$0xff]
  %v3976 = vld [vmem:[%s3968 + $0x2c] sm:$0xf]
  %v3977 = vld [vmem:[%s3968 + $0x30] sm:$0xff]
  %v3978 = vld [vmem:[%s3968 + $0x38] sm:$0xf]
  %v3979 = vld [vmem:[%s3968 + $0x3c] sm:$0xff]
  %v3980 = vld [vmem:[%s3968 + $0x44] sm:$0xf]
  %v3993 = vunpack.c.l.b16 %v3969
  %v3994 = vunpack.c.h.b16 %v3969
  %v3995 = vunpack.c.l.b16 %v3970
  %v3996 = vunpack.c.l.b16 %v3971
  %v3997 = vunpack.c.h.b16 %v3971
  %v3998 = vunpack.c.l.b16 %v3972
  %v3999 = vunpack.c.l.b16 %v3973
  %v4000 = vunpack.c.h.b16 %v3973
  %v4001 = vunpack.c.l.b16 %v3974
  %v4002 = vunpack.c.l.b16 %v3975
  %v4003 = vunpack.c.h.b16 %v3975
  %v4004 = vunpack.c.l.b16 %v3976
  %v4005 = vunpack.c.l.b16 %v3977
  %v4006 = vunpack.c.h.b16 %v3977
  %v4007 = vunpack.c.l.b16 %v3978
  %v4008 = vunpack.c.l.b16 %v3979
  %v4009 = vunpack.c.h.b16 %v3979
  %v4010 = vunpack.c.l.b16 %v3980
  %v4011 = vpack.c.b16 %v3996, %v3993
  %v4012 = vpack.c.b16 %v3997, %v3994
  %v4013 = vpack.c.b16 %v3998, %v3995
  %v4014 = vpack.c.b16 %v4002, %v3999
  %v4015 = vpack.c.b16 %v4003, %v4000
  %v4016 = vpack.c.b16 %v4004, %v4001
  %v4017 = vpack.c.b16 %v4008, %v4005
  %v4018 = vpack.c.b16 %v4009, %v4006
  %v4019 = vpack.c.b16 %v4010, %v4007
  %v4030 = vsel %vm3805, %v3967, 0
  %4032 = vmatpush.bf16.msra.mxu0 0
  %4033 = vmatpush.bf16.msra.mxu0 0
  %4034 = vmatpush.bf16.msra.mxu0 0
  %4035 = vmatpush.bf16.msra.mxu0 0
  %4036 = vmatpush.bf16.msra.mxu0 0
  %4037 = vmatpush.bf16.msra.mxu0 %v4017
  %4038 = vmatpush.bf16.msra.mxu0 %v4014
  %4039 = vmatpush.bf16.msra.mxu0 %v4011
  %4040 = vmatmul.bf16.gmra.mxu0 %v4030
  %v4041 = vpop.f32.mrf.mxu0
  %v4042 = vadd.f32 0.0, %v4041
  %v4043 = vpop.f32.mrf.mxu0
  %v4044 = vadd.f32 0.0, %v4043
  %4045 = vdwg.mxu0
  %4046 = vmatpush.bf16.msra.mxu0 0
  %4047 = vmatpush.bf16.msra.mxu0 0
  %4048 = vmatpush.bf16.msra.mxu0 0
  %4049 = vmatpush.bf16.msra.mxu0 0
  %4050 = vmatpush.bf16.msra.mxu0 0
  %4051 = vmatpush.bf16.msra.mxu0 %v4018
  %4052 = vmatpush.bf16.msra.mxu0 %v4015
  %4053 = vmatpush.bf16.msra.mxu0 %v4012
  %4054 = vmatmul.bf16.gmra.mxu0 %v4030
  %v4055 = vpop.f32.mrf.mxu0
  %v4056 = vadd.f32 0.0, %v4055
  %v4057 = vpop.f32.mrf.mxu0
  %v4058 = vadd.f32 0.0, %v4057
  %4059 = vdwg.mxu0
  %4060 = vmatpush.bf16.msra.mxu0 0
  %4061 = vmatpush.bf16.msra.mxu0 0
  %4062 = vmatpush.bf16.msra.mxu0 0
  %4063 = vmatpush.bf16.msra.mxu0 0
  %4064 = vmatpush.bf16.msra.mxu0 0
  %4065 = vmatpush.bf16.msra.mxu0 %v4019
  %4066 = vmatpush.bf16.msra.mxu0 %v4016
  %4067 = vmatpush.bf16.msra.mxu0 %v4013
  %4068 = vmatmul.bf16.gmra.mxu0 %v4030
  %v4069 = vpop.f32.mrf.mxu0
  %v4070 = vadd.f32 0.0, %v4069
  %v4071 = vpop.f32.mrf.mxu0
  %v4072 = vadd.f32 0.0, %v4071
  %4073 = vdwg.mxu0
  %v4074 = vadd.f32 %v3936, %v4042
  %v4075 = vadd.f32 %v3937, %v4056
  %v4076 = vadd.f32 %v3938, %v4070
  %v4077 = vadd.f32 %v3939, %v4044
  %v4078 = vadd.f32 %v3940, %v4058
  %v4079 = vadd.f32 %v3941, %v4072
  %s4080 = scalar_lea.vmem %s11, 16
  %v4081 = vld [vmem:[%s4080] sm:$0xf]
  %v4082 = vld [vmem:[%s4080 + $0x4] sm:$0xf]
  %v4085 = vunpack.c.l.b16 %v4081
  %v4086 = vunpack.c.l.b16 %v4082
  %v4087 = vpack.c.b16 %v4086, %v4085
  %v4089 = vsel %vm3805, %v4087, 0
  %4091 = vmatpush.bf16.msra.mxu0 0
  %4092 = vmatpush.bf16.msra.mxu0 0
  %4093 = vmatpush.bf16.msra.mxu0 0
  %4094 = vmatpush.bf16.msra.mxu0 0
  %4095 = vmatpush.bf16.msra.mxu0 0
  %4096 = vmatpush.bf16.msra.mxu0 %v3796
  %4097 = vmatpush.bf16.msra.mxu0 %v3795
  %4098 = vmatpush.bf16.msra.mxu0 %v3794
  %4099 = vmatmul.bf16.gmra.mxu0 %v4089
  %v4100 = vpop.f32.mrf.mxu0
  %v4101 = vadd.f32 0.0, %v4100
  %v4102 = vpop.f32.mrf.mxu0
  %v4103 = vadd.f32 0.0, %v4102
  %4104 = vdwg.mxu0
  %v4105 = vpack.c.bf16 %v4103, %v4101
  %s4106 = scalar_lea.vmem %s12, 144
  %v4107 = vld [vmem:[%s4106] sm:$0xff]
  %v4108 = vld [vmem:[%s4106 + $0x8] sm:$0xf]
  %v4109 = vld [vmem:[%s4106 + $0xc] sm:$0xff]
  %v4110 = vld [vmem:[%s4106 + $0x14] sm:$0xf]
  %v4111 = vld [vmem:[%s4106 + $0x18] sm:$0xff]
  %v4112 = vld [vmem:[%s4106 + $0x20] sm:$0xf]
  %v4113 = vld [vmem:[%s4106 + $0x24] sm:$0xff]
  %v4114 = vld [vmem:[%s4106 + $0x2c] sm:$0xf]
  %v4115 = vld [vmem:[%s4106 + $0x30] sm:$0xff]
  %v4116 = vld [vmem:[%s4106 + $0x38] sm:$0xf]
  %v4117 = vld [vmem:[%s4106 + $0x3c] sm:$0xff]
  %v4118 = vld [vmem:[%s4106 + $0x44] sm:$0xf]
  %v4131 = vunpack.c.l.b16 %v4107
  %v4132 = vunpack.c.h.b16 %v4107
  %v4133 = vunpack.c.l.b16 %v4108
  %v4134 = vunpack.c.l.b16 %v4109
  %v4135 = vunpack.c.h.b16 %v4109
  %v4136 = vunpack.c.l.b16 %v4110
  %v4137 = vunpack.c.l.b16 %v4111
  %v4138 = vunpack.c.h.b16 %v4111
  %v4139 = vunpack.c.l.b16 %v4112
  %v4140 = vunpack.c.l.b16 %v4113
  %v4141 = vunpack.c.h.b16 %v4113
  %v4142 = vunpack.c.l.b16 %v4114
  %v4143 = vunpack.c.l.b16 %v4115
  %v4144 = vunpack.c.h.b16 %v4115
  %v4145 = vunpack.c.l.b16 %v4116
  %v4146 = vunpack.c.l.b16 %v4117
  %v4147 = vunpack.c.h.b16 %v4117
  %v4148 = vunpack.c.l.b16 %v4118
  %v4149 = vpack.c.b16 %v4134, %v4131
  %v4150 = vpack.c.b16 %v4135, %v4132
  %v4151 = vpack.c.b16 %v4136, %v4133
  %v4152 = vpack.c.b16 %v4140, %v4137
  %v4153 = vpack.c.b16 %v4141, %v4138
  %v4154 = vpack.c.b16 %v4142, %v4139
  %v4155 = vpack.c.b16 %v4146, %v4143
  %v4156 = vpack.c.b16 %v4147, %v4144
  %v4157 = vpack.c.b16 %v4148, %v4145
  %v4168 = vsel %vm3805, %v4105, 0
  %4170 = vmatpush.bf16.msra.mxu0 0
  %4171 = vmatpush.bf16.msra.mxu0 0
  %4172 = vmatpush.bf16.msra.mxu0 0
  %4173 = vmatpush.bf16.msra.mxu0 0
  %4174 = vmatpush.bf16.msra.mxu0 0
  %4175 = vmatpush.bf16.msra.mxu0 %v4155
  %4176 = vmatpush.bf16.msra.mxu0 %v4152
  %4177 = vmatpush.bf16.msra.mxu0 %v4149
  %4178 = vmatmul.bf16.gmra.mxu0 %v4168
  %v4179 = vpop.f32.mrf.mxu0
  %v4180 = vadd.f32 0.0, %v4179
  %v4181 = vpop.f32.mrf.mxu0
  %v4182 = vadd.f32 0.0, %v4181
  %4183 = vdwg.mxu0
  %4184 = vmatpush.bf16.msra.mxu0 0
  %4185 = vmatpush.bf16.msra.mxu0 0
  %4186 = vmatpush.bf16.msra.mxu0 0
  %4187 = vmatpush.bf16.msra.mxu0 0
  %4188 = vmatpush.bf16.msra.mxu0 0
  %4189 = vmatpush.bf16.msra.mxu0 %v4156
  %4190 = vmatpush.bf16.msra.mxu0 %v4153
  %4191 = vmatpush.bf16.msra.mxu0 %v4150
  %4192 = vmatmul.bf16.gmra.mxu0 %v4168
  %v4193 = vpop.f32.mrf.mxu0
  %v4194 = vadd.f32 0.0, %v4193
  %v4195 = vpop.f32.mrf.mxu0
  %v4196 = vadd.f32 0.0, %v4195
  %4197 = vdwg.mxu0
  %4198 = vmatpush.bf16.msra.mxu0 0
  %4199 = vmatpush.bf16.msra.mxu0 0
  %4200 = vmatpush.bf16.msra.mxu0 0
  %4201 = vmatpush.bf16.msra.mxu0 0
  %4202 = vmatpush.bf16.msra.mxu0 0
  %4203 = vmatpush.bf16.msra.mxu0 %v4157
  %4204 = vmatpush.bf16.msra.mxu0 %v4154
  %4205 = vmatpush.bf16.msra.mxu0 %v4151
  %4206 = vmatmul.bf16.gmra.mxu0 %v4168
  %v4207 = vpop.f32.mrf.mxu0
  %v4208 = vadd.f32 0.0, %v4207
  %v4209 = vpop.f32.mrf.mxu0
  %v4210 = vadd.f32 0.0, %v4209
  %4211 = vdwg.mxu0
  %v4212 = vadd.f32 %v4074, %v4180
  %v4213 = vadd.f32 %v4075, %v4194
  %v4214 = vadd.f32 %v4076, %v4208
  %v4215 = vadd.f32 %v4077, %v4182
  %v4216 = vadd.f32 %v4078, %v4196
  %v4217 = vadd.f32 %v4079, %v4210
  %v4218 = vmax.f32 %v4212, 0.0
  %v4219 = vmax.f32 %v4213, 0.0
  %v4220 = vmax.f32 %v4214, 0.0
  %v4221 = vmax.f32 %v4215, 0.0
  %v4222 = vmax.f32 %v4216, 0.0
  %v4223 = vmax.f32 %v4217, 0.0
  %v4224 = vpack.c.bf16 %v4221, %v4218
  %v4225 = vpack.c.bf16 %v4222, %v4219
  %v4226 = vpack.c.bf16 %v4223, %v4220
  %v4227 = vld [vmem:[%s14] sm:$0xff]
  %v4228 = vld [vmem:[%s14 + $0x8] sm:$0xf]
  %v4229 = vld [vmem:[%s14 + $0xc] sm:$0xff]
  %v4230 = vld [vmem:[%s14 + $0x14] sm:$0xf]
  %v4231 = vld [vmem:[%s14 + $0x18] sm:$0xff]
  %v4232 = vld [vmem:[%s14 + $0x20] sm:$0xf]
  %v4233 = vld [vmem:[%s14 + $0x24] sm:$0xff]
  %v4234 = vld [vmem:[%s14 + $0x2c] sm:$0xf]
  %v4235 = vld [vmem:[%s14 + $0x30] sm:$0xff]
  %v4236 = vld [vmem:[%s14 + $0x38] sm:$0xf]
  %v4237 = vld [vmem:[%s14 + $0x3c] sm:$0xff]
  %v4238 = vld [vmem:[%s14 + $0x44] sm:$0xf]
  %v4239 = vld [vmem:[%s14 + $0x48] sm:$0xff]
  %v4240 = vld [vmem:[%s14 + $0x50] sm:$0xf]
  %v4241 = vld [vmem:[%s14 + $0x54] sm:$0xff]
  %v4242 = vld [vmem:[%s14 + $0x5c] sm:$0xf]
  %v4243 = vld [vmem:[%s14 + $0x60] sm:$0xff]
  %v4244 = vld [vmem:[%s14 + $0x68] sm:$0xf]
  %v4245 = vld [vmem:[%s14 + $0x6c] sm:$0xff]
  %v4246 = vld [vmem:[%s14 + $0x74] sm:$0xf]
  %v4247 = vld [vmem:[%s14 + $0x78] sm:$0xff]
  %v4248 = vld [vmem:[%s14 + $0x80] sm:$0xf]
  %v4249 = vld [vmem:[%s14 + $0x84] sm:$0xff]
  %v4250 = vld [vmem:[%s14 + $0x8c] sm:$0xf]
  %v4251 = vld [vmem:[%s14 + $0x90] sm:$0xff]
  %v4252 = vld [vmem:[%s14 + $0x98] sm:$0xf]
  %v4253 = vld [vmem:[%s14 + $0x9c] sm:$0xff]
  %v4254 = vld [vmem:[%s14 + $0xa4] sm:$0xf]
  %v4255 = vld [vmem:[%s14 + $0xa8] sm:$0xff]
  %v4256 = vld [vmem:[%s14 + $0xb0] sm:$0xf]
  %v4257 = vld [vmem:[%s14 + $0xb4] sm:$0xff]
  %v4258 = vld [vmem:[%s14 + $0xbc] sm:$0xf]
  %v4259 = vld [vmem:[%s14 + $0xc0] sm:$0xff]
  %v4260 = vld [vmem:[%s14 + $0xc8] sm:$0xf]
  %v4261 = vld [vmem:[%s14 + $0xcc] sm:$0xff]
  %v4262 = vld [vmem:[%s14 + $0xd4] sm:$0xf]
  %v4263 = vld [vmem:[%s14 + $0xd8] sm:$0xff]
  %v4264 = vld [vmem:[%s14 + $0xe0] sm:$0xf]
  %v4265 = vld [vmem:[%s14 + $0xe4] sm:$0xff]
  %v4266 = vld [vmem:[%s14 + $0xec] sm:$0xf]
  %v4267 = vld [vmem:[%s14 + $0xf0] sm:$0xff]
  %v4268 = vld [vmem:[%s14 + $0xf8] sm:$0xf]
  %v4269 = vld [vmem:[%s14 + $0xfc] sm:$0xff]
  %v4270 = vld [vmem:[%s14 + $0x104] sm:$0xf]
  %v4271 = vld [vmem:[%s14 + $0x108] sm:$0xff]
  %v4272 = vld [vmem:[%s14 + $0x110] sm:$0xf]
  %v4273 = vld [vmem:[%s14 + $0x114] sm:$0xff]
  %v4274 = vld [vmem:[%s14 + $0x11c] sm:$0xf]
  %v4275 = vld [vmem:[%s14 + $0x120] sm:$0xff]
  %v4276 = vld [vmem:[%s14 + $0x128] sm:$0xf]
  %v4277 = vld [vmem:[%s14 + $0x12c] sm:$0xff]
  %v4278 = vld [vmem:[%s14 + $0x134] sm:$0xf]
  %v4279 = vld [vmem:[%s14 + $0x138] sm:$0xff]
  %v4280 = vld [vmem:[%s14 + $0x140] sm:$0xf]
  %v4281 = vld [vmem:[%s14 + $0x144] sm:$0xff]
  %v4282 = vld [vmem:[%s14 + $0x14c] sm:$0xf]
  %v4283 = vld [vmem:[%s14 + $0x150] sm:$0xff]
  %v4284 = vld [vmem:[%s14 + $0x158] sm:$0xf]
  %v4285 = vld [vmem:[%s14 + $0x15c] sm:$0xff]
  %v4286 = vld [vmem:[%s14 + $0x164] sm:$0xf]
  %v4287 = vld [vmem:[%s14 + $0x168] sm:$0xff]
  %v4288 = vld [vmem:[%s14 + $0x170] sm:$0xf]
  %v4289 = vld [vmem:[%s14 + $0x174] sm:$0xff]
  %v4290 = vld [vmem:[%s14 + $0x17c] sm:$0xf]
  %v4291 = vld [vmem:[%s14 + $0x180] sm:$0xff]
  %v4292 = vld [vmem:[%s14 + $0x188] sm:$0xf]
  %v4293 = vld [vmem:[%s14 + $0x18c] sm:$0xff]
  %v4294 = vld [vmem:[%s14 + $0x194] sm:$0xf]
  %v4295 = vld [vmem:[%s14 + $0x198] sm:$0xff]
  %v4296 = vld [vmem:[%s14 + $0x1a0] sm:$0xf]
  %v4297 = vld [vmem:[%s14 + $0x1a4] sm:$0xff]
  %v4298 = vld [vmem:[%s14 + $0x1ac] sm:$0xf]
  %v4299 = vld [vmem:[%s15] sm:$0x7]
  %v4301 = vperm.slane %v4299, 0
  %v4302 = vperm.slane %v4299, 1
  %v4303 = vperm.slane %v4299, 2
  %v4379 = vunpack.c.l.b16 %v4227
  %v4380 = vunpack.c.h.b16 %v4227
  %v4381 = vunpack.c.l.b16 %v4228
  %v4382 = vunpack.c.l.b16 %v4229
  %v4383 = vunpack.c.h.b16 %v4229
  %v4384 = vunpack.c.l.b16 %v4230
  %v4385 = vunpack.c.l.b16 %v4231
  %v4386 = vunpack.c.h.b16 %v4231
  %v4387 = vunpack.c.l.b16 %v4232
  %v4388 = vunpack.c.l.b16 %v4233
  %v4389 = vunpack.c.h.b16 %v4233
  %v4390 = vunpack.c.l.b16 %v4234
  %v4391 = vunpack.c.l.b16 %v4235
  %v4392 = vunpack.c.h.b16 %v4235
  %v4393 = vunpack.c.l.b16 %v4236
  %v4394 = vunpack.c.l.b16 %v4237
  %v4395 = vunpack.c.h.b16 %v4237
  %v4396 = vunpack.c.l.b16 %v4238
  %v4397 = vunpack.c.l.b16 %v4239
  %v4398 = vunpack.c.h.b16 %v4239
  %v4399 = vunpack.c.l.b16 %v4240
  %v4400 = vunpack.c.l.b16 %v4241
  %v4401 = vunpack.c.h.b16 %v4241
  %v4402 = vunpack.c.l.b16 %v4242
  %v4403 = vunpack.c.l.b16 %v4243
  %v4404 = vunpack.c.h.b16 %v4243
  %v4405 = vunpack.c.l.b16 %v4244
  %v4406 = vunpack.c.l.b16 %v4245
  %v4407 = vunpack.c.h.b16 %v4245
  %v4408 = vunpack.c.l.b16 %v4246
  %v4409 = vunpack.c.l.b16 %v4247
  %v4410 = vunpack.c.h.b16 %v4247
  %v4411 = vunpack.c.l.b16 %v4248
  %v4412 = vunpack.c.l.b16 %v4249
  %v4413 = vunpack.c.h.b16 %v4249
  %v4414 = vunpack.c.l.b16 %v4250
  %v4415 = vunpack.c.l.b16 %v4251
  %v4416 = vunpack.c.h.b16 %v4251
  %v4417 = vunpack.c.l.b16 %v4252
  %v4418 = vunpack.c.l.b16 %v4253
  %v4419 = vunpack.c.h.b16 %v4253
  %v4420 = vunpack.c.l.b16 %v4254
  %v4421 = vunpack.c.l.b16 %v4255
  %v4422 = vunpack.c.h.b16 %v4255
  %v4423 = vunpack.c.l.b16 %v4256
  %v4424 = vunpack.c.l.b16 %v4257
  %v4425 = vunpack.c.h.b16 %v4257
  %v4426 = vunpack.c.l.b16 %v4258
  %v4427 = vunpack.c.l.b16 %v4259
  %v4428 = vunpack.c.h.b16 %v4259
  %v4429 = vunpack.c.l.b16 %v4260
  %v4430 = vunpack.c.l.b16 %v4261
  %v4431 = vunpack.c.h.b16 %v4261
  %v4432 = vunpack.c.l.b16 %v4262
  %v4433 = vunpack.c.l.b16 %v4263
  %v4434 = vunpack.c.h.b16 %v4263
  %v4435 = vunpack.c.l.b16 %v4264
  %v4436 = vunpack.c.l.b16 %v4265
  %v4437 = vunpack.c.h.b16 %v4265
  %v4438 = vunpack.c.l.b16 %v4266
  %v4439 = vunpack.c.l.b16 %v4267
  %v4440 = vunpack.c.h.b16 %v4267
  %v4441 = vunpack.c.l.b16 %v4268
  %v4442 = vunpack.c.l.b16 %v4269
  %v4443 = vunpack.c.h.b16 %v4269
  %v4444 = vunpack.c.l.b16 %v4270
  %v4445 = vunpack.c.l.b16 %v4271
  %v4446 = vunpack.c.h.b16 %v4271
  %v4447 = vunpack.c.l.b16 %v4272
  %v4448 = vunpack.c.l.b16 %v4273
  %v4449 = vunpack.c.h.b16 %v4273
  %v4450 = vunpack.c.l.b16 %v4274
  %v4451 = vunpack.c.l.b16 %v4275
  %v4452 = vunpack.c.h.b16 %v4275
  %v4453 = vunpack.c.l.b16 %v4276
  %v4454 = vunpack.c.l.b16 %v4277
  %v4455 = vunpack.c.h.b16 %v4277
  %v4456 = vunpack.c.l.b16 %v4278
  %v4457 = vunpack.c.l.b16 %v4279
  %v4458 = vunpack.c.h.b16 %v4279
  %v4459 = vunpack.c.l.b16 %v4280
  %v4460 = vunpack.c.l.b16 %v4281
  %v4461 = vunpack.c.h.b16 %v4281
  %v4462 = vunpack.c.l.b16 %v4282
  %v4463 = vunpack.c.l.b16 %v4283
  %v4464 = vunpack.c.h.b16 %v4283
  %v4465 = vunpack.c.l.b16 %v4284
  %v4466 = vunpack.c.l.b16 %v4285
  %v4467 = vunpack.c.h.b16 %v4285
  %v4468 = vunpack.c.l.b16 %v4286
  %v4469 = vunpack.c.l.b16 %v4287
  %v4470 = vunpack.c.h.b16 %v4287
  %v4471 = vunpack.c.l.b16 %v4288
  %v4472 = vunpack.c.l.b16 %v4289
  %v4473 = vunpack.c.h.b16 %v4289
  %v4474 = vunpack.c.l.b16 %v4290
  %v4475 = vunpack.c.l.b16 %v4291
  %v4476 = vunpack.c.h.b16 %v4291
  %v4477 = vunpack.c.l.b16 %v4292
  %v4478 = vunpack.c.l.b16 %v4293
  %v4479 = vunpack.c.h.b16 %v4293
  %v4480 = vunpack.c.l.b16 %v4294
  %v4481 = vunpack.c.l.b16 %v4295
  %v4482 = vunpack.c.h.b16 %v4295
  %v4483 = vunpack.c.l.b16 %v4296
  %v4484 = vunpack.c.l.b16 %v4297
  %v4485 = vunpack.c.h.b16 %v4297
  %v4486 = vunpack.c.l.b16 %v4298
  %v4487 = vpack.c.b16 %v4382, %v4379
  %v4488 = vpack.c.b16 %v4383, %v4380
  %v4489 = vpack.c.b16 %v4384, %v4381
  %v4490 = vpack.c.b16 %v4388, %v4385
  %v4491 = vpack.c.b16 %v4389, %v4386
  %v4492 = vpack.c.b16 %v4390, %v4387
  %v4493 = vpack.c.b16 %v4394, %v4391
  %v4494 = vpack.c.b16 %v4395, %v4392
  %v4495 = vpack.c.b16 %v4396, %v4393
  %v4496 = vpack.c.b16 %v4400, %v4397
  %v4497 = vpack.c.b16 %v4401, %v4398
  %v4498 = vpack.c.b16 %v4402, %v4399
  %v4499 = vpack.c.b16 %v4406, %v4403
  %v4500 = vpack.c.b16 %v4407, %v4404
  %v4501 = vpack.c.b16 %v4408, %v4405
  %v4502 = vpack.c.b16 %v4412, %v4409
  %v4503 = vpack.c.b16 %v4413, %v4410
  %v4504 = vpack.c.b16 %v4414, %v4411
  %v4505 = vpack.c.b16 %v4418, %v4415
  %v4506 = vpack.c.b16 %v4419, %v4416
  %v4507 = vpack.c.b16 %v4420, %v4417
  %v4508 = vpack.c.b16 %v4424, %v4421
  %v4509 = vpack.c.b16 %v4425, %v4422
  %v4510 = vpack.c.b16 %v4426, %v4423
  %v4511 = vpack.c.b16 %v4430, %v4427
  %v4512 = vpack.c.b16 %v4431, %v4428
  %v4513 = vpack.c.b16 %v4432, %v4429
  %v4514 = vpack.c.b16 %v4436, %v4433
  %v4515 = vpack.c.b16 %v4437, %v4434
  %v4516 = vpack.c.b16 %v4438, %v4435
  %v4517 = vpack.c.b16 %v4442, %v4439
  %v4518 = vpack.c.b16 %v4443, %v4440
  %v4519 = vpack.c.b16 %v4444, %v4441
  %v4520 = vpack.c.b16 %v4448, %v4445
  %v4521 = vpack.c.b16 %v4449, %v4446
  %v4522 = vpack.c.b16 %v4450, %v4447
  %v4523 = vpack.c.b16 %v4454, %v4451
  %v4524 = vpack.c.b16 %v4455, %v4452
  %v4525 = vpack.c.b16 %v4456, %v4453
  %v4526 = vpack.c.b16 %v4460, %v4457
  %v4527 = vpack.c.b16 %v4461, %v4458
  %v4528 = vpack.c.b16 %v4462, %v4459
  %v4529 = vpack.c.b16 %v4466, %v4463
  %v4530 = vpack.c.b16 %v4467, %v4464
  %v4531 = vpack.c.b16 %v4468, %v4465
  %v4532 = vpack.c.b16 %v4472, %v4469
  %v4533 = vpack.c.b16 %v4473, %v4470
  %v4534 = vpack.c.b16 %v4474, %v4471
  %v4535 = vpack.c.b16 %v4478, %v4475
  %v4536 = vpack.c.b16 %v4479, %v4476
  %v4537 = vpack.c.b16 %v4480, %v4477
  %v4538 = vpack.c.b16 %v4484, %v4481
  %v4539 = vpack.c.b16 %v4485, %v4482
  %v4540 = vpack.c.b16 %v4486, %v4483
  %vm4595 = vcmask 261120
  %v4597 = vsel %vm4595, %v4226, 0
  %4599 = vmatpush.bf16.msra.mxu0 %v4508
  %4600 = vmatpush.bf16.msra.mxu0 %v4505
  %4601 = vmatpush.bf16.msra.mxu0 %v4502
  %4602 = vmatpush.bf16.msra.mxu0 %v4499
  %4603 = vmatpush.bf16.msra.mxu0 %v4496
  %4604 = vmatpush.bf16.msra.mxu0 %v4493
  %4605 = vmatpush.bf16.msra.mxu0 %v4490
  %4606 = vmatpush.bf16.msra.mxu0 %v4487
  %4607 = vmatmul.bf16.gmra.mxu0 %v4224
  %v4608 = vpop.f32.mrf.mxu0
  %v4609 = vadd.f32 %v4301, %v4608
  %v4610 = vpop.f32.mrf.mxu0
  %v4611 = vadd.f32 %v4301, %v4610
  %4612 = vdwg.mxu0
  %4613 = vmatpush.bf16.msra.mxu0 %v4532
  %4614 = vmatpush.bf16.msra.mxu0 %v4529
  %4615 = vmatpush.bf16.msra.mxu0 %v4526
  %4616 = vmatpush.bf16.msra.mxu0 %v4523
  %4617 = vmatpush.bf16.msra.mxu0 %v4520
  %4618 = vmatpush.bf16.msra.mxu0 %v4517
  %4619 = vmatpush.bf16.msra.mxu0 %v4514
  %4620 = vmatpush.bf16.msra.mxu0 %v4511
  %4621 = vmatmul.bf16.gmra.mxu0 %v4225
  %v4622 = vpop.f32.mrf.mxu0
  %v4623 = vadd.f32 %v4609, %v4622
  %v4624 = vpop.f32.mrf.mxu0
  %v4625 = vadd.f32 %v4611, %v4624
  %4626 = vdwg.mxu0
  %4627 = vmatpush.bf16.msra.mxu0 0
  %4628 = vmatpush.bf16.msra.mxu0 0
  %4629 = vmatpush.bf16.msra.mxu0 0
  %4630 = vmatpush.bf16.msra.mxu0 0
  %4631 = vmatpush.bf16.msra.mxu0 0
  %4632 = vmatpush.bf16.msra.mxu0 0
  %4633 = vmatpush.bf16.msra.mxu0 %v4538
  %4634 = vmatpush.bf16.msra.mxu0 %v4535
  %4635 = vmatmul.bf16.gmra.mxu0 %v4597
  %v4636 = vpop.f32.mrf.mxu0
  %v4637 = vadd.f32 %v4623, %v4636
  %v4638 = vpop.f32.mrf.mxu0
  %v4639 = vadd.f32 %v4625, %v4638
  %4640 = vdwg.mxu0
  %4641 = vmatpush.bf16.msra.mxu0 %v4509
  %4642 = vmatpush.bf16.msra.mxu0 %v4506
  %4643 = vmatpush.bf16.msra.mxu0 %v4503
  %4644 = vmatpush.bf16.msra.mxu0 %v4500
  %4645 = vmatpush.bf16.msra.mxu0 %v4497
  %4646 = vmatpush.bf16.msra.mxu0 %v4494
  %4647 = vmatpush.bf16.msra.mxu0 %v4491
  %4648 = vmatpush.bf16.msra.mxu0 %v4488
  %4649 = vmatmul.bf16.gmra.mxu0 %v4224
  %v4650 = vpop.f32.mrf.mxu0
  %v4651 = vadd.f32 %v4302, %v4650
  %v4652 = vpop.f32.mrf.mxu0
  %v4653 = vadd.f32 %v4302, %v4652
  %4654 = vdwg.mxu0
  %4655 = vmatpush.bf16.msra.mxu0 %v4533
  %4656 = vmatpush.bf16.msra.mxu0 %v4530
  %4657 = vmatpush.bf16.msra.mxu0 %v4527
  %4658 = vmatpush.bf16.msra.mxu0 %v4524
  %4659 = vmatpush.bf16.msra.mxu0 %v4521
  %4660 = vmatpush.bf16.msra.mxu0 %v4518
  %4661 = vmatpush.bf16.msra.mxu0 %v4515
  %4662 = vmatpush.bf16.msra.mxu0 %v4512
  %4663 = vmatmul.bf16.gmra.mxu0 %v4225
  %v4664 = vpop.f32.mrf.mxu0
  %v4665 = vadd.f32 %v4651, %v4664
  %v4666 = vpop.f32.mrf.mxu0
  %v4667 = vadd.f32 %v4653, %v4666
  %4668 = vdwg.mxu0
  %4669 = vmatpush.bf16.msra.mxu0 0
  %4670 = vmatpush.bf16.msra.mxu0 0
  %4671 = vmatpush.bf16.msra.mxu0 0
  %4672 = vmatpush.bf16.msra.mxu0 0
  %4673 = vmatpush.bf16.msra.mxu0 0
  %4674 = vmatpush.bf16.msra.mxu0 0
  %4675 = vmatpush.bf16.msra.mxu0 %v4539
  %4676 = vmatpush.bf16.msra.mxu0 %v4536
  %4677 = vmatmul.bf16.gmra.mxu0 %v4597
  %v4678 = vpop.f32.mrf.mxu0
  %v4679 = vadd.f32 %v4665, %v4678
  %v4680 = vpop.f32.mrf.mxu0
  %v4681 = vadd.f32 %v4667, %v4680
  %4682 = vdwg.mxu0
  %4683 = vmatpush.bf16.msra.mxu0 %v4510
  %4684 = vmatpush.bf16.msra.mxu0 %v4507
  %4685 = vmatpush.bf16.msra.mxu0 %v4504
  %4686 = vmatpush.bf16.msra.mxu0 %v4501
  %4687 = vmatpush.bf16.msra.mxu0 %v4498
  %4688 = vmatpush.bf16.msra.mxu0 %v4495
  %4689 = vmatpush.bf16.msra.mxu0 %v4492
  %4690 = vmatpush.bf16.msra.mxu0 %v4489
  %4691 = vmatmul.bf16.gmra.mxu0 %v4224
  %v4692 = vpop.f32.mrf.mxu0
  %v4693 = vadd.f32 %v4303, %v4692
  %v4694 = vpop.f32.mrf.mxu0
  %v4695 = vadd.f32 %v4303, %v4694
  %4696 = vdwg.mxu0
  %4697 = vmatpush.bf16.msra.mxu0 %v4534
  %4698 = vmatpush.bf16.msra.mxu0 %v4531
  %4699 = vmatpush.bf16.msra.mxu0 %v4528
  %4700 = vmatpush.bf16.msra.mxu0 %v4525
  %4701 = vmatpush.bf16.msra.mxu0 %v4522
  %4702 = vmatpush.bf16.msra.mxu0 %v4519
  %4703 = vmatpush.bf16.msra.mxu0 %v4516
  %4704 = vmatpush.bf16.msra.mxu0 %v4513
  %4705 = vmatmul.bf16.gmra.mxu0 %v4225
  %v4706 = vpop.f32.mrf.mxu0
  %v4707 = vadd.f32 %v4693, %v4706
  %v4708 = vpop.f32.mrf.mxu0
  %v4709 = vadd.f32 %v4695, %v4708
  %4710 = vdwg.mxu0
  %4711 = vmatpush.bf16.msra.mxu0 0
  %4712 = vmatpush.bf16.msra.mxu0 0
  %4713 = vmatpush.bf16.msra.mxu0 0
  %4714 = vmatpush.bf16.msra.mxu0 0
  %4715 = vmatpush.bf16.msra.mxu0 0
  %4716 = vmatpush.bf16.msra.mxu0 0
  %4717 = vmatpush.bf16.msra.mxu0 %v4540
  %4718 = vmatpush.bf16.msra.mxu0 %v4537
  %4719 = vmatmul.bf16.gmra.mxu0 %v4597
  %v4720 = vpop.f32.mrf.mxu0
  %v4721 = vadd.f32 %v4707, %v4720
  %v4722 = vpop.f32.mrf.mxu0
  %v4723 = vadd.f32 %v4709, %v4722
  %4724 = vdwg.mxu0
  %v4725 = vmax.f32 %v4637, 0.0
  %v4726 = vmax.f32 %v4679, 0.0
  %v4727 = vmax.f32 %v4721, 0.0
  %v4728 = vmax.f32 %v4639, 0.0
  %v4729 = vmax.f32 %v4681, 0.0
  %v4730 = vmax.f32 %v4723, 0.0
  %v4731 = vpack.c.bf16 %v4728, %v4725
  %v4732 = vpack.c.bf16 %v4729, %v4726
  %v4733 = vpack.c.bf16 %v4730, %v4727
  %v4734 = vld [vmem:[%s16] sm:$0xf]
  %v4735 = vld [vmem:[%s16 + $0x4] sm:$0xf]
  %v4736 = vld [vmem:[%s16 + $0x8] sm:$0xf]
  %v4737 = vld [vmem:[%s16 + $0xc] sm:$0xf]
  %v4738 = vld [vmem:[%s16 + $0x10] sm:$0xf]
  %v4739 = vld [vmem:[%s16 + $0x14] sm:$0xf]
  %v4740 = vld [vmem:[%s16 + $0x18] sm:$0xf]
  %v4741 = vld [vmem:[%s16 + $0x1c] sm:$0xf]
  %v4742 = vld [vmem:[%s16 + $0x20] sm:$0xf]
  %v4743 = vld [vmem:[%s16 + $0x24] sm:$0xf]
  %v4744 = vld [vmem:[%s16 + $0x28] sm:$0xf]
  %v4745 = vld [vmem:[%s16 + $0x2c] sm:$0xf]
  %v4746 = vld [vmem:[%s16 + $0x30] sm:$0xf]
  %v4747 = vld [vmem:[%s16 + $0x34] sm:$0xf]
  %v4748 = vld [vmem:[%s16 + $0x38] sm:$0xf]
  %v4749 = vld [vmem:[%s16 + $0x3c] sm:$0xf]
  %v4750 = vld [vmem:[%s16 + $0x40] sm:$0xf]
  %v4751 = vld [vmem:[%s16 + $0x44] sm:$0xf]
  %v4752 = vld [vmem:[%s16 + $0x48] sm:$0xf]
  %v4753 = vld [vmem:[%s16 + $0x4c] sm:$0xf]
  %v4754 = vld [vmem:[%s16 + $0x50] sm:$0xf]
  %v4755 = vld [vmem:[%s16 + $0x54] sm:$0xf]
  %v4756 = vld [vmem:[%s16 + $0x58] sm:$0xf]
  %v4757 = vld [vmem:[%s16 + $0x5c] sm:$0xf]
  %v4758 = vld [vmem:[%s16 + $0x60] sm:$0xf]
  %v4759 = vld [vmem:[%s16 + $0x64] sm:$0xf]
  %v4760 = vld [vmem:[%s16 + $0x68] sm:$0xf]
  %v4761 = vld [vmem:[%s16 + $0x6c] sm:$0xf]
  %v4762 = vld [vmem:[%s16 + $0x70] sm:$0xf]
  %v4763 = vld [vmem:[%s16 + $0x74] sm:$0xf]
  %v4764 = vld [vmem:[%s16 + $0x78] sm:$0xf]
  %v4765 = vld [vmem:[%s16 + $0x7c] sm:$0xf]
  %v4766 = vld [vmem:[%s16 + $0x80] sm:$0xf]
  %v4767 = vld [vmem:[%s16 + $0x84] sm:$0xf]
  %v4768 = vld [vmem:[%s16 + $0x88] sm:$0xf]
  %v4769 = vld [vmem:[%s16 + $0x8c] sm:$0xf]
  %v4770 = vld [vmem:[%s17] sm:$0x1]
  %v4772 = vperm.slane %v4770, 0
  %v4810 = vunpack.c.l.b16 %v4734
  %v4811 = vunpack.c.l.b16 %v4735
  %v4812 = vunpack.c.l.b16 %v4736
  %v4813 = vunpack.c.l.b16 %v4737
  %v4814 = vunpack.c.l.b16 %v4738
  %v4815 = vunpack.c.l.b16 %v4739
  %v4816 = vunpack.c.l.b16 %v4740
  %v4817 = vunpack.c.l.b16 %v4741
  %v4818 = vunpack.c.l.b16 %v4742
  %v4819 = vunpack.c.l.b16 %v4743
  %v4820 = vunpack.c.l.b16 %v4744
  %v4821 = vunpack.c.l.b16 %v4745
  %v4822 = vunpack.c.l.b16 %v4746
  %v4823 = vunpack.c.l.b16 %v4747
  %v4824 = vunpack.c.l.b16 %v4748
  %v4825 = vunpack.c.l.b16 %v4749
  %v4826 = vunpack.c.l.b16 %v4750
  %v4827 = vunpack.c.l.b16 %v4751
  %v4828 = vunpack.c.l.b16 %v4752
  %v4829 = vunpack.c.l.b16 %v4753
  %v4830 = vunpack.c.l.b16 %v4754
  %v4831 = vunpack.c.l.b16 %v4755
  %v4832 = vunpack.c.l.b16 %v4756
  %v4833 = vunpack.c.l.b16 %v4757
  %v4834 = vunpack.c.l.b16 %v4758
  %v4835 = vunpack.c.l.b16 %v4759
  %v4836 = vunpack.c.l.b16 %v4760
  %v4837 = vunpack.c.l.b16 %v4761
  %v4838 = vunpack.c.l.b16 %v4762
  %v4839 = vunpack.c.l.b16 %v4763
  %v4840 = vunpack.c.l.b16 %v4764
  %v4841 = vunpack.c.l.b16 %v4765
  %v4842 = vunpack.c.l.b16 %v4766
  %v4843 = vunpack.c.l.b16 %v4767
  %v4844 = vunpack.c.l.b16 %v4768
  %v4845 = vunpack.c.l.b16 %v4769
  %v4846 = vpack.c.b16 %v4811, %v4810
  %v4847 = vpack.c.b16 %v4813, %v4812
  %v4848 = vpack.c.b16 %v4815, %v4814
  %v4849 = vpack.c.b16 %v4817, %v4816
  %v4850 = vpack.c.b16 %v4819, %v4818
  %v4851 = vpack.c.b16 %v4821, %v4820
  %v4852 = vpack.c.b16 %v4823, %v4822
  %v4853 = vpack.c.b16 %v4825, %v4824
  %v4854 = vpack.c.b16 %v4827, %v4826
  %v4855 = vpack.c.b16 %v4829, %v4828
  %v4856 = vpack.c.b16 %v4831, %v4830
  %v4857 = vpack.c.b16 %v4833, %v4832
  %v4858 = vpack.c.b16 %v4835, %v4834
  %v4859 = vpack.c.b16 %v4837, %v4836
  %v4860 = vpack.c.b16 %v4839, %v4838
  %v4861 = vpack.c.b16 %v4841, %v4840
  %v4862 = vpack.c.b16 %v4843, %v4842
  %v4863 = vpack.c.b16 %v4845, %v4844
  %v4883 = vsel %vm4595, %v4733, 0
  %4885 = vmatpush.bf16.msra.mxu0 %v4853
  %4886 = vmatpush.bf16.msra.mxu0 %v4852
  %4887 = vmatpush.bf16.msra.mxu0 %v4851
  %4888 = vmatpush.bf16.msra.mxu0 %v4850
  %4889 = vmatpush.bf16.msra.mxu0 %v4849
  %4890 = vmatpush.bf16.msra.mxu0 %v4848
  %4891 = vmatpush.bf16.msra.mxu0 %v4847
  %4892 = vmatpush.bf16.msra.mxu0 %v4846
  %4893 = vmatmul.bf16.gmra.mxu0 %v4731
  %v4894 = vpop.f32.mrf.mxu0
  %v4895 = vadd.f32 %v4772, %v4894
  %v4896 = vpop.f32.mrf.mxu0
  %v4897 = vadd.f32 %v4772, %v4896
  %4898 = vdwg.mxu0
  %4899 = vmatpush.bf16.msra.mxu0 %v4861
  %4900 = vmatpush.bf16.msra.mxu0 %v4860
  %4901 = vmatpush.bf16.msra.mxu0 %v4859
  %4902 = vmatpush.bf16.msra.mxu0 %v4858
  %4903 = vmatpush.bf16.msra.mxu0 %v4857
  %4904 = vmatpush.bf16.msra.mxu0 %v4856
  %4905 = vmatpush.bf16.msra.mxu0 %v4855
  %4906 = vmatpush.bf16.msra.mxu0 %v4854
  %4907 = vmatmul.bf16.gmra.mxu0 %v4732
  %v4908 = vpop.f32.mrf.mxu0
  %v4909 = vadd.f32 %v4895, %v4908
  %v4910 = vpop.f32.mrf.mxu0
  %v4911 = vadd.f32 %v4897, %v4910
  %4912 = vdwg.mxu0
  %4913 = vmatpush.bf16.msra.mxu0 0
  %4914 = vmatpush.bf16.msra.mxu0 0
  %4915 = vmatpush.bf16.msra.mxu0 0
  %4916 = vmatpush.bf16.msra.mxu0 0
  %4917 = vmatpush.bf16.msra.mxu0 0
  %4918 = vmatpush.bf16.msra.mxu0 0
  %4919 = vmatpush.bf16.msra.mxu0 %v4863
  %4920 = vmatpush.bf16.msra.mxu0 %v4862
  %4921 = vmatmul.bf16.gmra.mxu0 %v4883
  %v4922 = vpop.f32.mrf.mxu0
  %v4923 = vadd.f32 %v4909, %v4922
  %v4924 = vpop.f32.mrf.mxu0
  %v4925 = vadd.f32 %v4911, %v4924
  %4926 = vdwg.mxu0
  %4927 = vst [vmem:[%s18] sm:$0xff] %v4923
  %4928 = vst [vmem:[%s18 + $0x8] sm:$0xff] %v4925
  // Predicated region
  $region74: #{type_forward.1} parent=0 // pred_check
    _
  $region75: #{type_forward.1} parent=0 // pred_check_branch
    %4930 = sbr.rel (0) target = $region77
  $region76: #{type_forward.1} parent=0 // pred_region
    _
  $region77: #{type_forward.1} parent=0 // pred_fallthru
    _
  // Predicated region
  $region78: #{type_forward.1} parent=0 // pred_check
    _
  $region79: #{type_forward.1} parent=0 // pred_check_branch
    %4932 = sbr.rel (0) target = $region81
  $region80: #{type_forward.1} parent=0 // pred_region
    _
  $region81: #{type_forward.1} parent=0 // pred_fallthru
    _

</llo_original>
